<compile_context>
chip_gen: v7x
topology: tpu7x:2x2x1
jax: 0.10.0
libtpu: 0.0.40
codegen_flags: <defaults>
</compile_context>

<pallas_src>
import functools

import jax
import jax.numpy as jnp
from jax.experimental import pallas as pl
from jax.experimental.pallas import tpu as pltpu


def _cdiv(a, b):
    return -(-a // b)


def _round_up(a, b):
    return _cdiv(a, b) * b


_COMPILER_PARAMS = pltpu.CompilerParams(
    dimension_semantics=("parallel", "parallel"),
    vmem_limit_bytes=48 * 1024 * 1024)


def _vmem_budget_bytes():
    """Per-step working-set budget used to pick the tile height."""
    try:
        cap = pltpu.get_tpu_info().vmem_capacity_bytes
    except Exception:
        cap = 64 * 1024 * 1024      # v7x-safe fallback
    return max(8 << 20, min(20 << 20, cap // 3))


def _pick_th(ho, *, n, s, wg, cg, wo_c, K, cout_final, itemsize):
    """Largest tile height whose pipelined working set fits the VMEM budget."""
    budget = _vmem_budget_bytes()

    def est(th):
        body = 2 * th * s * wg * cg * itemsize          # double-buffered band
        out = 2 * th * wo_c * cout_final * itemsize     # double-buffered output
        lhs = th * wo_c * K * itemsize                  # folded-K operand
        acc = 3 * th * wo_c * cout_final * 4            # f32 acc + epilogue temps
        return body + out + lhs + acc

    th = max(1, min(ho, 64))
    while th > 1 and est(th) > budget:
        th = max(1, th // 2)
    if n == 1 and ho > 1:
        th = min(th, _cdiv(ho, 2))   # keep >= 2 parallel grid tiles (v7x megacore)
    return th


# ----------------------------------------------------------------------------
# Weight / parameter helpers
# ----------------------------------------------------------------------------
def _fold_weights(w, s):
    """(KH, KW, Cin, Cout) -> (KH * ceil(KW/s) * s * Cin, Cout).

    Tap kw = g*s + o lands at K-offset ((r*G + g)*s + o)*Cin; taps past the
    receptive field are zero, so zero-padded input columns cancel exactly.
    """
    kh, kw, cin, cout = w.shape
    G = _cdiv(kw, s)
    blocks = []
    for r in range(kh):
        for g in range(G):
            for o in range(s):
                tap = g * s + o
                if tap < kw:
                    blocks.append(w[r, tap])                  # (cin, cout)
                else:
                    blocks.append(jnp.zeros((cin, cout), w.dtype))
    return jnp.concatenate(blocks, axis=0)                    # (K, cout)


def _lab_operand(p, cout):
    ls = jnp.asarray(p.get("lab_scale", 1.0), jnp.float32)
    lb = jnp.asarray(p.get("lab_bias", 0.0), jnp.float32)
    return jnp.stack([jnp.broadcast_to(ls, (cout,)),
                      jnp.broadcast_to(lb, (cout,))], axis=0)   # (2, cout)


# ----------------------------------------------------------------------------
# Kernel factories
# ----------------------------------------------------------------------------
def _conv_kernel_factory(*, th, wo, wo_c, s, kh, G, use_act, use_lab, fuse):
    """Fused conv + folded-BN + ReLU (+ LAB) (+ fused 1x1 conv-BN-ReLU-LAB).

    Operands:
      body : (1, th, s, Wg, cg)   grouped row band (W-stride folded to channels)
      halo : (1, 1, 1, Wg, cg)    first sub-row of the next grouped row (kh > s)
      w    : (K, cout)            folded taps, K = kh*G*s*cin
      scale, bias : (1, cout)     folded BN (f32)
      lab  : (2, cout)            LearnableAffineBlock [scale; bias]
      w4/s4/b4/lab4               optional fused 1x1 ConvBNAct
      out  : (1, th, wo, cout_f)
    """
    Kh = (kh - 1) // s + 1
    assert Kh <= 2 and (Kh == 1 or kh - s <= 1)

    def kernel(*refs):
        it = iter(refs)
        body_ref = next(it)
        halo_ref = next(it) if Kh == 2 else None
        w_ref = next(it)
        s_ref = next(it)
        b_ref = next(it)
        lab_ref = next(it) if use_lab else None
        if fuse:
            w4_ref = next(it)
            s4_ref = next(it)
            b4_ref = next(it)
            lab4_ref = next(it) if use_lab else None
        o_ref = next(it)

        body = body_ref[0]                          # (th, s, Wg, cg)
        nxt0 = None
        if Kh == 2:
            halo = halo_ref[0, 0]                   # (1, Wg, cg)
            if th > 1:
                nxt0 = jnp.concatenate([body[1:, 0], halo], axis=0)
            else:
                nxt0 = halo                         # (th=1, Wg, cg)

        pieces = []
        for r in range(kh):
            q, o = divmod(r, s)
            rows_r = body[:, o] if q == 0 else nxt0     # (th, Wg, cg)
            for g in range(G):
                pieces.append(rows_r[:, g:g + wo_c, :])  # (th, wo_c, cg)
        lhs = pieces[0] if len(pieces) == 1 else jnp.concatenate(pieces, axis=-1)
        K = lhs.shape[-1]
        lhs2 = lhs.reshape(th * wo_c, K)

        y = jnp.dot(lhs2, w_ref[...], preferred_element_type=jnp.float32)
        y = y * s_ref[...] + b_ref[...]
        if use_act:
            y = jnp.maximum(y, 0.0)
            if use_lab:
                y = y * lab_ref[0:1, :] + lab_ref[1:2, :]
        if fuse:
            # fused 1x1 ConvBNAct (stem4)
            y = jnp.dot(y.astype(w4_ref.dtype), w4_ref[...],
                        preferred_element_type=jnp.float32)
            y = y * s4_ref[...] + b4_ref[...]
            y = jnp.maximum(y, 0.0)
            if use_lab:
                y = y * lab4_ref[0:1, :] + lab4_ref[1:2, :]

        y = y.reshape(th, wo_c, y.shape[-1])
        if wo_c != wo:
            y = y[:, :wo]
        o_ref[0] = y.astype(o_ref.dtype)

    return kernel


def _stem2_kernel_factory(*, th, wo, wo_c, c_pool, use_act, use_lab):
    """stem2b (2x2 / stride-1 ConvBNAct) + 2x2 / stride-1 maxpool + concat."""

    def kernel(*refs):
        it = iter(refs)
        cb_ref = next(it)     # conv body (1, th, Wc, c2)
        ch_ref = next(it)     # conv halo (1, 1, Wc, c2)
        pb_ref = next(it)     # pool body (1, th, Wp, c1)
        ph_ref = next(it)     # pool halo (1, 1, Wp, c1)
        w_ref = next(it)
        s_ref = next(it)
        b_ref = next(it)
        lab_ref = next(it) if use_lab else None
        o_ref = next(it)

        # ---- stem2b: 2x2 stride-1 conv + BN + act over the whole tile ----
        cbody = cb_ref[0]                                   # (th, Wc, c2)
        chalo = ch_ref[0]                                   # (1, Wc, c2)
        cnxt = jnp.concatenate([cbody[1:], chalo], axis=0) if th > 1 else chalo
        pieces = [cbody[:, 0:wo_c], cbody[:, 1:wo_c + 1],
                  cnxt[:, 0:wo_c], cnxt[:, 1:wo_c + 1]]
        lhs = jnp.concatenate(pieces, axis=-1)              # (th, wo_c, 4*c2)
        K = lhs.shape[-1]
        y = jnp.dot(lhs.reshape(th * wo_c, K), w_ref[...],
                    preferred_element_type=jnp.float32)
        y = y * s_ref[...] + b_ref[...]
        if use_act:
            y = jnp.maximum(y, 0.0)
            if use_lab:
                y = y * lab_ref[0:1, :] + lab_ref[1:2, :]
        y = y.reshape(th, wo_c, y.shape[-1])

        # ---- 2x2 stride-1 max pool of the stem1 branch ----
        pbody = pb_ref[0]                                   # (th, Wp, c1)
        phalo = ph_ref[0]
        pnxt = jnp.concatenate([pbody[1:], phalo], axis=0) if th > 1 else phalo
        pool = jnp.maximum(
            jnp.maximum(pbody[:, 0:wo_c], pbody[:, 1:wo_c + 1]),
            jnp.maximum(pnxt[:, 0:wo_c], pnxt[:, 1:wo_c + 1]))

        if wo_c != wo:
            y = y[:, :wo]
            pool = pool[:, :wo]
        # concat([pool, conv], channel) == torch.cat(dim=1), written as two
        # disjoint channel-slice stores (no per-row lane concatenate).
        o_ref[0, :, :, :c_pool] = pool.astype(o_ref.dtype)
        o_ref[0, :, :, c_pool:] = y.astype(o_ref.dtype)

    return kernel


# ----------------------------------------------------------------------------
# Wrappers
# ----------------------------------------------------------------------------
def conv_bn_act(x, p, *, kernel_size, stride, pad, use_act=True, use_lab=False,
                fuse_pw=None):
    """ConvBNAct on an NHWC activation, one fused Pallas kernel per layer.

    `fuse_pw` optionally fuses a following 1x1 ConvBNAct (stem4) into the
    epilogue so its activation never round-trips HBM.
    """
    n, h, w_in, cin = x.shape
    kh = kw = kernel_size
    s = stride
    if isinstance(pad, int):
        pt = pb = pleft = pright = pad
    else:
        pt, pb, pleft, pright = pad

    cout = p["w"].shape[-1]
    ho = (h + pt + pb - kh) // s + 1
    wo = (w_in + pleft + pright - kw) // s + 1
    G = _cdiv(kw, s)
    Kh = (kh - 1) // s + 1
    cg = s * cin
    K = kh * G * cg

    itemsize = jnp.dtype(x.dtype).itemsize
    sub = max(8, 32 // max(1, itemsize))       # sublane multiple (8 f32 / 16 bf16)
    wo_c = _round_up(wo, sub)

    cout_final = cout if fuse_pw is None else fuse_pw["w"].shape[-1]
    th = _pick_th(ho, n=n, s=s, wg=wo_c + G - 1, cg=cg, wo_c=wo_c, K=K,
                  cout_final=max(cout, cout_final), itemsize=itemsize)
    ho_tiles = _cdiv(ho, th)

    # Padded extents (zeros) so every BlockSpec window stays fully in bounds.
    hg_need = ho_tiles * th + (Kh - 1)
    hp = _round_up(max(s * hg_need, h + pt), s)
    wg_need = wo_c + G - 1
    wp = _round_up(max(s * wg_need, w_in + pleft), s)
    xp = jnp.pad(x, ((0, 0), (pt, hp - h - pt), (pleft, wp - w_in - pleft),
                     (0, 0)))
    hg, wg = hp // s, wp // s
    # Free reshape: fold W-stride into channels, split H into (group, sub-row).
    xg = xp.reshape(n, hg, s, wg, cg)

    wgt = _fold_weights(p["w"].astype(x.dtype), s)            # (K, cout)
    scale = p["scale"].reshape(1, cout).astype(jnp.float32)
    bias = p["bias"].reshape(1, cout).astype(jnp.float32)

    inputs = [xg]
    in_specs = [pl.BlockSpec((1, th, s, wg, cg), lambda b, t: (b, t, 0, 0, 0))]
    if Kh == 2:
        inputs.append(xg)
        in_specs.append(pl.BlockSpec((1, 1, 1, wg, cg),
                                     lambda b, t: (b, (t + 1) * th, 0, 0, 0)))
    inputs += [wgt, scale, bias]
    in_specs += [pl.BlockSpec((K, cout), lambda b, t: (0, 0)),
                 pl.BlockSpec((1, cout), lambda b, t: (0, 0)),
                 pl.BlockSpec((1, cout), lambda b, t: (0, 0))]
    if use_lab:
        inputs.append(_lab_operand(p, cout))
        in_specs.append(pl.BlockSpec((2, cout), lambda b, t: (0, 0)))
    if fuse_pw is not None:
        c_in4 = fuse_pw["w"].shape[2]
        c4 = cout_final
        inputs += [fuse_pw["w"].reshape(c_in4, c4).astype(x.dtype),
                   fuse_pw["scale"].reshape(1, c4).astype(jnp.float32),
                   fuse_pw["bias"].reshape(1, c4).astype(jnp.float32)]
        in_specs += [pl.BlockSpec((c_in4, c4), lambda b, t: (0, 0)),
                     pl.BlockSpec((1, c4), lambda b, t: (0, 0)),
                     pl.BlockSpec((1, c4), lambda b, t: (0, 0))]
        if use_lab:
            inputs.append(_lab_operand(fuse_pw, c4))
            in_specs.append(pl.BlockSpec((2, c4), lambda b, t: (0, 0)))

    kern = _conv_kernel_factory(th=th, wo=wo, wo_c=wo_c, s=s, kh=kh, G=G,
                                use_act=use_act, use_lab=use_lab,
                                fuse=fuse_pw is not None)
    out = pl.pallas_call(
        kern,
        out_shape=jax.ShapeDtypeStruct((n, ho, wo, cout_final), x.dtype),
        grid=(n, ho_tiles),
        in_specs=in_specs,
        out_specs=pl.BlockSpec((1, th, wo, cout_final),
                               lambda b, t: (b, t, 0, 0)),
        compiler_params=_COMPILER_PARAMS,
    )(*inputs)
    return out


def stem2b_pool_concat(x1, x2a, p, *, use_act=True, use_lab=False):
    """Fused: maxpool2x2/s1(pad(x1,(0,1,0,1))) ++ stem2b(pad(x2a,(0,1,0,1)))."""
    n, h, w, c1 = x1.shape
    _, h2, w2, c2 = x2a.shape
    assert (h2, w2) == (h, w), (h2, w2, h, w)
    cout = p["w"].shape[-1]
    ho, wo = h, w

    itemsize = jnp.dtype(x2a.dtype).itemsize
    sub = max(8, 32 // max(1, itemsize))
    wo_c = _round_up(wo, sub)
    K = 4 * c2
    th = _pick_th(ho, n=n, s=1, wg=wo_c + 1, cg=c1 + c2, wo_c=wo_c, K=K,
                  cout_final=c1 + cout, itemsize=itemsize)
    ho_tiles = _cdiv(ho, th)

    hneed = ho_tiles * th + 1
    wneed = wo_c + 1
    x1p = jnp.pad(x1, ((0, 0), (0, hneed - h), (0, wneed - w), (0, 0)))
    x2p = jnp.pad(x2a, ((0, 0), (0, hneed - h), (0, wneed - w), (0, 0)))

    wgt = _fold_weights(p["w"].astype(x2a.dtype), 1)          # (4*c2, cout)
    scale = p["scale"].reshape(1, cout).astype(jnp.float32)
    bias = p["bias"].reshape(1, cout).astype(jnp.float32)

    def body_spec(ch):
        return pl.BlockSpec((1, th, wneed, ch), lambda b, t: (b, t, 0, 0))

    def halo_spec(ch):
        return pl.BlockSpec((1, 1, wneed, ch),
                            lambda b, t: (b, (t + 1) * th, 0, 0))

    inputs = [x2p, x2p, x1p, x1p, wgt, scale, bias]
    in_specs = [body_spec(c2), halo_spec(c2), body_spec(c1), halo_spec(c1),
                pl.BlockSpec((K, cout), lambda b, t: (0, 0)),
                pl.BlockSpec((1, cout), lambda b, t: (0, 0)),
                pl.BlockSpec((1, cout), lambda b, t: (0, 0))]
    if use_lab:
        inputs.append(_lab_operand(p, cout))
        in_specs.append(pl.BlockSpec((2, cout), lambda b, t: (0, 0)))

    kern = _stem2_kernel_factory(th=th, wo=wo, wo_c=wo_c, c_pool=c1,
                                 use_act=use_act, use_lab=use_lab)
    out = pl.pallas_call(
        kern,
        out_shape=jax.ShapeDtypeStruct((n, ho, wo, c1 + cout), x2a.dtype),
        grid=(n, ho_tiles),
        in_specs=in_specs,
        out_specs=pl.BlockSpec((1, th, wo, c1 + cout),
                               lambda b, t: (b, t, 0, 0)),
        compiler_params=_COMPILER_PARAMS,
    )(*inputs)
    return out


def stem_block_forward(x_nchw, params, *, use_lab=False):
    """StemBlock.forward.  Input/output are NCHW like the PyTorch module.

    Activations run in x_nchw.dtype (f32 or bf16); accumulation and the
    BN/ReLU/LAB epilogues are always f32.  BN uses eval-mode (folded) stats.
    """
    x = jnp.transpose(x_nchw, (0, 2, 3, 1))                         # NHWC
    # stem1: 3x3 / stride 2 / pad 1
    x1 = conv_bn_act(x, params["stem1"], kernel_size=3, stride=2, pad=1,
                     use_lab=use_lab)
    # stem2a: 2x2 / stride 1; the module's F.pad(0,1,0,1) folded into its pad
    x2 = conv_bn_act(x1, params["stem2a"], kernel_size=2, stride=1,
                     pad=(0, 1, 0, 1), use_lab=use_lab)
    # stem2b (its F.pad folded) + maxpool(F.pad(x1)) + channel concat — one kernel
    xc = stem2b_pool_concat(x1, x2, params["stem2b"], use_lab=use_lab)
    # stem3: 3x3 / stride 2 / pad 1, with stem4's 1x1 fused into its epilogue
    out = conv_bn_act(xc, params["stem3"], kernel_size=3, stride=2, pad=1,
                      use_lab=use_lab, fuse_pw=params["stem4"])
    return jnp.transpose(out, (0, 3, 1, 2))                         # NCHW


# ----------------------------------------------------------------------------
# Deterministic parameter init (BN folded to scale/bias, eval-mode semantics)
# ----------------------------------------------------------------------------
def init_conv_bn(key, cin, cout, k):
    kw_, kg, kb, km, kv = jax.random.split(key, 5)
    w = 0.1 * jax.random.normal(kw_, (k, k, cin, cout), jnp.float32)   # HWIO
    gamma = 1.0 + 0.1 * jax.random.normal(kg, (cout,), jnp.float32)
    beta = 0.1 * jax.random.normal(kb, (cout,), jnp.float32)
    run_mean = 0.1 * jax.random.normal(km, (cout,), jnp.float32)
    run_var = 1.0 + 0.1 * jnp.abs(jax.random.normal(kv, (cout,), jnp.float32))
    eps = 1e-5
    scale = gamma / jnp.sqrt(run_var + eps)
    bias = beta - run_mean * scale
    return {"w": w, "scale": scale, "bias": bias,
            "lab_scale": jnp.float32(1.0), "lab_bias": jnp.float32(0.0)}


# ----------------------------------------------------------------------------
# Pure-JAX reference for verification
# ----------------------------------------------------------------------------
def _ref_conv_bn_act(x, p, stride, pad, use_lab):
    y = jax.lax.conv_general_dilated(
        x, p["w"], window_strides=(stride, stride),
        padding=((pad, pad), (pad, pad)),
        dimension_numbers=("NHWC", "HWIO", "NHWC"))
    y = y * p["scale"].reshape(1, 1, 1, -1) + p["bias"].reshape(1, 1, 1, -1)
    y = jnp.maximum(y, 0.0)
    if use_lab:
        y = y * p["lab_scale"] + p["lab_bias"]
    return y


def _ref_forward(x_nchw, params, use_lab=False):
    x = jnp.transpose(x_nchw, (0, 2, 3, 1))
    x = _ref_conv_bn_act(x, params["stem1"], 2, 1, use_lab)
    x = jnp.pad(x, ((0, 0), (0, 1), (0, 1), (0, 0)))
    x2 = _ref_conv_bn_act(x, params["stem2a"], 1, 0, use_lab)
    x2 = jnp.pad(x2, ((0, 0), (0, 1), (0, 1), (0, 0)))
    x2 = _ref_conv_bn_act(x2, params["stem2b"], 1, 0, use_lab)
    x1 = jax.lax.reduce_window(x, -jnp.inf, jax.lax.max,
                               (1, 2, 2, 1), (1, 1, 1, 1), "VALID")
    xc = jnp.concatenate([x1, x2], axis=-1)
    xc = _ref_conv_bn_act(xc, params["stem3"], 2, 1, use_lab)
    out = _ref_conv_bn_act(xc, params["stem4"], 1, 0, use_lab)
    return jnp.transpose(out, (0, 3, 1, 2))


# ----------------------------------------------------------------------------
if __name__ == "__main__":
    key = jax.random.PRNGKey(0)
    in_chs, mid_chs, out_chs = 4, 8, 16
    n, h, w = 2, 16, 16

    kx, k1, k2a, k2b, k3, k4 = jax.random.split(key, 6)
    x = jax.random.normal(kx, (n, in_chs, h, w), jnp.float32)        # NCHW

    params = {
        "stem1": init_conv_bn(k1, in_chs, mid_chs, 3),
        "stem2a": init_conv_bn(k2a, mid_chs, mid_chs // 2, 2),
        "stem2b": init_conv_bn(k2b, mid_chs // 2, mid_chs, 2),
        "stem3": init_conv_bn(k3, mid_chs * 2, mid_chs, 3),
        "stem4": init_conv_bn(k4, mid_chs, out_chs, 1),
    }

    # 1) f32, use_lab=False (LAB at identity)
    fwd = jax.jit(functools.partial(stem_block_forward, use_lab=False))
    out = jax.block_until_ready(fwd(x, params))
    assert out.shape == (n, out_chs, 4, 4), out.shape
    ref = jax.block_until_ready(_ref_forward(x, params, use_lab=False))
    err = float(jnp.max(jnp.abs(out - ref)))
    assert jnp.allclose(out, ref, rtol=1e-3, atol=1e-3), err

    # 2) f32, use_lab=True with non-trivial LAB scale/bias per layer
    params_lab = {k_: dict(v) for k_, v in params.items()}
    for i, name in enumerate(["stem1", "stem2a", "stem2b", "stem3", "stem4"]):
        params_lab[name]["lab_scale"] = jnp.float32(1.0 + 0.1 * (i + 1))
        params_lab[name]["lab_bias"] = jnp.float32(0.05 * (i + 1) - 0.1)
    fwd_lab = jax.jit(functools.partial(stem_block_forward, use_lab=True))
    out_lab = jax.block_until_ready(fwd_lab(x, params_lab))
    ref_lab = jax.block_until_ready(_ref_forward(x, params_lab, use_lab=True))
    err_lab = float(jnp.max(jnp.abs(out_lab - ref_lab)))
    assert jnp.allclose(out_lab, ref_lab, rtol=1e-3, atol=1e-3), err_lab

    # 3) bf16 activations/weights with f32 accumulation (bandwidth path)
    out_bf16 = jax.block_until_ready(fwd(x.astype(jnp.bfloat16), params))
    diff = float(jnp.max(jnp.abs(out_bf16.astype(jnp.float32) - ref)))
    assert jnp.isfinite(diff) and diff < 0.5, diff

    print("KERNEL_OK")
</pallas_src>

<mosaic_0001>
module attributes {stable_mosaic.version = 11 : i64} {
  func.func @kernel(%arg0: i32, %arg1: i32, %arg2: memref<1x8x2x9x8xf32, #tpu.memory_space<vmem>>, %arg3: memref<1x1x1x9x8xf32, #tpu.memory_space<vmem>>, %arg4: memref<48x8xf32, #tpu.memory_space<vmem>>, %arg5: memref<1x8xf32, #tpu.memory_space<vmem>>, %arg6: memref<1x8xf32, #tpu.memory_space<vmem>>, %arg7: memref<1x8x8x8xf32, #tpu.memory_space<vmem>>) attributes {dimension_semantics = [#tpu.dimension_semantics<parallel>, #tpu.dimension_semantics<parallel>], iteration_bounds = array<i64: 2, 1>, scalar_prefetch = 0 : i64, scratch_operands = 0 : i64, tpu.core_type = #tpu.core_type<tc>, window_params = [{transform_indices = @transform_0, window_bounds = array<i64: 1, 8, 2, 9, 8>}, {transform_indices = @transform_1, window_bounds = array<i64: 1, 1, 1, 9, 8>}, {pipeline_mode = #tpu.pipeline_mode<synchronous>, transform_indices = @transform_2, window_bounds = array<i64: 48, 8>}, {pipeline_mode = #tpu.pipeline_mode<synchronous>, transform_indices = @transform_3, window_bounds = array<i64: 1, 8>}, {pipeline_mode = #tpu.pipeline_mode<synchronous>, transform_indices = @transform_4, window_bounds = array<i64: 1, 8>}, {transform_indices = @transform_5, window_bounds = array<i64: 1, 8, 8, 8>}]} {
    %c0 = arith.constant 0 : index
    %c0_0 = arith.constant 0 : index
    %c0_1 = arith.constant 0 : index
    %c0_2 = arith.constant 0 : index
    %c0_3 = arith.constant 0 : index
    %0 = vector.load %arg2[%c0, %c0_0, %c0_1, %c0_2, %c0_3] : memref<1x8x2x9x8xf32, #tpu.memory_space<vmem>>, vector<1x8x2x9x8xf32>
    %1 = vector.shape_cast %0 : vector<1x8x2x9x8xf32> to vector<8x2x9x8xf32>
    %c0_4 = arith.constant 0 : index
    %c0_5 = arith.constant 0 : index
    %c0_6 = arith.constant 0 : index
    %c0_7 = arith.constant 0 : index
    %c0_8 = arith.constant 0 : index
    %2 = vector.load %arg3[%c0_4, %c0_5, %c0_6, %c0_7, %c0_8] : memref<1x1x1x9x8xf32, #tpu.memory_space<vmem>>, vector<1x1x1x9x8xf32>
    %3 = vector.shape_cast %2 : vector<1x1x1x9x8xf32> to vector<1x9x8xf32>
    %4 = vector.extract_strided_slice %1 {offsets = [1, 0, 0, 0], sizes = [7, 1, 9, 8], strides = [1, 1, 1, 1]} : vector<8x2x9x8xf32> to vector<7x1x9x8xf32>
    %5 = vector.shape_cast %4 : vector<7x1x9x8xf32> to vector<7x9x8xf32>
    %6 = tpu.concatenate %5, %3 in 0 : vector<7x9x8xf32>, vector<1x9x8xf32> -> vector<8x9x8xf32>
    %7 = vector.extract_strided_slice %1 {offsets = [0, 0, 0, 0], sizes = [8, 1, 9, 8], strides = [1, 1, 1, 1]} : vector<8x2x9x8xf32> to vector<8x1x9x8xf32>
    %8 = vector.shape_cast %7 : vector<8x1x9x8xf32> to vector<8x9x8xf32>
    %9 = vector.extract_strided_slice %8 {offsets = [0, 0, 0], sizes = [8, 8, 8], strides = [1, 1, 1]} : vector<8x9x8xf32> to vector<8x8x8xf32>
    %10 = vector.extract_strided_slice %8 {offsets = [0, 1, 0], sizes = [8, 8, 8], strides = [1, 1, 1]} : vector<8x9x8xf32> to vector<8x8x8xf32>
    %11 = vector.extract_strided_slice %1 {offsets = [0, 1, 0, 0], sizes = [8, 1, 9, 8], strides = [1, 1, 1, 1]} : vector<8x2x9x8xf32> to vector<8x1x9x8xf32>
    %12 = vector.shape_cast %11 : vector<8x1x9x8xf32> to vector<8x9x8xf32>
    %13 = vector.extract_strided_slice %12 {offsets = [0, 0, 0], sizes = [8, 8, 8], strides = [1, 1, 1]} : vector<8x9x8xf32> to vector<8x8x8xf32>
    %14 = vector.extract_strided_slice %12 {offsets = [0, 1, 0], sizes = [8, 8, 8], strides = [1, 1, 1]} : vector<8x9x8xf32> to vector<8x8x8xf32>
    %15 = vector.extract_strided_slice %6 {offsets = [0, 0, 0], sizes = [8, 8, 8], strides = [1, 1, 1]} : vector<8x9x8xf32> to vector<8x8x8xf32>
    %16 = vector.extract_strided_slice %6 {offsets = [0, 1, 0], sizes = [8, 8, 8], strides = [1, 1, 1]} : vector<8x9x8xf32> to vector<8x8x8xf32>
    %17 = tpu.concatenate %9, %10, %13, %14, %15, %16 in 2 : vector<8x8x8xf32>, vector<8x8x8xf32>, vector<8x8x8xf32>, vector<8x8x8xf32>, vector<8x8x8xf32>, vector<8x8x8xf32> -> vector<8x8x48xf32>
    %18 = vector.shape_cast %17 : vector<8x8x48xf32> to vector<64x48xf32>
    %c0_9 = arith.constant 0 : index
    %c0_10 = arith.constant 0 : index
    %19 = vector.load %arg4[%c0_9, %c0_10] : memref<48x8xf32, #tpu.memory_space<vmem>>, vector<48x8xf32>
    %cst = arith.constant dense<0.000000e+00> : vector<64x8xf32>
    %20 = tpu.matmul %18, %19, %cst {dimension_numbers = #tpu.dot_dimension_numbers<[1], [0], [0], [1], [0, 0, 1, 1], [], []>} : vector<64x48xf32>, vector<48x8xf32>, vector<64x8xf32> -> vector<64x8xf32>
    %c0_11 = arith.constant 0 : index
    %c0_12 = arith.constant 0 : index
    %21 = vector.load %arg5[%c0_11, %c0_12] : memref<1x8xf32, #tpu.memory_space<vmem>>, vector<1x8xf32>
    %22 = vector.broadcast %21 : vector<1x8xf32> to vector<64x8xf32>
    %23 = arith.mulf %20, %22 : vector<64x8xf32>
    %c0_13 = arith.constant 0 : index
    %c0_14 = arith.constant 0 : index
    %24 = vector.load %arg6[%c0_13, %c0_14] : memref<1x8xf32, #tpu.memory_space<vmem>>, vector<1x8xf32>
    %25 = vector.broadcast %24 : vector<1x8xf32> to vector<64x8xf32>
    %26 = arith.addf %23, %25 : vector<64x8xf32>
    %cst_15 = arith.constant 0.000000e+00 : f32
    %27 = vector.broadcast %cst_15 : f32 to vector<64x8xf32>
    %28 = arith.maximumf %26, %27 : vector<64x8xf32>
    %29 = vector.shape_cast %28 : vector<64x8xf32> to vector<8x8x8xf32>
    %c0_16 = arith.constant 0 : index
    %c0_17 = arith.constant 0 : index
    %c0_18 = arith.constant 0 : index
    %c0_19 = arith.constant 0 : index
    %30 = vector.load %arg7[%c0_16, %c0_17, %c0_18, %c0_19] : memref<1x8x8x8xf32, #tpu.memory_space<vmem>>, vector<1x8x8x8xf32>
    %31 = vector.shape_cast %30 : vector<1x8x8x8xf32> to vector<8x8x8xf32>
    %32 = vector.shape_cast %29 : vector<8x8x8xf32> to vector<1x8x8x8xf32>
    tpu.vector_store %arg7[%c0_16, %c0_17, %c0_18, %c0_19], %32 {strides = array<i32>} : memref<1x8x8x8xf32, #tpu.memory_space<vmem>>, vector<1x8x8x8xf32>,
    return
  }
  func.func @transform_0(%arg0: i32, %arg1: i32) -> (i32, i32, i32, i32, i32) {
    %c0_i32 = arith.constant 0 : i32
    %c0_i32_0 = arith.constant 0 : i32
    %c0_i32_1 = arith.constant 0 : i32
    %c0_i32_2 = arith.constant 0 : i32
    return %arg0, %arg1, %c0_i32, %c0_i32_0, %c0_i32_1 : i32, i32, i32, i32, i32
  }
  func.func @transform_1(%arg0: i32, %arg1: i32) -> (i32, i32, i32, i32, i32) {
    %c1_i32 = arith.constant 1 : i32
    %0 = arith.addi %arg1, %c1_i32 : i32
    %c8_i32 = arith.constant 8 : i32
    %1 = arith.muli %0, %c8_i32 : i32
    %c0_i32 = arith.constant 0 : i32
    %c0_i32_0 = arith.constant 0 : i32
    %c0_i32_1 = arith.constant 0 : i32
    %c0_i32_2 = arith.constant 0 : i32
    return %arg0, %1, %c0_i32, %c0_i32_0, %c0_i32_1 : i32, i32, i32, i32, i32
  }
  func.func @transform_2(%arg0: i32, %arg1: i32) -> (i32, i32) {
    %c0_i32 = arith.constant 0 : i32
    %c0_i32_0 = arith.constant 0 : i32
    %c0_i32_1 = arith.constant 0 : i32
    return %c0_i32, %c0_i32_0 : i32, i32
  }
  func.func @transform_3(%arg0: i32, %arg1: i32) -> (i32, i32) {
    %c0_i32 = arith.constant 0 : i32
    %c0_i32_0 = arith.constant 0 : i32
    %c0_i32_1 = arith.constant 0 : i32
    return %c0_i32, %c0_i32_0 : i32, i32
  }
  func.func @transform_4(%arg0: i32, %arg1: i32) -> (i32, i32) {
    %c0_i32 = arith.constant 0 : i32
    %c0_i32_0 = arith.constant 0 : i32
    %c0_i32_1 = arith.constant 0 : i32
    return %c0_i32, %c0_i32_0 : i32, i32
  }
  func.func @transform_5(%arg0: i32, %arg1: i32) -> (i32, i32, i32, i32) {
    %c0_i32 = arith.constant 0 : i32
    %c0_i32_0 = arith.constant 0 : i32
    %c0_i32_1 = arith.constant 0 : i32
    return %arg0, %arg1, %c0_i32, %c0_i32_0 : i32, i32, i32, i32
  }
}

module attributes {stable_mosaic.version = 11 : i64} {
  func.func @kernel(%arg0: i32, %arg1: i32, %arg2: memref<1x8x1x9x8xf32, #tpu.memory_space<vmem>>, %arg3: memref<1x1x1x9x8xf32, #tpu.memory_space<vmem>>, %arg4: memref<32x4xf32, #tpu.memory_space<vmem>>, %arg5: memref<1x4xf32, #tpu.memory_space<vmem>>, %arg6: memref<1x4xf32, #tpu.memory_space<vmem>>, %arg7: memref<1x8x8x4xf32, #tpu.memory_space<vmem>>) attributes {dimension_semantics = [#tpu.dimension_semantics<parallel>, #tpu.dimension_semantics<parallel>], iteration_bounds = array<i64: 2, 1>, scalar_prefetch = 0 : i64, scratch_operands = 0 : i64, tpu.core_type = #tpu.core_type<tc>, window_params = [{transform_indices = @transform_0, window_bounds = array<i64: 1, 8, 1, 9, 8>}, {transform_indices = @transform_1, window_bounds = array<i64: 1, 1, 1, 9, 8>}, {pipeline_mode = #tpu.pipeline_mode<synchronous>, transform_indices = @transform_2, window_bounds = array<i64: 32, 4>}, {pipeline_mode = #tpu.pipeline_mode<synchronous>, transform_indices = @transform_3, window_bounds = array<i64: 1, 4>}, {pipeline_mode = #tpu.pipeline_mode<synchronous>, transform_indices = @transform_4, window_bounds = array<i64: 1, 4>}, {transform_indices = @transform_5, window_bounds = array<i64: 1, 8, 8, 4>}]} {
    %c0 = arith.constant 0 : index
    %c0_0 = arith.constant 0 : index
    %c0_1 = arith.constant 0 : index
    %c0_2 = arith.constant 0 : index
    %c0_3 = arith.constant 0 : index
    %0 = vector.load %arg2[%c0, %c0_0, %c0_1, %c0_2, %c0_3] : memref<1x8x1x9x8xf32, #tpu.memory_space<vmem>>, vector<1x8x1x9x8xf32>
    %1 = vector.shape_cast %0 : vector<1x8x1x9x8xf32> to vector<8x1x9x8xf32>
    %c0_4 = arith.constant 0 : index
    %c0_5 = arith.constant 0 : index
    %c0_6 = arith.constant 0 : index
    %c0_7 = arith.constant 0 : index
    %c0_8 = arith.constant 0 : index
    %2 = vector.load %arg3[%c0_4, %c0_5, %c0_6, %c0_7, %c0_8] : memref<1x1x1x9x8xf32, #tpu.memory_space<vmem>>, vector<1x1x1x9x8xf32>
    %3 = vector.shape_cast %2 : vector<1x1x1x9x8xf32> to vector<1x9x8xf32>
    %4 = vector.extract_strided_slice %1 {offsets = [1, 0, 0, 0], sizes = [7, 1, 9, 8], strides = [1, 1, 1, 1]} : vector<8x1x9x8xf32> to vector<7x1x9x8xf32>
    %5 = vector.shape_cast %4 : vector<7x1x9x8xf32> to vector<7x9x8xf32>
    %6 = tpu.concatenate %5, %3 in 0 : vector<7x9x8xf32>, vector<1x9x8xf32> -> vector<8x9x8xf32>
    %7 = vector.shape_cast %1 : vector<8x1x9x8xf32> to vector<8x9x8xf32>
    %8 = vector.extract_strided_slice %7 {offsets = [0, 0, 0], sizes = [8, 8, 8], strides = [1, 1, 1]} : vector<8x9x8xf32> to vector<8x8x8xf32>
    %9 = vector.extract_strided_slice %7 {offsets = [0, 1, 0], sizes = [8, 8, 8], strides = [1, 1, 1]} : vector<8x9x8xf32> to vector<8x8x8xf32>
    %10 = vector.extract_strided_slice %6 {offsets = [0, 0, 0], sizes = [8, 8, 8], strides = [1, 1, 1]} : vector<8x9x8xf32> to vector<8x8x8xf32>
    %11 = vector.extract_strided_slice %6 {offsets = [0, 1, 0], sizes = [8, 8, 8], strides = [1, 1, 1]} : vector<8x9x8xf32> to vector<8x8x8xf32>
    %12 = tpu.concatenate %8, %9, %10, %11 in 2 : vector<8x8x8xf32>, vector<8x8x8xf32>, vector<8x8x8xf32>, vector<8x8x8xf32> -> vector<8x8x32xf32>
    %13 = vector.shape_cast %12 : vector<8x8x32xf32> to vector<64x32xf32>
    %c0_9 = arith.constant 0 : index
    %c0_10 = arith.constant 0 : index
    %14 = vector.load %arg4[%c0_9, %c0_10] : memref<32x4xf32, #tpu.memory_space<vmem>>, vector<32x4xf32>
    %cst = arith.constant dense<0.000000e+00> : vector<64x4xf32>
    %15 = tpu.matmul %13, %14, %cst {dimension_numbers = #tpu.dot_dimension_numbers<[1], [0], [0], [1], [0, 0, 1, 1], [], []>} : vector<64x32xf32>, vector<32x4xf32>, vector<64x4xf32> -> vector<64x4xf32>
    %c0_11 = arith.constant 0 : index
    %c0_12 = arith.constant 0 : index
    %16 = vector.load %arg5[%c0_11, %c0_12] : memref<1x4xf32, #tpu.memory_space<vmem>>, vector<1x4xf32>
    %17 = vector.broadcast %16 : vector<1x4xf32> to vector<64x4xf32>
    %18 = arith.mulf %15, %17 : vector<64x4xf32>
    %c0_13 = arith.constant 0 : index
    %c0_14 = arith.constant 0 : index
    %19 = vector.load %arg6[%c0_13, %c0_14] : memref<1x4xf32, #tpu.memory_space<vmem>>, vector<1x4xf32>
    %20 = vector.broadcast %19 : vector<1x4xf32> to vector<64x4xf32>
    %21 = arith.addf %18, %20 : vector<64x4xf32>
    %cst_15 = arith.constant 0.000000e+00 : f32
    %22 = vector.broadcast %cst_15 : f32 to vector<64x4xf32>
    %23 = arith.maximumf %21, %22 : vector<64x4xf32>
    %24 = vector.shape_cast %23 : vector<64x4xf32> to vector<8x8x4xf32>
    %c0_16 = arith.constant 0 : index
    %c0_17 = arith.constant 0 : index
    %c0_18 = arith.constant 0 : index
    %c0_19 = arith.constant 0 : index
    %25 = vector.load %arg7[%c0_16, %c0_17, %c0_18, %c0_19] : memref<1x8x8x4xf32, #tpu.memory_space<vmem>>, vector<1x8x8x4xf32>
    %26 = vector.shape_cast %25 : vector<1x8x8x4xf32> to vector<8x8x4xf32>
    %27 = vector.shape_cast %24 : vector<8x8x4xf32> to vector<1x8x8x4xf32>
    tpu.vector_store %arg7[%c0_16, %c0_17, %c0_18, %c0_19], %27 {strides = array<i32>} : memref<1x8x8x4xf32, #tpu.memory_space<vmem>>, vector<1x8x8x4xf32>,
    return
  }
  func.func @transform_0(%arg0: i32, %arg1: i32) -> (i32, i32, i32, i32, i32) {
    %c0_i32 = arith.constant 0 : i32
    %c0_i32_0 = arith.constant 0 : i32
    %c0_i32_1 = arith.constant 0 : i32
    %c0_i32_2 = arith.constant 0 : i32
    return %arg0, %arg1, %c0_i32, %c0_i32_0, %c0_i32_1 : i32, i32, i32, i32, i32
  }
  func.func @transform_1(%arg0: i32, %arg1: i32) -> (i32, i32, i32, i32, i32) {
    %c1_i32 = arith.constant 1 : i32
    %0 = arith.addi %arg1, %c1_i32 : i32
    %c8_i32 = arith.constant 8 : i32
    %1 = arith.muli %0, %c8_i32 : i32
    %c0_i32 = arith.constant 0 : i32
    %c0_i32_0 = arith.constant 0 : i32
    %c0_i32_1 = arith.constant 0 : i32
    %c0_i32_2 = arith.constant 0 : i32
    return %arg0, %1, %c0_i32, %c0_i32_0, %c0_i32_1 : i32, i32, i32, i32, i32
  }
  func.func @transform_2(%arg0: i32, %arg1: i32) -> (i32, i32) {
    %c0_i32 = arith.constant 0 : i32
    %c0_i32_0 = arith.constant 0 : i32
    %c0_i32_1 = arith.constant 0 : i32
    return %c0_i32, %c0_i32_0 : i32, i32
  }
  func.func @transform_3(%arg0: i32, %arg1: i32) -> (i32, i32) {
    %c0_i32 = arith.constant 0 : i32
    %c0_i32_0 = arith.constant 0 : i32
    %c0_i32_1 = arith.constant 0 : i32
    return %c0_i32, %c0_i32_0 : i32, i32
  }
  func.func @transform_4(%arg0: i32, %arg1: i32) -> (i32, i32) {
    %c0_i32 = arith.constant 0 : i32
    %c0_i32_0 = arith.constant 0 : i32
    %c0_i32_1 = arith.constant 0 : i32
    return %c0_i32, %c0_i32_0 : i32, i32
  }
  func.func @transform_5(%arg0: i32, %arg1: i32) -> (i32, i32, i32, i32) {
    %c0_i32 = arith.constant 0 : i32
    %c0_i32_0 = arith.constant 0 : i32
    %c0_i32_1 = arith.constant 0 : i32
    return %arg0, %arg1, %c0_i32, %c0_i32_0 : i32, i32, i32, i32
  }
}

module attributes {stable_mosaic.version = 11 : i64} {
  func.func @kernel(%arg0: i32, %arg1: i32, %arg2: memref<1x8x9x4xf32, #tpu.memory_space<vmem>>, %arg3: memref<1x1x9x4xf32, #tpu.memory_space<vmem>>, %arg4: memref<1x8x9x8xf32, #tpu.memory_space<vmem>>, %arg5: memref<1x1x9x8xf32, #tpu.memory_space<vmem>>, %arg6: memref<16x8xf32, #tpu.memory_space<vmem>>, %arg7: memref<1x8xf32, #tpu.memory_space<vmem>>, %arg8: memref<1x8xf32, #tpu.memory_space<vmem>>, %arg9: memref<1x8x8x16xf32, #tpu.memory_space<vmem>>) attributes {dimension_semantics = [#tpu.dimension_semantics<parallel>, #tpu.dimension_semantics<parallel>], iteration_bounds = array<i64: 2, 1>, scalar_prefetch = 0 : i64, scratch_operands = 0 : i64, tpu.core_type = #tpu.core_type<tc>, window_params = [{transform_indices = @transform_0, window_bounds = array<i64: 1, 8, 9, 4>}, {transform_indices = @transform_1, window_bounds = array<i64: 1, 1, 9, 4>}, {transform_indices = @transform_2, window_bounds = array<i64: 1, 8, 9, 8>}, {transform_indices = @transform_3, window_bounds = array<i64: 1, 1, 9, 8>}, {pipeline_mode = #tpu.pipeline_mode<synchronous>, transform_indices = @transform_4, window_bounds = array<i64: 16, 8>}, {pipeline_mode = #tpu.pipeline_mode<synchronous>, transform_indices = @transform_5, window_bounds = array<i64: 1, 8>}, {pipeline_mode = #tpu.pipeline_mode<synchronous>, transform_indices = @transform_6, window_bounds = array<i64: 1, 8>}, {transform_indices = @transform_7, window_bounds = array<i64: 1, 8, 8, 16>}]} {
    %c0 = arith.constant 0 : index
    %c0_0 = arith.constant 0 : index
    %c0_1 = arith.constant 0 : index
    %c0_2 = arith.constant 0 : index
    %0 = vector.load %arg2[%c0, %c0_0, %c0_1, %c0_2] : memref<1x8x9x4xf32, #tpu.memory_space<vmem>>, vector<1x8x9x4xf32>
    %1 = vector.shape_cast %0 : vector<1x8x9x4xf32> to vector<8x9x4xf32>
    %c0_3 = arith.constant 0 : index
    %c0_4 = arith.constant 0 : index
    %c0_5 = arith.constant 0 : index
    %c0_6 = arith.constant 0 : index
    %2 = vector.load %arg3[%c0_3, %c0_4, %c0_5, %c0_6] : memref<1x1x9x4xf32, #tpu.memory_space<vmem>>, vector<1x1x9x4xf32>
    %3 = vector.shape_cast %2 : vector<1x1x9x4xf32> to vector<1x9x4xf32>
    %4 = vector.extract_strided_slice %1 {offsets = [1, 0, 0], sizes = [7, 9, 4], strides = [1, 1, 1]} : vector<8x9x4xf32> to vector<7x9x4xf32>
    %5 = tpu.concatenate %4, %3 in 0 : vector<7x9x4xf32>, vector<1x9x4xf32> -> vector<8x9x4xf32>
    %6 = vector.extract_strided_slice %1 {offsets = [0, 0, 0], sizes = [8, 8, 4], strides = [1, 1, 1]} : vector<8x9x4xf32> to vector<8x8x4xf32>
    %7 = vector.extract_strided_slice %1 {offsets = [0, 1, 0], sizes = [8, 8, 4], strides = [1, 1, 1]} : vector<8x9x4xf32> to vector<8x8x4xf32>
    %8 = vector.extract_strided_slice %5 {offsets = [0, 0, 0], sizes = [8, 8, 4], strides = [1, 1, 1]} : vector<8x9x4xf32> to vector<8x8x4xf32>
    %9 = vector.extract_strided_slice %5 {offsets = [0, 1, 0], sizes = [8, 8, 4], strides = [1, 1, 1]} : vector<8x9x4xf32> to vector<8x8x4xf32>
    %10 = tpu.concatenate %6, %7, %8, %9 in 2 : vector<8x8x4xf32>, vector<8x8x4xf32>, vector<8x8x4xf32>, vector<8x8x4xf32> -> vector<8x8x16xf32>
    %11 = vector.shape_cast %10 : vector<8x8x16xf32> to vector<64x16xf32>
    %c0_7 = arith.constant 0 : index
    %c0_8 = arith.constant 0 : index
    %12 = vector.load %arg6[%c0_7, %c0_8] : memref<16x8xf32, #tpu.memory_space<vmem>>, vector<16x8xf32>
    %cst = arith.constant dense<0.000000e+00> : vector<64x8xf32>
    %13 = tpu.matmul %11, %12, %cst {dimension_numbers = #tpu.dot_dimension_numbers<[1], [0], [0], [1], [0, 0, 1, 1], [], []>} : vector<64x16xf32>, vector<16x8xf32>, vector<64x8xf32> -> vector<64x8xf32>
    %c0_9 = arith.constant 0 : index
    %c0_10 = arith.constant 0 : index
    %14 = vector.load %arg7[%c0_9, %c0_10] : memref<1x8xf32, #tpu.memory_space<vmem>>, vector<1x8xf32>
    %15 = vector.broadcast %14 : vector<1x8xf32> to vector<64x8xf32>
    %16 = arith.mulf %13, %15 : vector<64x8xf32>
    %c0_11 = arith.constant 0 : index
    %c0_12 = arith.constant 0 : index
    %17 = vector.load %arg8[%c0_11, %c0_12] : memref<1x8xf32, #tpu.memory_space<vmem>>, vector<1x8xf32>
    %18 = vector.broadcast %17 : vector<1x8xf32> to vector<64x8xf32>
    %19 = arith.addf %16, %18 : vector<64x8xf32>
    %cst_13 = arith.constant 0.000000e+00 : f32
    %20 = vector.broadcast %cst_13 : f32 to vector<64x8xf32>
    %21 = arith.maximumf %19, %20 : vector<64x8xf32>
    %22 = vector.shape_cast %21 : vector<64x8xf32> to vector<8x8x8xf32>
    %c0_14 = arith.constant 0 : index
    %c0_15 = arith.constant 0 : index
    %c0_16 = arith.constant 0 : index
    %c0_17 = arith.constant 0 : index
    %23 = vector.load %arg4[%c0_14, %c0_15, %c0_16, %c0_17] : memref<1x8x9x8xf32, #tpu.memory_space<vmem>>, vector<1x8x9x8xf32>
    %24 = vector.shape_cast %23 : vector<1x8x9x8xf32> to vector<8x9x8xf32>
    %c0_18 = arith.constant 0 : index
    %c0_19 = arith.constant 0 : index
    %c0_20 = arith.constant 0 : index
    %c0_21 = arith.constant 0 : index
    %25 = vector.load %arg5[%c0_18, %c0_19, %c0_20, %c0_21] : memref<1x1x9x8xf32, #tpu.memory_space<vmem>>, vector<1x1x9x8xf32>
    %26 = vector.shape_cast %25 : vector<1x1x9x8xf32> to vector<1x9x8xf32>
    %27 = vector.extract_strided_slice %24 {offsets = [1, 0, 0], sizes = [7, 9, 8], strides = [1, 1, 1]} : vector<8x9x8xf32> to vector<7x9x8xf32>
    %28 = tpu.concatenate %27, %26 in 0 : vector<7x9x8xf32>, vector<1x9x8xf32> -> vector<8x9x8xf32>
    %29 = vector.extract_strided_slice %24 {offsets = [0, 0, 0], sizes = [8, 8, 8], strides = [1, 1, 1]} : vector<8x9x8xf32> to vector<8x8x8xf32>
    %30 = vector.extract_strided_slice %24 {offsets = [0, 1, 0], sizes = [8, 8, 8], strides = [1, 1, 1]} : vector<8x9x8xf32> to vector<8x8x8xf32>
    %31 = arith.maximumf %29, %30 : vector<8x8x8xf32>
    %32 = vector.extract_strided_slice %28 {offsets = [0, 0, 0], sizes = [8, 8, 8], strides = [1, 1, 1]} : vector<8x9x8xf32> to vector<8x8x8xf32>
    %33 = vector.extract_strided_slice %28 {offsets = [0, 1, 0], sizes = [8, 8, 8], strides = [1, 1, 1]} : vector<8x9x8xf32> to vector<8x8x8xf32>
    %34 = arith.maximumf %32, %33 : vector<8x8x8xf32>
    %35 = arith.maximumf %31, %34 : vector<8x8x8xf32>
    %c0_22 = arith.constant 0 : index
    %c0_23 = arith.constant 0 : index
    %c0_24 = arith.constant 0 : index
    %c0_25 = arith.constant 0 : index
    %36 = vector.load %arg9[%c0_22, %c0_23, %c0_24, %c0_25] : memref<1x8x8x16xf32, #tpu.memory_space<vmem>>, vector<1x8x8x8xf32>
    %37 = vector.shape_cast %36 : vector<1x8x8x8xf32> to vector<8x8x8xf32>
    %38 = vector.shape_cast %35 : vector<8x8x8xf32> to vector<1x8x8x8xf32>
    tpu.vector_store %arg9[%c0_22, %c0_23, %c0_24, %c0_25], %38 {strides = array<i32>} : memref<1x8x8x16xf32, #tpu.memory_space<vmem>>, vector<1x8x8x8xf32>,
    %c0_26 = arith.constant 0 : index
    %c0_27 = arith.constant 0 : index
    %c0_28 = arith.constant 0 : index
    %c8 = arith.constant 8 : index
    %39 = vector.load %arg9[%c0_26, %c0_27, %c0_28, %c8] : memref<1x8x8x16xf32, #tpu.memory_space<vmem>>, vector<1x8x8x8xf32>
    %40 = vector.shape_cast %39 : vector<1x8x8x8xf32> to vector<8x8x8xf32>
    %41 = vector.shape_cast %22 : vector<8x8x8xf32> to vector<1x8x8x8xf32>
    tpu.vector_store %arg9[%c0_26, %c0_27, %c0_28, %c8], %41 {strides = array<i32>} : memref<1x8x8x16xf32, #tpu.memory_space<vmem>>, vector<1x8x8x8xf32>,
    return
  }
  func.func @transform_0(%arg0: i32, %arg1: i32) -> (i32, i32, i32, i32) {
    %c0_i32 = arith.constant 0 : i32
    %c0_i32_0 = arith.constant 0 : i32
    %c0_i32_1 = arith.constant 0 : i32
    return %arg0, %arg1, %c0_i32, %c0_i32_0 : i32, i32, i32, i32
  }
  func.func @transform_1(%arg0: i32, %arg1: i32) -> (i32, i32, i32, i32) {
    %c1_i32 = arith.constant 1 : i32
    %0 = arith.addi %arg1, %c1_i32 : i32
    %c8_i32 = arith.constant 8 : i32
    %1 = arith.muli %0, %c8_i32 : i32
    %c0_i32 = arith.constant 0 : i32
    %c0_i32_0 = arith.constant 0 : i32
    %c0_i32_1 = arith.constant 0 : i32
    return %arg0, %1, %c0_i32, %c0_i32_0 : i32, i32, i32, i32
  }
  func.func @transform_2(%arg0: i32, %arg1: i32) -> (i32, i32, i32, i32) {
    %c0_i32 = arith.constant 0 : i32
    %c0_i32_0 = arith.constant 0 : i32
    %c0_i32_1 = arith.constant 0 : i32
    return %arg0, %arg1, %c0_i32, %c0_i32_0 : i32, i32, i32, i32
  }
  func.func @transform_3(%arg0: i32, %arg1: i32) -> (i32, i32, i32, i32) {
    %c1_i32 = arith.constant 1 : i32
    %0 = arith.addi %arg1, %c1_i32 : i32
    %c8_i32 = arith.constant 8 : i32
    %1 = arith.muli %0, %c8_i32 : i32
    %c0_i32 = arith.constant 0 : i32
    %c0_i32_0 = arith.constant 0 : i32
    %c0_i32_1 = arith.constant 0 : i32
    return %arg0, %1, %c0_i32, %c0_i32_0 : i32, i32, i32, i32
  }
  func.func @transform_4(%arg0: i32, %arg1: i32) -> (i32, i32) {
    %c0_i32 = arith.constant 0 : i32
    %c0_i32_0 = arith.constant 0 : i32
    %c0_i32_1 = arith.constant 0 : i32
    return %c0_i32, %c0_i32_0 : i32, i32
  }
  func.func @transform_5(%arg0: i32, %arg1: i32) -> (i32, i32) {
    %c0_i32 = arith.constant 0 : i32
    %c0_i32_0 = arith.constant 0 : i32
    %c0_i32_1 = arith.constant 0 : i32
    return %c0_i32, %c0_i32_0 : i32, i32
  }
  func.func @transform_6(%arg0: i32, %arg1: i32) -> (i32, i32) {
    %c0_i32 = arith.constant 0 : i32
    %c0_i32_0 = arith.constant 0 : i32
    %c0_i32_1 = arith.constant 0 : i32
    return %c0_i32, %c0_i32_0 : i32, i32
  }
  func.func @transform_7(%arg0: i32, %arg1: i32) -> (i32, i32, i32, i32) {
    %c0_i32 = arith.constant 0 : i32
    %c0_i32_0 = arith.constant 0 : i32
    %c0_i32_1 = arith.constant 0 : i32
    return %arg0, %arg1, %c0_i32, %c0_i32_0 : i32, i32, i32, i32
  }
}

module attributes {stable_mosaic.version = 11 : i64} {
  func.func @kernel(%arg0: i32, %arg1: i32, %arg2: memref<1x4x2x9x32xf32, #tpu.memory_space<vmem>>, %arg3: memref<1x1x1x9x32xf32, #tpu.memory_space<vmem>>, %arg4: memref<192x8xf32, #tpu.memory_space<vmem>>, %arg5: memref<1x8xf32, #tpu.memory_space<vmem>>, %arg6: memref<1x8xf32, #tpu.memory_space<vmem>>, %arg7: memref<8x16xf32, #tpu.memory_space<vmem>>, %arg8: memref<1x16xf32, #tpu.memory_space<vmem>>, %arg9: memref<1x16xf32, #tpu.memory_space<vmem>>, %arg10: memref<1x4x4x16xf32, #tpu.memory_space<vmem>>) attributes {dimension_semantics = [#tpu.dimension_semantics<parallel>, #tpu.dimension_semantics<parallel>], iteration_bounds = array<i64: 2, 1>, scalar_prefetch = 0 : i64, scratch_operands = 0 : i64, tpu.core_type = #tpu.core_type<tc>, window_params = [{transform_indices = @transform_0, window_bounds = array<i64: 1, 4, 2, 9, 32>}, {transform_indices = @transform_1, window_bounds = array<i64: 1, 1, 1, 9, 32>}, {pipeline_mode = #tpu.pipeline_mode<synchronous>, transform_indices = @transform_2, window_bounds = array<i64: 192, 8>}, {pipeline_mode = #tpu.pipeline_mode<synchronous>, transform_indices = @transform_3, window_bounds = array<i64: 1, 8>}, {pipeline_mode = #tpu.pipeline_mode<synchronous>, transform_indices = @transform_4, window_bounds = array<i64: 1, 8>}, {pipeline_mode = #tpu.pipeline_mode<synchronous>, transform_indices = @transform_5, window_bounds = array<i64: 8, 16>}, {pipeline_mode = #tpu.pipeline_mode<synchronous>, transform_indices = @transform_6, window_bounds = array<i64: 1, 16>}, {pipeline_mode = #tpu.pipeline_mode<synchronous>, transform_indices = @transform_7, window_bounds = array<i64: 1, 16>}, {transform_indices = @transform_8, window_bounds = array<i64: 1, 4, 4, 16>}]} {
    %c0 = arith.constant 0 : index
    %c0_0 = arith.constant 0 : index
    %c0_1 = arith.constant 0 : index
    %c0_2 = arith.constant 0 : index
    %c0_3 = arith.constant 0 : index
    %0 = vector.load %arg2[%c0, %c0_0, %c0_1, %c0_2, %c0_3] : memref<1x4x2x9x32xf32, #tpu.memory_space<vmem>>, vector<1x4x2x9x32xf32>
    %1 = vector.shape_cast %0 : vector<1x4x2x9x32xf32> to vector<4x2x9x32xf32>
    %c0_4 = arith.constant 0 : index
    %c0_5 = arith.constant 0 : index
    %c0_6 = arith.constant 0 : index
    %c0_7 = arith.constant 0 : index
    %c0_8 = arith.constant 0 : index
    %2 = vector.load %arg3[%c0_4, %c0_5, %c0_6, %c0_7, %c0_8] : memref<1x1x1x9x32xf32, #tpu.memory_space<vmem>>, vector<1x1x1x9x32xf32>
    %3 = vector.shape_cast %2 : vector<1x1x1x9x32xf32> to vector<1x9x32xf32>
    %4 = vector.extract_strided_slice %1 {offsets = [1, 0, 0, 0], sizes = [3, 1, 9, 32], strides = [1, 1, 1, 1]} : vector<4x2x9x32xf32> to vector<3x1x9x32xf32>
    %5 = vector.shape_cast %4 : vector<3x1x9x32xf32> to vector<3x9x32xf32>
    %6 = tpu.concatenate %5, %3 in 0 : vector<3x9x32xf32>, vector<1x9x32xf32> -> vector<4x9x32xf32>
    %7 = vector.extract_strided_slice %1 {offsets = [0, 0, 0, 0], sizes = [4, 1, 9, 32], strides = [1, 1, 1, 1]} : vector<4x2x9x32xf32> to vector<4x1x9x32xf32>
    %8 = vector.shape_cast %7 : vector<4x1x9x32xf32> to vector<4x9x32xf32>
    %9 = vector.extract_strided_slice %8 {offsets = [0, 0, 0], sizes = [4, 8, 32], strides = [1, 1, 1]} : vector<4x9x32xf32> to vector<4x8x32xf32>
    %10 = vector.extract_strided_slice %8 {offsets = [0, 1, 0], sizes = [4, 8, 32], strides = [1, 1, 1]} : vector<4x9x32xf32> to vector<4x8x32xf32>
    %11 = vector.extract_strided_slice %1 {offsets = [0, 1, 0, 0], sizes = [4, 1, 9, 32], strides = [1, 1, 1, 1]} : vector<4x2x9x32xf32> to vector<4x1x9x32xf32>
    %12 = vector.shape_cast %11 : vector<4x1x9x32xf32> to vector<4x9x32xf32>
    %13 = vector.extract_strided_slice %12 {offsets = [0, 0, 0], sizes = [4, 8, 32], strides = [1, 1, 1]} : vector<4x9x32xf32> to vector<4x8x32xf32>
    %14 = vector.extract_strided_slice %12 {offsets = [0, 1, 0], sizes = [4, 8, 32], strides = [1, 1, 1]} : vector<4x9x32xf32> to vector<4x8x32xf32>
    %15 = vector.extract_strided_slice %6 {offsets = [0, 0, 0], sizes = [4, 8, 32], strides = [1, 1, 1]} : vector<4x9x32xf32> to vector<4x8x32xf32>
    %16 = vector.extract_strided_slice %6 {offsets = [0, 1, 0], sizes = [4, 8, 32], strides = [1, 1, 1]} : vector<4x9x32xf32> to vector<4x8x32xf32>
    %17 = tpu.concatenate %9, %10, %13, %14, %15, %16 in 2 : vector<4x8x32xf32>, vector<4x8x32xf32>, vector<4x8x32xf32>, vector<4x8x32xf32>, vector<4x8x32xf32>, vector<4x8x32xf32> -> vector<4x8x192xf32>
    %18 = vector.shape_cast %17 : vector<4x8x192xf32> to vector<32x192xf32>
    %c0_9 = arith.constant 0 : index
    %c0_10 = arith.constant 0 : index
    %19 = vector.load %arg4[%c0_9, %c0_10] : memref<192x8xf32, #tpu.memory_space<vmem>>, vector<192x8xf32>
    %cst = arith.constant dense<0.000000e+00> : vector<32x8xf32>
    %20 = tpu.matmul %18, %19, %cst {dimension_numbers = #tpu.dot_dimension_numbers<[1], [0], [0], [1], [0, 0, 1, 1], [], []>} : vector<32x192xf32>, vector<192x8xf32>, vector<32x8xf32> -> vector<32x8xf32>
    %c0_11 = arith.constant 0 : index
    %c0_12 = arith.constant 0 : index
    %21 = vector.load %arg5[%c0_11, %c0_12] : memref<1x8xf32, #tpu.memory_space<vmem>>, vector<1x8xf32>
    %22 = vector.broadcast %21 : vector<1x8xf32> to vector<32x8xf32>
    %23 = arith.mulf %20, %22 : vector<32x8xf32>
    %c0_13 = arith.constant 0 : index
    %c0_14 = arith.constant 0 : index
    %24 = vector.load %arg6[%c0_13, %c0_14] : memref<1x8xf32, #tpu.memory_space<vmem>>, vector<1x8xf32>
    %25 = vector.broadcast %24 : vector<1x8xf32> to vector<32x8xf32>
    %26 = arith.addf %23, %25 : vector<32x8xf32>
    %cst_15 = arith.constant 0.000000e+00 : f32
    %27 = vector.broadcast %cst_15 : f32 to vector<32x8xf32>
    %28 = arith.maximumf %26, %27 : vector<32x8xf32>
    %c0_16 = arith.constant 0 : index
    %c0_17 = arith.constant 0 : index
    %29 = vector.load %arg7[%c0_16, %c0_17] : memref<8x16xf32, #tpu.memory_space<vmem>>, vector<8x16xf32>
    %cst_18 = arith.constant dense<0.000000e+00> : vector<32x16xf32>
    %30 = tpu.matmul %28, %29, %cst_18 {dimension_numbers = #tpu.dot_dimension_numbers<[1], [0], [0], [1], [0, 0, 1, 1], [], []>} : vector<32x8xf32>, vector<8x16xf32>, vector<32x16xf32> -> vector<32x16xf32>
    %c0_19 = arith.constant 0 : index
    %c0_20 = arith.constant 0 : index
    %31 = vector.load %arg8[%c0_19, %c0_20] : memref<1x16xf32, #tpu.memory_space<vmem>>, vector<1x16xf32>
    %32 = vector.broadcast %31 : vector<1x16xf32> to vector<32x16xf32>
    %33 = arith.mulf %30, %32 : vector<32x16xf32>
    %c0_21 = arith.constant 0 : index
    %c0_22 = arith.constant 0 : index
    %34 = vector.load %arg9[%c0_21, %c0_22] : memref<1x16xf32, #tpu.memory_space<vmem>>, vector<1x16xf32>
    %35 = vector.broadcast %34 : vector<1x16xf32> to vector<32x16xf32>
    %36 = arith.addf %33, %35 : vector<32x16xf32>
    %cst_23 = arith.constant 0.000000e+00 : f32
    %37 = vector.broadcast %cst_23 : f32 to vector<32x16xf32>
    %38 = arith.maximumf %36, %37 : vector<32x16xf32>
    %39 = vector.shape_cast %38 : vector<32x16xf32> to vector<4x8x16xf32>
    %40 = vector.extract_strided_slice %39 {offsets = [0, 0, 0], sizes = [4, 4, 16], strides = [1, 1, 1]} : vector<4x8x16xf32> to vector<4x4x16xf32>
    %c0_24 = arith.constant 0 : index
    %c0_25 = arith.constant 0 : index
    %c0_26 = arith.constant 0 : index
    %c0_27 = arith.constant 0 : index
    %41 = vector.load %arg10[%c0_24, %c0_25, %c0_26, %c0_27] : memref<1x4x4x16xf32, #tpu.memory_space<vmem>>, vector<1x4x4x16xf32>
    %42 = vector.shape_cast %41 : vector<1x4x4x16xf32> to vector<4x4x16xf32>
    %43 = vector.shape_cast %40 : vector<4x4x16xf32> to vector<1x4x4x16xf32>
    tpu.vector_store %arg10[%c0_24, %c0_25, %c0_26, %c0_27], %43 {strides = array<i32>} : memref<1x4x4x16xf32, #tpu.memory_space<vmem>>, vector<1x4x4x16xf32>,
    return
  }
  func.func @transform_0(%arg0: i32, %arg1: i32) -> (i32, i32, i32, i32, i32) {
    %c0_i32 = arith.constant 0 : i32
    %c0_i32_0 = arith.constant 0 : i32
    %c0_i32_1 = arith.constant 0 : i32
    %c0_i32_2 = arith.constant 0 : i32
    return %arg0, %arg1, %c0_i32, %c0_i32_0, %c0_i32_1 : i32, i32, i32, i32, i32
  }
  func.func @transform_1(%arg0: i32, %arg1: i32) -> (i32, i32, i32, i32, i32) {
    %c1_i32 = arith.constant 1 : i32
    %0 = arith.addi %arg1, %c1_i32 : i32
    %c4_i32 = arith.constant 4 : i32
    %1 = arith.muli %0, %c4_i32 : i32
    %c0_i32 = arith.constant 0 : i32
    %c0_i32_0 = arith.constant 0 : i32
    %c0_i32_1 = arith.constant 0 : i32
    %c0_i32_2 = arith.constant 0 : i32
    return %arg0, %1, %c0_i32, %c0_i32_0, %c0_i32_1 : i32, i32, i32, i32, i32
  }
  func.func @transform_2(%arg0: i32, %arg1: i32) -> (i32, i32) {
    %c0_i32 = arith.constant 0 : i32
    %c0_i32_0 = arith.constant 0 : i32
    %c0_i32_1 = arith.constant 0 : i32
    return %c0_i32, %c0_i32_0 : i32, i32
  }
  func.func @transform_3(%arg0: i32, %arg1: i32) -> (i32, i32) {
    %c0_i32 = arith.constant 0 : i32
    %c0_i32_0 = arith.constant 0 : i32
    %c0_i32_1 = arith.constant 0 : i32
    return %c0_i32, %c0_i32_0 : i32, i32
  }
  func.func @transform_4(%arg0: i32, %arg1: i32) -> (i32, i32) {
    %c0_i32 = arith.constant 0 : i32
    %c0_i32_0 = arith.constant 0 : i32
    %c0_i32_1 = arith.constant 0 : i32
    return %c0_i32, %c0_i32_0 : i32, i32
  }
  func.func @transform_5(%arg0: i32, %arg1: i32) -> (i32, i32) {
    %c0_i32 = arith.constant 0 : i32
    %c0_i32_0 = arith.constant 0 : i32
    %c0_i32_1 = arith.constant 0 : i32
    return %c0_i32, %c0_i32_0 : i32, i32
  }
  func.func @transform_6(%arg0: i32, %arg1: i32) -> (i32, i32) {
    %c0_i32 = arith.constant 0 : i32
    %c0_i32_0 = arith.constant 0 : i32
    %c0_i32_1 = arith.constant 0 : i32
    return %c0_i32, %c0_i32_0 : i32, i32
  }
  func.func @transform_7(%arg0: i32, %arg1: i32) -> (i32, i32) {
    %c0_i32 = arith.constant 0 : i32
    %c0_i32_0 = arith.constant 0 : i32
    %c0_i32_1 = arith.constant 0 : i32
    return %c0_i32, %c0_i32_0 : i32, i32
  }
  func.func @transform_8(%arg0: i32, %arg1: i32) -> (i32, i32, i32, i32) {
    %c0_i32 = arith.constant 0 : i32
    %c0_i32_0 = arith.constant 0 : i32
    %c0_i32_1 = arith.constant 0 : i32
    return %arg0, %arg1, %c0_i32, %c0_i32_0 : i32, i32, i32, i32
  }
}

</mosaic_0001>

<llo_original>
// kernel: stem_block_forward.5
$region0: #{stem_block_forward.5}
  #allocation0 [shape = 'u32[]', space=smem, size = 0x4, offset = 0x4, fixed_abs, tag = 'smem constant byte address 0x4 - core index']
  #allocation1 [shape = 'u32[144,128]{1,0:T(1,128)}', space=vmem, size = 0x12000, scoped, tag = 'internal scratch']
  %s0 = inlined_call_operand.vmem [shape: f32[2,9,1,9,8], index: 0, kind: input, shape index: {}, may-alias: {0,1}]
  %s1 = inlined_call_operand.vmem [shape: f32[2,9,1,9,8], index: 1, kind: input, shape index: {}, may-alias: {0,1}]
  %s2 = inlined_call_operand.vmem [shape: f32[32,4], index: 2, kind: input, shape index: {}]
  %s3 = inlined_call_operand.vmem [shape: f32[1,4], index: 3, kind: input, shape index: {}]
  %s4 = inlined_call_operand.vmem [shape: f32[1,4], index: 4, kind: input, shape index: {}]
  %s5 = inlined_call_operand.vmem [shape: f32[2,8,8,4], index: 5, kind: output, shape index: {}]
  %s6 = sld [smem:[#allocation0]]
  $region53: #{stem_block_forward.5} parent=0
    _
  %s8 = ssub.s32 1, %s6
  %s9 = scalar_select 0, %s8, %s6
  loop: start=0, step=1, limit=4
  $region2: #{stem_block_forward.5} parent=0 // loop_pre_header
    _
  $region3: #{stem_block_forward.5} parent=0 // loop_header
    %s11 = sphi 0, %s15
    %p12 = scmp.ge.s32.totalorder %s11, 4
    %s18 = sphi 0, %s30
    %s19 = sphi 0, %s26
    %s20 = sphi 0, %s18
    %s21 = sphi 0, %s19
    %s22 = sphi 0, %s20
    %s23 = sphi 0, %s21
    %s35 = sphi 0, %s37
    %s38 = sphi 0, %s35
    %s39 = sphi 0, %s38
    %s55 = sphi 0, %s39
    %s67 = sphi 0, %s69
    %s70 = sphi 0, %s67
    %s71 = sphi 0, %s70
    %s87 = sphi 0, %s71
    %s91 = sphi 0, %s91
    %s93 = sphi 0, %s91
    %s94 = sphi 0, %s93
    %s108 = sphi 0, %s94
    %s112 = sphi 0, %s112
    %s114 = sphi 0, %s112
    %s115 = sphi 0, %s114
    %s129 = sphi 0, %s115
    %s133 = sphi 0, %s133
    %s135 = sphi 0, %s133
    %s136 = sphi 0, %s135
    %s150 = sphi 0, %s136
    %s158 = sphi 0, %s160
    %s161 = sphi 0, %s158
    %s162 = sphi 0, %s161
    %s178 = sphi 0, %s162
  $region4: #{stem_block_forward.5} parent=0 // loop_header_branch
    %14 = sbr.rel (%p12) target = $region8
  $region5: #{stem_block_forward.5} parent=0 // loop_body
    %s16 = ssub.s32 %s11, 1
    %s17 = ssub.s32 %s11, 2
    %s24 = sadd.s32 1, %s19
    %p25 = scmp.ge.s32.totalorder %s24, 1
    %s26 = scalar_select %p25, 0, %s24
    %s27 = sadd.s32 1, %s18
    %s28 = scalar_select %p25, %s27, %s18
    %p29 = scmp.ge.s32.totalorder %s28, 2
    %s30 = scalar_select %p29, 0, %s28
    %s31 = ssub.s32 %s18, %s30
    %s32 = ssub.s32 %s19, %s26
    %s33 = sor.u32 %s31, %s32
    %p34 = scmp.eq.s32.totalorder %s33, 0
    %s36 = sadd.s32 %s35, 1
    %s37 = scalar_select %p34, %s35, %s36
    %p40 = pneg %p34
    %p41 = scmp.eq.s32.totalorder %s11, 1
    %p42 = por %p40, %p41
    %p43 = scmp.ne.s32.totalorder %s35, %s38
    %p44 = scmp.eq.s32.totalorder %s11, 0
    %p45 = por %p43, %p44
    %p46 = scmp.ne.s32.totalorder %s35, %s38
    %p47 = scmp.eq.s32.totalorder %s16, 1
    %p48 = por %p46, %p47
    %p49 = scmp.ne.s32.totalorder %s38, %s39
    %p50 = scmp.eq.s32.totalorder %s16, 0
    %p51 = por %p49, %p50
    %p52 = scmp.ne.s32.totalorder %s38, %s39
    %p53 = scmp.eq.s32.totalorder %s17, 1
    %p54 = por %p52, %p53
    %p56 = scmp.ne.s32.totalorder %s39, %s55
    %p57 = scmp.eq.s32.totalorder %s17, 0
    %p58 = por %p56, %p57
    %s59 = sadd.s32 %s19, 1
    %s60 = smul.u32 %s59, 8
    %s61 = sadd.s32 %s26, 1
    %s62 = smul.u32 %s61, 8
    %s63 = ssub.s32 %s18, %s30
    %s64 = ssub.s32 %s60, %s62
    %s65 = sor.u32 %s63, %s64
    %p66 = scmp.eq.s32.totalorder %s65, 0
    %s68 = sadd.s32 %s67, 1
    %s69 = scalar_select %p66, %s67, %s68
    %p72 = pneg %p66
    %p73 = scmp.eq.s32.totalorder %s11, 1
    %p74 = por %p72, %p73
    %p75 = scmp.ne.s32.totalorder %s67, %s70
    %p76 = scmp.eq.s32.totalorder %s11, 0
    %p77 = por %p75, %p76
    %p78 = scmp.ne.s32.totalorder %s67, %s70
    %p79 = scmp.eq.s32.totalorder %s16, 1
    %p80 = por %p78, %p79
    %p81 = scmp.ne.s32.totalorder %s70, %s71
    %p82 = scmp.eq.s32.totalorder %s16, 0
    %p83 = por %p81, %p82
    %p84 = scmp.ne.s32.totalorder %s70, %s71
    %p85 = scmp.eq.s32.totalorder %s17, 1
    %p86 = por %p84, %p85
    %p88 = scmp.ne.s32.totalorder %s71, %s87
    %p89 = scmp.eq.s32.totalorder %s17, 0
    %p90 = por %p88, %p89
    %s92 = sadd.s32 %s91, 1
    %p95 = scmp.eq.s32.totalorder %s11, 1
    %p96 = scmp.ne.s32.totalorder %s91, %s93
    %p97 = scmp.eq.s32.totalorder %s11, 0
    %p98 = por %p96, %p97
    %p99 = scmp.ne.s32.totalorder %s91, %s93
    %p100 = scmp.eq.s32.totalorder %s16, 1
    %p101 = por %p99, %p100
    %p102 = scmp.ne.s32.totalorder %s93, %s94
    %p103 = scmp.eq.s32.totalorder %s16, 0
    %p104 = por %p102, %p103
    %p105 = scmp.ne.s32.totalorder %s93, %s94
    %p106 = scmp.eq.s32.totalorder %s17, 1
    %p107 = por %p105, %p106
    %p109 = scmp.ne.s32.totalorder %s94, %s108
    %p110 = scmp.eq.s32.totalorder %s17, 0
    %p111 = por %p109, %p110
    %s113 = sadd.s32 %s112, 1
    %p116 = scmp.eq.s32.totalorder %s11, 1
    %p117 = scmp.ne.s32.totalorder %s112, %s114
    %p118 = scmp.eq.s32.totalorder %s11, 0
    %p119 = por %p117, %p118
    %p120 = scmp.ne.s32.totalorder %s112, %s114
    %p121 = scmp.eq.s32.totalorder %s16, 1
    %p122 = por %p120, %p121
    %p123 = scmp.ne.s32.totalorder %s114, %s115
    %p124 = scmp.eq.s32.totalorder %s16, 0
    %p125 = por %p123, %p124
    %p126 = scmp.ne.s32.totalorder %s114, %s115
    %p127 = scmp.eq.s32.totalorder %s17, 1
    %p128 = por %p126, %p127
    %p130 = scmp.ne.s32.totalorder %s115, %s129
    %p131 = scmp.eq.s32.totalorder %s17, 0
    %p132 = por %p130, %p131
    %s134 = sadd.s32 %s133, 1
    %p137 = scmp.eq.s32.totalorder %s11, 1
    %p138 = scmp.ne.s32.totalorder %s133, %s135
    %p139 = scmp.eq.s32.totalorder %s11, 0
    %p140 = por %p138, %p139
    %p141 = scmp.ne.s32.totalorder %s133, %s135
    %p142 = scmp.eq.s32.totalorder %s16, 1
    %p143 = por %p141, %p142
    %p144 = scmp.ne.s32.totalorder %s135, %s136
    %p145 = scmp.eq.s32.totalorder %s16, 0
    %p146 = por %p144, %p145
    %p147 = scmp.ne.s32.totalorder %s135, %s136
    %p148 = scmp.eq.s32.totalorder %s17, 1
    %p149 = por %p147, %p148
    %p151 = scmp.ne.s32.totalorder %s136, %s150
    %p152 = scmp.eq.s32.totalorder %s17, 0
    %p153 = por %p151, %p152
    %s154 = ssub.s32 %s18, %s30
    %s155 = ssub.s32 %s19, %s26
    %s156 = sor.u32 %s154, %s155
    %p157 = scmp.eq.s32.totalorder %s156, 0
    %s159 = sadd.s32 %s158, 1
    %s160 = scalar_select %p157, %s158, %s159
    %p163 = pneg %p157
    %p164 = scmp.eq.s32.totalorder %s11, 1
    %p165 = por %p163, %p164
    %p166 = scmp.ne.s32.totalorder %s158, %s161
    %p167 = scmp.eq.s32.totalorder %s11, 0
    %p168 = por %p166, %p167
    %p169 = scmp.ne.s32.totalorder %s158, %s161
    %p170 = scmp.eq.s32.totalorder %s16, 1
    %p171 = por %p169, %p170
    %p172 = scmp.ne.s32.totalorder %s161, %s162
    %p173 = scmp.eq.s32.totalorder %s16, 0
    %p174 = por %p172, %p173
    %p175 = scmp.ne.s32.totalorder %s161, %s162
    %p176 = scmp.eq.s32.totalorder %s17, 1
    %p177 = por %p175, %p176
    %p179 = scmp.ne.s32.totalorder %s162, %s178
    %p180 = scmp.eq.s32.totalorder %s17, 0
    %p181 = por %p179, %p180
    %p182 = scmp.le.s32.totalorder 1, %s11
    %p183 = scmp.lt.s32.totalorder %s11, 3
    %p184 = pnand %p182, %p183
    %p185 = pneg %p184
    // Predicated region
    $region9: #{stem_block_forward.5} parent=5 // pred_check
      _
    $region10: #{stem_block_forward.5} parent=5 // pred_check_branch
      %187 = sbr.rel (%p184) target = $region12
    $region11: #{stem_block_forward.5} parent=5 // pred_region
      %s188 = ssub.s32 %s11, 1
      // Predicated region
      $region13: #{stem_block_forward.5} parent=11 // pred_check
        %p189 = pneg %p104
      $region14: #{stem_block_forward.5} parent=11 // pred_check_branch
        %191 = sbr.rel (%p189) target = $region16
      $region15: #{stem_block_forward.5} parent=11 // pred_region
        _
      $region16: #{stem_block_forward.5} parent=11 // pred_fallthru
        _
      // Predicated region
      $region17: #{stem_block_forward.5} parent=11 // pred_check
        %p192 = pneg %p125
      $region18: #{stem_block_forward.5} parent=11 // pred_check_branch
        %194 = sbr.rel (%p192) target = $region20
      $region19: #{stem_block_forward.5} parent=11 // pred_region
        _
      $region20: #{stem_block_forward.5} parent=11 // pred_fallthru
        _
      // Predicated region
      $region21: #{stem_block_forward.5} parent=11 // pred_check
        %p195 = pneg %p146
      $region22: #{stem_block_forward.5} parent=11 // pred_check_branch
        %197 = sbr.rel (%p195) target = $region24
      $region23: #{stem_block_forward.5} parent=11 // pred_region
        _
      $region24: #{stem_block_forward.5} parent=11 // pred_fallthru
        _
    $region12: #{stem_block_forward.5} parent=5 // pred_fallthru
      _
    %p198 = scmp.lt.s32.totalorder %s11, 2
    // Predicated region
    $region25: #{stem_block_forward.5} parent=5 // pred_check
      %p199 = pneg %p198
    $region26: #{stem_block_forward.5} parent=5 // pred_check_branch
      %201 = sbr.rel (%p199) target = $region28
    $region27: #{stem_block_forward.5} parent=5 // pred_region
      // Predicated region
      $region29: #{stem_block_forward.5} parent=27 // pred_check
        %p202 = pneg %p45
      $region30: #{stem_block_forward.5} parent=27 // pred_check_branch
        %204 = sbr.rel (%p202) target = $region32
      $region31: #{stem_block_forward.5} parent=27 // pred_region
        %s205 = smul.u32 8, %s19
        %s206 = ssub.s32 9, %s205
        %p207 = scmp.lt.s32.totalorder %s206, 8
        %s208 = scalar_select %p207, %s206, 8
        %s209 = smul.u32 128, %s208
        %s210 = smul.u32 %s209, 2
        %p211 = scmp.lt.s32.totalorder %s18, 1
        %s212 = scalar_select %p211, %s18, 1
        %p213 = scmp.lt.s32.totalorder %s205, 8
        %s214 = scalar_select %p213, %s205, 8
        %s215 = smul.addr %s214, 2
        %s216 = smul.addr %s212, 18
        %s217 = sadd.s32 %s215, %s216
        %s218 = smul.addr %s217, 8
        %s219 = scalar_lea.vmem %s0, %s218
        %s220 = smul.u32 8, %s19
        %s221 = ssub.s32 9, %s220
        %p222 = scmp.lt.s32.totalorder %s221, 8
        %s223 = scalar_select %p222, %s221, 8
        %s224 = smul.u32 128, %s223
        %s225 = smul.u32 %s224, 2
      $region32: #{stem_block_forward.5} parent=27 // pred_fallthru
        _
      // Predicated region
      $region33: #{stem_block_forward.5} parent=27 // pred_check
        %p226 = pneg %p77
      $region34: #{stem_block_forward.5} parent=27 // pred_check_branch
        %228 = sbr.rel (%p226) target = $region36
      $region35: #{stem_block_forward.5} parent=27 // pred_region
        %s229 = sadd.s32 %s19, 1
        %s230 = smul.u32 %s229, 8
        %p231 = scmp.lt.s32.totalorder %s18, 1
        %s232 = scalar_select %p231, %s18, 1
        %p233 = scmp.lt.s32.totalorder %s230, 8
        %s234 = scalar_select %p233, %s230, 8
        %s235 = smul.addr %s234, 2
        %s236 = smul.addr %s232, 18
        %s237 = sadd.s32 %s235, %s236
        %s238 = smul.addr %s237, 8
        %s239 = scalar_lea.vmem %s1, %s238
        %s240 = sadd.s32 %s19, 1
        %s241 = smul.u32 %s240, 8
      $region36: #{stem_block_forward.5} parent=27 // pred_fallthru
        _
    $region28: #{stem_block_forward.5} parent=5 // pred_fallthru
      _
    %p242 = scmp.le.s32.totalorder 1, %s11
    %p243 = scmp.lt.s32.totalorder %s11, 3
    %p244 = pnand %p242, %p243
    %p245 = pneg %p244
    // Predicated region
    $region37: #{stem_block_forward.5} parent=5 // pred_check
      _
    $region38: #{stem_block_forward.5} parent=5 // pred_check_branch
      %247 = sbr.rel (%p244) target = $region40
    $region39: #{stem_block_forward.5} parent=5 // pred_region
      %s248 = ssub.s32 %s11, 1
      %s249 = smul.u32 8, %s21
      %s250 = ssub.s32 9, %s249
      %p251 = scmp.lt.s32.totalorder %s250, 8
      %s252 = scalar_select %p251, %s250, 8
      %s253 = smul.u32 128, %s252
      %s254 = smul.u32 %s253, 2
      %p255 = scmp.lt.s32.totalorder %s20, 1
      %s256 = scalar_select %p255, %s20, 1
      %p257 = scmp.lt.s32.totalorder %s249, 8
      %s258 = scalar_select %p257, %s249, 8
      %s259 = smul.addr %s258, 2
      %s260 = smul.addr %s256, 18
      %s261 = sadd.s32 %s259, %s260
      %s262 = smul.addr %s261, 8
      %s263 = scalar_lea.vmem %s0, %s262
      %p264 = pneg %p51
      %p265 = pneg %p48
      %s266 = sadd.s32 %s21, 1
      %s267 = smul.u32 %s266, 8
      %p268 = scmp.lt.s32.totalorder %s20, 1
      %s269 = scalar_select %p268, %s20, 1
      %p270 = scmp.lt.s32.totalorder %s267, 8
      %s271 = scalar_select %p270, %s267, 8
      %s272 = smul.addr %s271, 2
      %s273 = smul.addr %s269, 18
      %s274 = sadd.s32 %s272, %s273
      %s275 = smul.addr %s274, 8
      %s276 = scalar_lea.vmem %s1, %s275
      %p277 = pneg %p83
      %p278 = pneg %p80
      %p279 = pneg %p104
      %p280 = pneg %p101
      %p281 = pneg %p125
      %p282 = pneg %p122
      %p283 = pneg %p146
      %p284 = pneg %p143
      %p285 = pneg %p174
      %p286 = pneg %p171
      %s287 = smul.u32 8, %s21
      %p288 = scmp.lt.s32.totalorder %s20, 1
      %s289 = scalar_select %p288, %s20, 1
      %p290 = scmp.lt.s32.totalorder %s287, 7
      %s291 = scalar_select %p290, %s287, 7
      %s292 = smul.addr %s289, 8
      %s293 = sadd.s32 %s291, %s292
      %s294 = smul.addr %s293, 8
      %s295 = scalar_lea.vmem %s5, %s294
      %s296 = smul.u32 8, %s21
      %s297 = ssub.s32 9, %s296
      %p298 = scmp.lt.s32.totalorder %s297, 8
      %s299 = scalar_select %p298, %s297, 8
      %s300 = smul.u32 128, %s299
      %s301 = smul.u32 %s300, 2
      %p302 = scmp.lt.s32.totalorder %s20, 1
      %s303 = scalar_select %p302, %s20, 1
      %p304 = scmp.lt.s32.totalorder %s296, 8
      %s305 = scalar_select %p304, %s296, 8
      %s306 = smul.addr %s305, 2
      %s307 = smul.addr %s303, 18
      %s308 = sadd.s32 %s306, %s307
      %s309 = smul.addr %s308, 8
      %s310 = scalar_lea.vmem %s0, %s309
      %s311 = smul.u32 8, %s21
      %s312 = ssub.s32 9, %s311
      %p313 = scmp.lt.s32.totalorder %s312, 8
      %s314 = scalar_select %p313, %s312, 8
      %s315 = smul.u32 128, %s314
      %s316 = smul.u32 %s315, 2
      %s317 = sadd.s32 %s21, 1
      %s318 = smul.u32 %s317, 8
      %p319 = scmp.lt.s32.totalorder %s20, 1
      %s320 = scalar_select %p319, %s20, 1
      %p321 = scmp.lt.s32.totalorder %s318, 8
      %s322 = scalar_select %p321, %s318, 8
      %s323 = smul.addr %s322, 2
      %s324 = smul.addr %s320, 18
      %s325 = sadd.s32 %s323, %s324
      %s326 = smul.addr %s325, 8
      %s327 = scalar_lea.vmem %s1, %s326
      %s328 = sadd.s32 %s21, 1
      %s329 = smul.u32 %s328, 8
      %s330 = smul.u32 8, %s21
      %p331 = scmp.lt.s32.totalorder %s20, 1
      %s332 = scalar_select %p331, %s20, 1
      %p333 = scmp.lt.s32.totalorder %s330, 7
      %s334 = scalar_select %p333, %s330, 7
      %s335 = smul.addr %s332, 8
      %s336 = sadd.s32 %s334, %s335
      %s337 = smul.addr %s336, 8
      %s338 = scalar_lea.vmem %s5, %s337
      %s339 = smul.u32 8, %s21
      %v340 = vld [vmem:[%s310] sm:$0xff]
      %v341 = vld [vmem:[%s310 + $0x8] sm:$0x1]
      %v342 = vld [vmem:[%s310 + $0x10] sm:$0xff]
      %v343 = vld [vmem:[%s310 + $0x18] sm:$0x1]
      %v344 = vld [vmem:[%s310 + $0x20] sm:$0xff]
      %v345 = vld [vmem:[%s310 + $0x28] sm:$0x1]
      %v346 = vld [vmem:[%s310 + $0x30] sm:$0xff]
      %v347 = vld [vmem:[%s310 + $0x38] sm:$0x1]
      %v348 = vld [vmem:[%s310 + $0x40] sm:$0xff]
      %v349 = vld [vmem:[%s310 + $0x48] sm:$0x1]
      %v350 = vld [vmem:[%s310 + $0x50] sm:$0xff]
      %v351 = vld [vmem:[%s310 + $0x58] sm:$0x1]
      %v352 = vld [vmem:[%s310 + $0x60] sm:$0xff]
      %v353 = vld [vmem:[%s310 + $0x68] sm:$0x1]
      %v354 = vld [vmem:[%s310 + $0x70] sm:$0xff]
      %v355 = vld [vmem:[%s310 + $0x78] sm:$0x1]
      %v356 = vld [vmem:[%s327] sm:$0xff]
      %v357 = vld [vmem:[%s327 + $0x8] sm:$0x1]
      %vm374 = vcmask 1046528
      %v375 = vrot.slane %v340, 1
      %v376 = vrot.slane %v341, 1
      %v377 = vsel %vm374, %v375, %v376
      %v378 = vrot.slane %v342, 1
      %v379 = vrot.slane %v343, 1
      %v380 = vsel %vm374, %v378, %v379
      %v381 = vrot.slane %v344, 1
      %v382 = vrot.slane %v345, 1
      %v383 = vsel %vm374, %v381, %v382
      %v384 = vrot.slane %v346, 1
      %v385 = vrot.slane %v347, 1
      %v386 = vsel %vm374, %v384, %v385
      %v387 = vrot.slane %v348, 1
      %v388 = vrot.slane %v349, 1
      %v389 = vsel %vm374, %v387, %v388
      %v390 = vrot.slane %v350, 1
      %v391 = vrot.slane %v351, 1
      %v392 = vsel %vm374, %v390, %v391
      %v393 = vrot.slane %v352, 1
      %v394 = vrot.slane %v353, 1
      %v395 = vsel %vm374, %v393, %v394
      %v396 = vrot.slane %v354, 1
      %v397 = vrot.slane %v355, 1
      %v398 = vsel %vm374, %v396, %v397
      %399 = vrot.lane.b32.xlu0 %v377, 8
      %v400 = vpop.permute.xlu0 %399
      %401 = vrot.lane.b32.xlu0 %v380, 8
      %v402 = vpop.permute.xlu0 %401
      %403 = vrot.lane.b32.xlu0 %v383, 8
      %v404 = vpop.permute.xlu0 %403
      %405 = vrot.lane.b32.xlu0 %v386, 8
      %v406 = vpop.permute.xlu0 %405
      %407 = vrot.lane.b32.xlu0 %v389, 8
      %v408 = vpop.permute.xlu0 %407
      %409 = vrot.lane.b32.xlu0 %v392, 8
      %v410 = vpop.permute.xlu0 %409
      %411 = vrot.lane.b32.xlu0 %v395, 8
      %v412 = vpop.permute.xlu0 %411
      %413 = vrot.lane.b32.xlu0 %v398, 8
      %v414 = vpop.permute.xlu0 %413
      %424 = vrot.lane.b32.xlu0 %v342, 16
      %v425 = vpop.permute.xlu0 %424
      %426 = vrot.lane.b32.xlu0 %v344, 16
      %v427 = vpop.permute.xlu0 %426
      %428 = vrot.lane.b32.xlu0 %v346, 16
      %v429 = vpop.permute.xlu0 %428
      %430 = vrot.lane.b32.xlu0 %v348, 16
      %v431 = vpop.permute.xlu0 %430
      %432 = vrot.lane.b32.xlu0 %v350, 16
      %v433 = vpop.permute.xlu0 %432
      %434 = vrot.lane.b32.xlu0 %v352, 16
      %v435 = vpop.permute.xlu0 %434
      %436 = vrot.lane.b32.xlu0 %v354, 16
      %v437 = vpop.permute.xlu0 %436
      %438 = vrot.lane.b32.xlu0 %v356, 16
      %v439 = vpop.permute.xlu0 %438
      %v449 = vrot.slane %v356, 1
      %v450 = vrot.slane %v357, 1
      %v451 = vsel %vm374, %v449, %v450
      %452 = vrot.lane.b32.xlu0 %v380, 24
      %v453 = vpop.permute.xlu0 %452
      %454 = vrot.lane.b32.xlu0 %v383, 24
      %v455 = vpop.permute.xlu0 %454
      %456 = vrot.lane.b32.xlu0 %v386, 24
      %v457 = vpop.permute.xlu0 %456
      %458 = vrot.lane.b32.xlu0 %v389, 24
      %v459 = vpop.permute.xlu0 %458
      %460 = vrot.lane.b32.xlu0 %v392, 24
      %v461 = vpop.permute.xlu0 %460
      %462 = vrot.lane.b32.xlu0 %v395, 24
      %v463 = vpop.permute.xlu0 %462
      %464 = vrot.lane.b32.xlu0 %v398, 24
      %v465 = vpop.permute.xlu0 %464
      %466 = vrot.lane.b32.xlu0 %v451, 24
      %v467 = vpop.permute.xlu0 %466
      %vm476 = vcmask 64512
      %v477 = vsel %vm476, %v340, %v400
      %v478 = vsel %vm476, %v342, %v402
      %v479 = vsel %vm476, %v344, %v404
      %v480 = vsel %vm476, %v346, %v406
      %v481 = vsel %vm476, %v348, %v408
      %v482 = vsel %vm476, %v350, %v410
      %v483 = vsel %vm476, %v352, %v412
      %v484 = vsel %vm476, %v354, %v414
      %vm485 = vcmask 130048
      %v486 = vsel %vm485, %v477, %v425
      %v487 = vsel %vm485, %v478, %v427
      %v488 = vsel %vm485, %v479, %v429
      %v489 = vsel %vm485, %v480, %v431
      %v490 = vsel %vm485, %v481, %v433
      %v491 = vsel %vm485, %v482, %v435
      %v492 = vsel %vm485, %v483, %v437
      %v493 = vsel %vm485, %v484, %v439
      %vm494 = vcmask 195584
      %v495 = vsel %vm494, %v486, %v453
      %v496 = vsel %vm494, %v487, %v455
      %v497 = vsel %vm494, %v488, %v457
      %v498 = vsel %vm494, %v489, %v459
      %v499 = vsel %vm494, %v490, %v461
      %v500 = vsel %vm494, %v491, %v463
      %v501 = vsel %vm494, %v492, %v465
      %v502 = vsel %vm494, %v493, %v467
      %v503 = vld [vmem:[%s2] sm:$0xff]
      %v504 = vld [vmem:[%s2 + $0x8] sm:$0xff]
      %v505 = vld [vmem:[%s2 + $0x10] sm:$0xff]
      %v506 = vld [vmem:[%s2 + $0x18] sm:$0xff]
      %vm507 = vcmask 261120
      %v509 = vsel %vm507, %v495, 0
      %v512 = vsel %vm507, %v496, 0
      %v515 = vsel %vm507, %v497, 0
      %v518 = vsel %vm507, %v498, 0
      %v521 = vsel %vm507, %v499, 0
      %v524 = vsel %vm507, %v500, 0
      %v527 = vsel %vm507, %v501, 0
      %v530 = vsel %vm507, %v502, 0
      %532 = vmatprep.subr.mxu0 0.0
      %533 = vmatpush1.msra.mxu0 %v503
      %534 = vmatprep.subr.mxu0 0.0
      %535 = vmatpush1.msra.mxu0 %v504
      %536 = vmatprep.subr.mxu0 0.0
      %537 = vmatpush1.msra.mxu0 %v505
      %538 = vmatprep.subr.mxu0 0.0
      %539 = vmatpush1.msra.mxu0 %v506
      %540 = vmatprep.subr.mxu0 0.0
      %541 = vmatpush1.msra.mxu0 0.0
      %542 = vmatprep.subr.mxu0 0.0
      %543 = vmatpush1.msra.mxu0 0.0
      %544 = vmatprep.subr.mxu0 0.0
      %545 = vmatpush1.msra.mxu0 0.0
      %546 = vmatprep.subr.mxu0 0.0
      %547 = vmatpush1.msra.mxu0 0.0
      %548 = vmatprep.subr.mxu0 0.0
      %549 = vmatpush1.msra.mxu0 0.0
      %550 = vmatprep.subr.mxu0 0.0
      %551 = vmatpush1.msra.mxu0 0.0
      %552 = vmatprep.subr.mxu0 0.0
      %553 = vmatpush1.msra.mxu0 0.0
      %554 = vmatprep.subr.mxu0 0.0
      %555 = vmatpush1.msra.mxu0 0.0
      %556 = vmatprep.subr.mxu0 0.0
      %557 = vmatpush1.msra.mxu0 0.0
      %558 = vmatprep.subr.mxu0 0.0
      %559 = vmatpush1.msra.mxu0 0.0
      %560 = vmatprep.subr.mxu0 0.0
      %561 = vmatpush1.msra.mxu0 0.0
      %562 = vmatprep.subr.mxu0 0.0
      %563 = vmatpush1.msra.mxu0 0.0
      %564 = vmatprep.subr.mxu0 0.0
      %565 = vmatpush1.msra.mxu0 0.0
      %566 = vmatprep.subr.mxu0 0.0
      %567 = vmatpush1.msra.mxu0 0.0
      %568 = vmatprep.subr.mxu0 0.0
      %569 = vmatpush1.msra.mxu0 0.0
      %570 = vmatprep.subr.mxu0 0.0
      %571 = vmatpush1.msra.mxu0 0.0
      %572 = vmatprep.subr.mxu0 0.0
      %573 = vmatpush1.msra.mxu0 0.0
      %574 = vmatprep.subr.mxu0 0.0
      %575 = vmatpush1.msra.mxu0 0.0
      %576 = vmatprep.subr.mxu0 0.0
      %577 = vmatpush1.msra.mxu0 0.0
      %578 = vmatprep.subr.mxu0 0.0
      %579 = vmatpush1.msra.mxu0 0.0
      %580 = vmatprep.subr.mxu0 0.0
      %581 = vmatpush1.msra.mxu0 0.0
      %582 = vmatprep.subr.mxu0 0.0
      %583 = vmatpush1.msra.mxu0 0.0
      %584 = vmatprep.subr.mxu0 0.0
      %585 = vmatpush1.msra.mxu0 0.0
      %586 = vmatprep.subr.mxu0 0.0
      %587 = vmatpush1.msra.mxu0 0.0
      %588 = vmatprep.subr.mxu0 0.0
      %589 = vmatpush1.msra.mxu0 0.0
      %590 = vmatprep.subr.mxu0 0.0
      %591 = vmatpush1.msra.mxu0 0.0
      %592 = vmatprep.subr.mxu0 0.0
      %593 = vmatpush1.msra.mxu0 0.0
      %594 = vmatprep.subr.mxu0 0.0
      %595 = vmatpush1.msra.mxu0 0.0
      %596 = vmatprep.mubr.f32.mxu0 0.0
      %597 = vmatmul.mubr.f32.gmra.mrb[0].mxu0 %v509
      %v598 = vpop.f32.mrb[0].mxu0
      %v599 = vadd.f32 0.0, %v598
      %v600 = vpop.f32.mrb[0].mxu0
      %601 = vmatprep.mubr.f32.mxu0 0.0
      %602 = vmatmul.mubr.f32.gmra.mrb[0].mxu0 %v512
      %v603 = vpop.f32.mrb[0].mxu0
      %v604 = vadd.f32 0.0, %v603
      %v605 = vpop.f32.mrb[0].mxu0
      %606 = vmatprep.mubr.f32.mxu0 0.0
      %607 = vmatmul.mubr.f32.gmra.mrb[0].mxu0 %v515
      %v608 = vpop.f32.mrb[0].mxu0
      %v609 = vadd.f32 0.0, %v608
      %v610 = vpop.f32.mrb[0].mxu0
      %611 = vmatprep.mubr.f32.mxu0 0.0
      %612 = vmatmul.mubr.f32.gmra.mrb[0].mxu0 %v518
      %v613 = vpop.f32.mrb[0].mxu0
      %v614 = vadd.f32 0.0, %v613
      %v615 = vpop.f32.mrb[0].mxu0
      %616 = vmatprep.mubr.f32.mxu0 0.0
      %617 = vmatmul.mubr.f32.gmra.mrb[0].mxu0 %v521
      %v618 = vpop.f32.mrb[0].mxu0
      %v619 = vadd.f32 0.0, %v618
      %v620 = vpop.f32.mrb[0].mxu0
      %621 = vmatprep.mubr.f32.mxu0 0.0
      %622 = vmatmul.mubr.f32.gmra.mrb[0].mxu0 %v524
      %v623 = vpop.f32.mrb[0].mxu0
      %v624 = vadd.f32 0.0, %v623
      %v625 = vpop.f32.mrb[0].mxu0
      %626 = vmatprep.mubr.f32.mxu0 0.0
      %627 = vmatmul.mubr.f32.gmra.mrb[0].mxu0 %v527
      %v628 = vpop.f32.mrb[0].mxu0
      %v629 = vadd.f32 0.0, %v628
      %v630 = vpop.f32.mrb[0].mxu0
      %631 = vmatprep.mubr.f32.mxu0 0.0
      %632 = vmatmul.mubr.f32.gmra.mrb[0].mxu0 %v530
      %v633 = vpop.f32.mrb[0].mxu0
      %v634 = vadd.f32 0.0, %v633
      %v635 = vpop.f32.mrb[0].mxu0
      %636 = vdwg.mxu0
      %v637 = vld [vmem:[%s3] sm:$0x1]
      %v639 = vlaneseq
      %v640 = vshrl.u32 %v639, 7
      %v641 = vsub.s32 0, %v640
      %v642 = vrot.slane %v637, %v641
      %v644 = vmul.f32 %v599, %v642
      %v645 = vmul.f32 %v604, %v642
      %v646 = vmul.f32 %v609, %v642
      %v647 = vmul.f32 %v614, %v642
      %v648 = vmul.f32 %v619, %v642
      %v649 = vmul.f32 %v624, %v642
      %v650 = vmul.f32 %v629, %v642
      %v651 = vmul.f32 %v634, %v642
      %v652 = vld [vmem:[%s4] sm:$0x1]
      %v654 = vlaneseq
      %v655 = vshrl.u32 %v654, 7
      %v656 = vsub.s32 0, %v655
      %v657 = vrot.slane %v652, %v656
      %v659 = vadd.f32 %v644, %v657
      %v660 = vadd.f32 %v645, %v657
      %v661 = vadd.f32 %v646, %v657
      %v662 = vadd.f32 %v647, %v657
      %v663 = vadd.f32 %v648, %v657
      %v664 = vadd.f32 %v649, %v657
      %v665 = vadd.f32 %v650, %v657
      %v666 = vadd.f32 %v651, %v657
      %v667 = vmax.f32 %v659, 0.0
      %v668 = vmax.f32 %v660, 0.0
      %v669 = vmax.f32 %v661, 0.0
      %v670 = vmax.f32 %v662, 0.0
      %v671 = vmax.f32 %v663, 0.0
      %v672 = vmax.f32 %v664, 0.0
      %v673 = vmax.f32 %v665, 0.0
      %v674 = vmax.f32 %v666, 0.0
      %vm675 = vcmask 31744
      %676 = vst.msk [vmem:[%s338] sm:$0xff] %vm675, %v667
      %677 = vst.msk [vmem:[%s338 + $0x8] sm:$0xff] %vm675, %v668
      %678 = vst.msk [vmem:[%s338 + $0x10] sm:$0xff] %vm675, %v669
      %679 = vst.msk [vmem:[%s338 + $0x18] sm:$0xff] %vm675, %v670
      %680 = vst.msk [vmem:[%s338 + $0x20] sm:$0xff] %vm675, %v671
      %681 = vst.msk [vmem:[%s338 + $0x28] sm:$0xff] %vm675, %v672
      %682 = vst.msk [vmem:[%s338 + $0x30] sm:$0xff] %vm675, %v673
      %683 = vst.msk [vmem:[%s338 + $0x38] sm:$0xff] %vm675, %v674
      %s684 = smul.u32 8, %s21
      %p685 = scmp.lt.s32.totalorder %s20, 1
      %s686 = scalar_select %p685, %s20, 1
      %p687 = scmp.lt.s32.totalorder %s684, 7
      %s688 = scalar_select %p687, %s684, 7
      %s689 = smul.addr %s686, 8
      %s690 = sadd.s32 %s688, %s689
      %s691 = smul.addr %s690, 8
      %s692 = scalar_lea.vmem %s5, %s691
      // Predicated region
      $region41: #{stem_block_forward.5} parent=39 // pred_check
        %p693 = pneg %p171
      $region42: #{stem_block_forward.5} parent=39 // pred_check_branch
        %695 = sbr.rel (%p693) target = $region44
      $region43: #{stem_block_forward.5} parent=39 // pred_region
        %s696 = smul.u32 8, %s21
      $region44: #{stem_block_forward.5} parent=39 // pred_fallthru
        _
    $region40: #{stem_block_forward.5} parent=5 // pred_fallthru
      _
    %p697 = scmp.le.s32.totalorder 2, %s11
    // Predicated region
    $region45: #{stem_block_forward.5} parent=5 // pred_check
      %p698 = pneg %p697
    $region46: #{stem_block_forward.5} parent=5 // pred_check_branch
      %700 = sbr.rel (%p698) target = $region48
    $region47: #{stem_block_forward.5} parent=5 // pred_region
      %s701 = ssub.s32 %s11, 2
      // Predicated region
      $region49: #{stem_block_forward.5} parent=47 // pred_check
        %p702 = pneg %p177
      $region50: #{stem_block_forward.5} parent=47 // pred_check_branch
        %704 = sbr.rel (%p702) target = $region52
      $region51: #{stem_block_forward.5} parent=47 // pred_region
        %s705 = smul.u32 8, %s23
        %p706 = scmp.lt.s32.totalorder %s22, 1
        %s707 = scalar_select %p706, %s22, 1
        %p708 = scmp.lt.s32.totalorder %s705, 7
        %s709 = scalar_select %p708, %s705, 7
        %s710 = smul.addr %s707, 8
        %s711 = sadd.s32 %s709, %s710
        %s712 = smul.addr %s711, 8
        %s713 = scalar_lea.vmem %s5, %s712
      $region52: #{stem_block_forward.5} parent=47 // pred_fallthru
        _
    $region48: #{stem_block_forward.5} parent=5 // pred_fallthru
      _
  $region6: #{stem_block_forward.5} parent=0 // loop_footer
    %s15 = sadd.s32 1, %s11
  $region7: #{stem_block_forward.5} parent=0 // loop_footer_branch
    %10 = sbr.rel target = $region3
  $region8: #{stem_block_forward.5} parent=0 // loop_exit
    _

// kernel: stem_block_forward.4
$region0: #{stem_block_forward.4}
  #allocation0 [shape = 'u32[]', space=smem, size = 0x4, offset = 0x4, fixed_abs, tag = 'smem constant byte address 0x4 - core index']
  #allocation1 [shape = 'u32[144,128]{1,0:T(1,128)}', space=vmem, size = 0x12000, scoped, tag = 'internal scratch']
  %s0 = inlined_call_operand.vmem [shape: f32[2,9,2,9,8], index: 0, kind: input, shape index: {}, may-alias: {0,1}]
  %s1 = inlined_call_operand.vmem [shape: f32[2,9,2,9,8], index: 1, kind: input, shape index: {}, may-alias: {0,1}]
  %s2 = inlined_call_operand.vmem [shape: f32[48,8], index: 2, kind: input, shape index: {}]
  %s3 = inlined_call_operand.vmem [shape: f32[1,8], index: 3, kind: input, shape index: {}]
  %s4 = inlined_call_operand.vmem [shape: f32[1,8], index: 4, kind: input, shape index: {}]
  %s5 = inlined_call_operand.vmem [shape: f32[2,8,8,8], index: 5, kind: output, shape index: {}]
  %s6 = sld [smem:[#allocation0]]
  $region53: #{stem_block_forward.4} parent=0
    _
  %s8 = ssub.s32 1, %s6
  %s9 = scalar_select 0, %s8, %s6
  loop: start=0, step=1, limit=4
  $region2: #{stem_block_forward.4} parent=0 // loop_pre_header
    _
  $region3: #{stem_block_forward.4} parent=0 // loop_header
    %s11 = sphi 0, %s15
    %p12 = scmp.ge.s32.totalorder %s11, 4
    %s18 = sphi 0, %s30
    %s19 = sphi 0, %s26
    %s20 = sphi 0, %s18
    %s21 = sphi 0, %s19
    %s22 = sphi 0, %s20
    %s23 = sphi 0, %s21
    %s35 = sphi 0, %s37
    %s38 = sphi 0, %s35
    %s39 = sphi 0, %s38
    %s55 = sphi 0, %s39
    %s67 = sphi 0, %s69
    %s70 = sphi 0, %s67
    %s71 = sphi 0, %s70
    %s87 = sphi 0, %s71
    %s91 = sphi 0, %s91
    %s93 = sphi 0, %s91
    %s94 = sphi 0, %s93
    %s108 = sphi 0, %s94
    %s112 = sphi 0, %s112
    %s114 = sphi 0, %s112
    %s115 = sphi 0, %s114
    %s129 = sphi 0, %s115
    %s133 = sphi 0, %s133
    %s135 = sphi 0, %s133
    %s136 = sphi 0, %s135
    %s150 = sphi 0, %s136
    %s158 = sphi 0, %s160
    %s161 = sphi 0, %s158
    %s162 = sphi 0, %s161
    %s178 = sphi 0, %s162
  $region4: #{stem_block_forward.4} parent=0 // loop_header_branch
    %14 = sbr.rel (%p12) target = $region8
  $region5: #{stem_block_forward.4} parent=0 // loop_body
    %s16 = ssub.s32 %s11, 1
    %s17 = ssub.s32 %s11, 2
    %s24 = sadd.s32 1, %s19
    %p25 = scmp.ge.s32.totalorder %s24, 1
    %s26 = scalar_select %p25, 0, %s24
    %s27 = sadd.s32 1, %s18
    %s28 = scalar_select %p25, %s27, %s18
    %p29 = scmp.ge.s32.totalorder %s28, 2
    %s30 = scalar_select %p29, 0, %s28
    %s31 = ssub.s32 %s18, %s30
    %s32 = ssub.s32 %s19, %s26
    %s33 = sor.u32 %s31, %s32
    %p34 = scmp.eq.s32.totalorder %s33, 0
    %s36 = sadd.s32 %s35, 1
    %s37 = scalar_select %p34, %s35, %s36
    %p40 = pneg %p34
    %p41 = scmp.eq.s32.totalorder %s11, 1
    %p42 = por %p40, %p41
    %p43 = scmp.ne.s32.totalorder %s35, %s38
    %p44 = scmp.eq.s32.totalorder %s11, 0
    %p45 = por %p43, %p44
    %p46 = scmp.ne.s32.totalorder %s35, %s38
    %p47 = scmp.eq.s32.totalorder %s16, 1
    %p48 = por %p46, %p47
    %p49 = scmp.ne.s32.totalorder %s38, %s39
    %p50 = scmp.eq.s32.totalorder %s16, 0
    %p51 = por %p49, %p50
    %p52 = scmp.ne.s32.totalorder %s38, %s39
    %p53 = scmp.eq.s32.totalorder %s17, 1
    %p54 = por %p52, %p53
    %p56 = scmp.ne.s32.totalorder %s39, %s55
    %p57 = scmp.eq.s32.totalorder %s17, 0
    %p58 = por %p56, %p57
    %s59 = sadd.s32 %s19, 1
    %s60 = smul.u32 %s59, 8
    %s61 = sadd.s32 %s26, 1
    %s62 = smul.u32 %s61, 8
    %s63 = ssub.s32 %s18, %s30
    %s64 = ssub.s32 %s60, %s62
    %s65 = sor.u32 %s63, %s64
    %p66 = scmp.eq.s32.totalorder %s65, 0
    %s68 = sadd.s32 %s67, 1
    %s69 = scalar_select %p66, %s67, %s68
    %p72 = pneg %p66
    %p73 = scmp.eq.s32.totalorder %s11, 1
    %p74 = por %p72, %p73
    %p75 = scmp.ne.s32.totalorder %s67, %s70
    %p76 = scmp.eq.s32.totalorder %s11, 0
    %p77 = por %p75, %p76
    %p78 = scmp.ne.s32.totalorder %s67, %s70
    %p79 = scmp.eq.s32.totalorder %s16, 1
    %p80 = por %p78, %p79
    %p81 = scmp.ne.s32.totalorder %s70, %s71
    %p82 = scmp.eq.s32.totalorder %s16, 0
    %p83 = por %p81, %p82
    %p84 = scmp.ne.s32.totalorder %s70, %s71
    %p85 = scmp.eq.s32.totalorder %s17, 1
    %p86 = por %p84, %p85
    %p88 = scmp.ne.s32.totalorder %s71, %s87
    %p89 = scmp.eq.s32.totalorder %s17, 0
    %p90 = por %p88, %p89
    %s92 = sadd.s32 %s91, 1
    %p95 = scmp.eq.s32.totalorder %s11, 1
    %p96 = scmp.ne.s32.totalorder %s91, %s93
    %p97 = scmp.eq.s32.totalorder %s11, 0
    %p98 = por %p96, %p97
    %p99 = scmp.ne.s32.totalorder %s91, %s93
    %p100 = scmp.eq.s32.totalorder %s16, 1
    %p101 = por %p99, %p100
    %p102 = scmp.ne.s32.totalorder %s93, %s94
    %p103 = scmp.eq.s32.totalorder %s16, 0
    %p104 = por %p102, %p103
    %p105 = scmp.ne.s32.totalorder %s93, %s94
    %p106 = scmp.eq.s32.totalorder %s17, 1
    %p107 = por %p105, %p106
    %p109 = scmp.ne.s32.totalorder %s94, %s108
    %p110 = scmp.eq.s32.totalorder %s17, 0
    %p111 = por %p109, %p110
    %s113 = sadd.s32 %s112, 1
    %p116 = scmp.eq.s32.totalorder %s11, 1
    %p117 = scmp.ne.s32.totalorder %s112, %s114
    %p118 = scmp.eq.s32.totalorder %s11, 0
    %p119 = por %p117, %p118
    %p120 = scmp.ne.s32.totalorder %s112, %s114
    %p121 = scmp.eq.s32.totalorder %s16, 1
    %p122 = por %p120, %p121
    %p123 = scmp.ne.s32.totalorder %s114, %s115
    %p124 = scmp.eq.s32.totalorder %s16, 0
    %p125 = por %p123, %p124
    %p126 = scmp.ne.s32.totalorder %s114, %s115
    %p127 = scmp.eq.s32.totalorder %s17, 1
    %p128 = por %p126, %p127
    %p130 = scmp.ne.s32.totalorder %s115, %s129
    %p131 = scmp.eq.s32.totalorder %s17, 0
    %p132 = por %p130, %p131
    %s134 = sadd.s32 %s133, 1
    %p137 = scmp.eq.s32.totalorder %s11, 1
    %p138 = scmp.ne.s32.totalorder %s133, %s135
    %p139 = scmp.eq.s32.totalorder %s11, 0
    %p140 = por %p138, %p139
    %p141 = scmp.ne.s32.totalorder %s133, %s135
    %p142 = scmp.eq.s32.totalorder %s16, 1
    %p143 = por %p141, %p142
    %p144 = scmp.ne.s32.totalorder %s135, %s136
    %p145 = scmp.eq.s32.totalorder %s16, 0
    %p146 = por %p144, %p145
    %p147 = scmp.ne.s32.totalorder %s135, %s136
    %p148 = scmp.eq.s32.totalorder %s17, 1
    %p149 = por %p147, %p148
    %p151 = scmp.ne.s32.totalorder %s136, %s150
    %p152 = scmp.eq.s32.totalorder %s17, 0
    %p153 = por %p151, %p152
    %s154 = ssub.s32 %s18, %s30
    %s155 = ssub.s32 %s19, %s26
    %s156 = sor.u32 %s154, %s155
    %p157 = scmp.eq.s32.totalorder %s156, 0
    %s159 = sadd.s32 %s158, 1
    %s160 = scalar_select %p157, %s158, %s159
    %p163 = pneg %p157
    %p164 = scmp.eq.s32.totalorder %s11, 1
    %p165 = por %p163, %p164
    %p166 = scmp.ne.s32.totalorder %s158, %s161
    %p167 = scmp.eq.s32.totalorder %s11, 0
    %p168 = por %p166, %p167
    %p169 = scmp.ne.s32.totalorder %s158, %s161
    %p170 = scmp.eq.s32.totalorder %s16, 1
    %p171 = por %p169, %p170
    %p172 = scmp.ne.s32.totalorder %s161, %s162
    %p173 = scmp.eq.s32.totalorder %s16, 0
    %p174 = por %p172, %p173
    %p175 = scmp.ne.s32.totalorder %s161, %s162
    %p176 = scmp.eq.s32.totalorder %s17, 1
    %p177 = por %p175, %p176
    %p179 = scmp.ne.s32.totalorder %s162, %s178
    %p180 = scmp.eq.s32.totalorder %s17, 0
    %p181 = por %p179, %p180
    %p182 = scmp.le.s32.totalorder 1, %s11
    %p183 = scmp.lt.s32.totalorder %s11, 3
    %p184 = pnand %p182, %p183
    %p185 = pneg %p184
    // Predicated region
    $region9: #{stem_block_forward.4} parent=5 // pred_check
      _
    $region10: #{stem_block_forward.4} parent=5 // pred_check_branch
      %187 = sbr.rel (%p184) target = $region12
    $region11: #{stem_block_forward.4} parent=5 // pred_region
      %s188 = ssub.s32 %s11, 1
      // Predicated region
      $region13: #{stem_block_forward.4} parent=11 // pred_check
        %p189 = pneg %p104
      $region14: #{stem_block_forward.4} parent=11 // pred_check_branch
        %191 = sbr.rel (%p189) target = $region16
      $region15: #{stem_block_forward.4} parent=11 // pred_region
        _
      $region16: #{stem_block_forward.4} parent=11 // pred_fallthru
        _
      // Predicated region
      $region17: #{stem_block_forward.4} parent=11 // pred_check
        %p192 = pneg %p125
      $region18: #{stem_block_forward.4} parent=11 // pred_check_branch
        %194 = sbr.rel (%p192) target = $region20
      $region19: #{stem_block_forward.4} parent=11 // pred_region
        _
      $region20: #{stem_block_forward.4} parent=11 // pred_fallthru
        _
      // Predicated region
      $region21: #{stem_block_forward.4} parent=11 // pred_check
        %p195 = pneg %p146
      $region22: #{stem_block_forward.4} parent=11 // pred_check_branch
        %197 = sbr.rel (%p195) target = $region24
      $region23: #{stem_block_forward.4} parent=11 // pred_region
        _
      $region24: #{stem_block_forward.4} parent=11 // pred_fallthru
        _
    $region12: #{stem_block_forward.4} parent=5 // pred_fallthru
      _
    %p198 = scmp.lt.s32.totalorder %s11, 2
    // Predicated region
    $region25: #{stem_block_forward.4} parent=5 // pred_check
      %p199 = pneg %p198
    $region26: #{stem_block_forward.4} parent=5 // pred_check_branch
      %201 = sbr.rel (%p199) target = $region28
    $region27: #{stem_block_forward.4} parent=5 // pred_region
      // Predicated region
      $region29: #{stem_block_forward.4} parent=27 // pred_check
        %p202 = pneg %p45
      $region30: #{stem_block_forward.4} parent=27 // pred_check_branch
        %204 = sbr.rel (%p202) target = $region32
      $region31: #{stem_block_forward.4} parent=27 // pred_region
        %s205 = smul.u32 8, %s19
        %s206 = ssub.s32 9, %s205
        %p207 = scmp.lt.s32.totalorder %s206, 8
        %s208 = scalar_select %p207, %s206, 8
        %s209 = smul.u32 128, %s208
        %s210 = smul.u32 %s209, 2
        %s211 = smul.u32 %s210, 2
        %p212 = scmp.lt.s32.totalorder %s18, 1
        %s213 = scalar_select %p212, %s18, 1
        %p214 = scmp.lt.s32.totalorder %s205, 8
        %s215 = scalar_select %p214, %s205, 8
        %s216 = smul.addr %s215, 4
        %s217 = smul.addr %s213, 36
        %s218 = sadd.s32 %s216, %s217
        %s219 = smul.addr %s218, 8
        %s220 = scalar_lea.vmem %s0, %s219
        %s221 = smul.u32 8, %s19
        %s222 = ssub.s32 9, %s221
        %p223 = scmp.lt.s32.totalorder %s222, 8
        %s224 = scalar_select %p223, %s222, 8
        %s225 = smul.u32 128, %s224
        %s226 = smul.u32 %s225, 2
        %s227 = smul.u32 %s226, 2
      $region32: #{stem_block_forward.4} parent=27 // pred_fallthru
        _
      // Predicated region
      $region33: #{stem_block_forward.4} parent=27 // pred_check
        %p228 = pneg %p77
      $region34: #{stem_block_forward.4} parent=27 // pred_check_branch
        %230 = sbr.rel (%p228) target = $region36
      $region35: #{stem_block_forward.4} parent=27 // pred_region
        %s231 = sadd.s32 %s19, 1
        %s232 = smul.u32 %s231, 8
        %p233 = scmp.lt.s32.totalorder %s18, 1
        %s234 = scalar_select %p233, %s18, 1
        %p235 = scmp.lt.s32.totalorder %s232, 8
        %s236 = scalar_select %p235, %s232, 8
        %s237 = smul.addr %s236, 4
        %s238 = smul.addr %s234, 36
        %s239 = sadd.s32 %s237, %s238
        %s240 = smul.addr %s239, 8
        %s241 = scalar_lea.vmem %s1, %s240
        %s242 = sadd.s32 %s19, 1
        %s243 = smul.u32 %s242, 8
      $region36: #{stem_block_forward.4} parent=27 // pred_fallthru
        _
    $region28: #{stem_block_forward.4} parent=5 // pred_fallthru
      _
    %p244 = scmp.le.s32.totalorder 1, %s11
    %p245 = scmp.lt.s32.totalorder %s11, 3
    %p246 = pnand %p244, %p245
    %p247 = pneg %p246
    // Predicated region
    $region37: #{stem_block_forward.4} parent=5 // pred_check
      _
    $region38: #{stem_block_forward.4} parent=5 // pred_check_branch
      %249 = sbr.rel (%p246) target = $region40
    $region39: #{stem_block_forward.4} parent=5 // pred_region
      %s250 = ssub.s32 %s11, 1
      %s251 = smul.u32 8, %s21
      %s252 = ssub.s32 9, %s251
      %p253 = scmp.lt.s32.totalorder %s252, 8
      %s254 = scalar_select %p253, %s252, 8
      %s255 = smul.u32 128, %s254
      %s256 = smul.u32 %s255, 2
      %s257 = smul.u32 %s256, 2
      %p258 = scmp.lt.s32.totalorder %s20, 1
      %s259 = scalar_select %p258, %s20, 1
      %p260 = scmp.lt.s32.totalorder %s251, 8
      %s261 = scalar_select %p260, %s251, 8
      %s262 = smul.addr %s261, 4
      %s263 = smul.addr %s259, 36
      %s264 = sadd.s32 %s262, %s263
      %s265 = smul.addr %s264, 8
      %s266 = scalar_lea.vmem %s0, %s265
      %p267 = pneg %p51
      %p268 = pneg %p48
      %s269 = sadd.s32 %s21, 1
      %s270 = smul.u32 %s269, 8
      %p271 = scmp.lt.s32.totalorder %s20, 1
      %s272 = scalar_select %p271, %s20, 1
      %p273 = scmp.lt.s32.totalorder %s270, 8
      %s274 = scalar_select %p273, %s270, 8
      %s275 = smul.addr %s274, 4
      %s276 = smul.addr %s272, 36
      %s277 = sadd.s32 %s275, %s276
      %s278 = smul.addr %s277, 8
      %s279 = scalar_lea.vmem %s1, %s278
      %p280 = pneg %p83
      %p281 = pneg %p80
      %p282 = pneg %p104
      %p283 = pneg %p101
      %p284 = pneg %p125
      %p285 = pneg %p122
      %p286 = pneg %p146
      %p287 = pneg %p143
      %p288 = pneg %p174
      %p289 = pneg %p171
      %s290 = smul.u32 8, %s21
      %p291 = scmp.lt.s32.totalorder %s20, 1
      %s292 = scalar_select %p291, %s20, 1
      %p293 = scmp.lt.s32.totalorder %s290, 7
      %s294 = scalar_select %p293, %s290, 7
      %s295 = smul.addr %s292, 8
      %s296 = sadd.s32 %s294, %s295
      %s297 = smul.addr %s296, 8
      %s298 = scalar_lea.vmem %s5, %s297
      %s299 = smul.u32 8, %s21
      %s300 = ssub.s32 9, %s299
      %p301 = scmp.lt.s32.totalorder %s300, 8
      %s302 = scalar_select %p301, %s300, 8
      %s303 = smul.u32 128, %s302
      %s304 = smul.u32 %s303, 2
      %s305 = smul.u32 %s304, 2
      %p306 = scmp.lt.s32.totalorder %s20, 1
      %s307 = scalar_select %p306, %s20, 1
      %p308 = scmp.lt.s32.totalorder %s299, 8
      %s309 = scalar_select %p308, %s299, 8
      %s310 = smul.addr %s309, 4
      %s311 = smul.addr %s307, 36
      %s312 = sadd.s32 %s310, %s311
      %s313 = smul.addr %s312, 8
      %s314 = scalar_lea.vmem %s0, %s313
      %s315 = smul.u32 8, %s21
      %s316 = ssub.s32 9, %s315
      %p317 = scmp.lt.s32.totalorder %s316, 8
      %s318 = scalar_select %p317, %s316, 8
      %s319 = smul.u32 128, %s318
      %s320 = smul.u32 %s319, 2
      %s321 = smul.u32 %s320, 2
      %s322 = sadd.s32 %s21, 1
      %s323 = smul.u32 %s322, 8
      %p324 = scmp.lt.s32.totalorder %s20, 1
      %s325 = scalar_select %p324, %s20, 1
      %p326 = scmp.lt.s32.totalorder %s323, 8
      %s327 = scalar_select %p326, %s323, 8
      %s328 = smul.addr %s327, 4
      %s329 = smul.addr %s325, 36
      %s330 = sadd.s32 %s328, %s329
      %s331 = smul.addr %s330, 8
      %s332 = scalar_lea.vmem %s1, %s331
      %s333 = sadd.s32 %s21, 1
      %s334 = smul.u32 %s333, 8
      %s335 = smul.u32 8, %s21
      %p336 = scmp.lt.s32.totalorder %s20, 1
      %s337 = scalar_select %p336, %s20, 1
      %p338 = scmp.lt.s32.totalorder %s335, 7
      %s339 = scalar_select %p338, %s335, 7
      %s340 = smul.addr %s337, 8
      %s341 = sadd.s32 %s339, %s340
      %s342 = smul.addr %s341, 8
      %s343 = scalar_lea.vmem %s5, %s342
      %s344 = smul.u32 8, %s21
      %v345 = vld [vmem:[%s314] sm:$0xff]
      %v346 = vld [vmem:[%s314 + $0x8] sm:$0x1]
      %v347 = vld [vmem:[%s314 + $0x10] sm:$0xff]
      %v348 = vld [vmem:[%s314 + $0x18] sm:$0x1]
      %v349 = vld [vmem:[%s314 + $0x20] sm:$0xff]
      %v350 = vld [vmem:[%s314 + $0x28] sm:$0x1]
      %v351 = vld [vmem:[%s314 + $0x30] sm:$0xff]
      %v352 = vld [vmem:[%s314 + $0x38] sm:$0x1]
      %v353 = vld [vmem:[%s314 + $0x40] sm:$0xff]
      %v354 = vld [vmem:[%s314 + $0x48] sm:$0x1]
      %v355 = vld [vmem:[%s314 + $0x50] sm:$0xff]
      %v356 = vld [vmem:[%s314 + $0x58] sm:$0x1]
      %v357 = vld [vmem:[%s314 + $0x60] sm:$0xff]
      %v358 = vld [vmem:[%s314 + $0x68] sm:$0x1]
      %v359 = vld [vmem:[%s314 + $0x70] sm:$0xff]
      %v360 = vld [vmem:[%s314 + $0x78] sm:$0x1]
      %v361 = vld [vmem:[%s314 + $0x80] sm:$0xff]
      %v362 = vld [vmem:[%s314 + $0x88] sm:$0x1]
      %v363 = vld [vmem:[%s314 + $0x90] sm:$0xff]
      %v364 = vld [vmem:[%s314 + $0x98] sm:$0x1]
      %v365 = vld [vmem:[%s314 + $0xa0] sm:$0xff]
      %v366 = vld [vmem:[%s314 + $0xa8] sm:$0x1]
      %v367 = vld [vmem:[%s314 + $0xb0] sm:$0xff]
      %v368 = vld [vmem:[%s314 + $0xb8] sm:$0x1]
      %v369 = vld [vmem:[%s314 + $0xc0] sm:$0xff]
      %v370 = vld [vmem:[%s314 + $0xc8] sm:$0x1]
      %v371 = vld [vmem:[%s314 + $0xd0] sm:$0xff]
      %v372 = vld [vmem:[%s314 + $0xd8] sm:$0x1]
      %v373 = vld [vmem:[%s314 + $0xe0] sm:$0xff]
      %v374 = vld [vmem:[%s314 + $0xe8] sm:$0x1]
      %v375 = vld [vmem:[%s314 + $0xf0] sm:$0xff]
      %v376 = vld [vmem:[%s314 + $0xf8] sm:$0x1]
      %v377 = vld [vmem:[%s332] sm:$0xff]
      %v378 = vld [vmem:[%s332 + $0x8] sm:$0x1]
      %vm395 = vcmask 1046528
      %v396 = vrot.slane %v345, 1
      %v397 = vrot.slane %v346, 1
      %v398 = vsel %vm395, %v396, %v397
      %v399 = vrot.slane %v349, 1
      %v400 = vrot.slane %v350, 1
      %v401 = vsel %vm395, %v399, %v400
      %v402 = vrot.slane %v353, 1
      %v403 = vrot.slane %v354, 1
      %v404 = vsel %vm395, %v402, %v403
      %v405 = vrot.slane %v357, 1
      %v406 = vrot.slane %v358, 1
      %v407 = vsel %vm395, %v405, %v406
      %v408 = vrot.slane %v361, 1
      %v409 = vrot.slane %v362, 1
      %v410 = vsel %vm395, %v408, %v409
      %v411 = vrot.slane %v365, 1
      %v412 = vrot.slane %v366, 1
      %v413 = vsel %vm395, %v411, %v412
      %v414 = vrot.slane %v369, 1
      %v415 = vrot.slane %v370, 1
      %v416 = vsel %vm395, %v414, %v415
      %v417 = vrot.slane %v373, 1
      %v418 = vrot.slane %v374, 1
      %v419 = vsel %vm395, %v417, %v418
      %420 = vrot.lane.b32.xlu0 %v398, 8
      %v421 = vpop.permute.xlu0 %420
      %422 = vrot.lane.b32.xlu0 %v401, 8
      %v423 = vpop.permute.xlu0 %422
      %424 = vrot.lane.b32.xlu0 %v404, 8
      %v425 = vpop.permute.xlu0 %424
      %426 = vrot.lane.b32.xlu0 %v407, 8
      %v427 = vpop.permute.xlu0 %426
      %428 = vrot.lane.b32.xlu0 %v410, 8
      %v429 = vpop.permute.xlu0 %428
      %430 = vrot.lane.b32.xlu0 %v413, 8
      %v431 = vpop.permute.xlu0 %430
      %432 = vrot.lane.b32.xlu0 %v416, 8
      %v433 = vpop.permute.xlu0 %432
      %434 = vrot.lane.b32.xlu0 %v419, 8
      %v435 = vpop.permute.xlu0 %434
      %452 = vrot.lane.b32.xlu0 %v347, 16
      %v453 = vpop.permute.xlu0 %452
      %454 = vrot.lane.b32.xlu0 %v351, 16
      %v455 = vpop.permute.xlu0 %454
      %456 = vrot.lane.b32.xlu0 %v355, 16
      %v457 = vpop.permute.xlu0 %456
      %458 = vrot.lane.b32.xlu0 %v359, 16
      %v459 = vpop.permute.xlu0 %458
      %460 = vrot.lane.b32.xlu0 %v363, 16
      %v461 = vpop.permute.xlu0 %460
      %462 = vrot.lane.b32.xlu0 %v367, 16
      %v463 = vpop.permute.xlu0 %462
      %464 = vrot.lane.b32.xlu0 %v371, 16
      %v465 = vpop.permute.xlu0 %464
      %466 = vrot.lane.b32.xlu0 %v375, 16
      %v467 = vpop.permute.xlu0 %466
      %v484 = vrot.slane %v347, 1
      %v485 = vrot.slane %v348, 1
      %v486 = vsel %vm395, %v484, %v485
      %v487 = vrot.slane %v351, 1
      %v488 = vrot.slane %v352, 1
      %v489 = vsel %vm395, %v487, %v488
      %v490 = vrot.slane %v355, 1
      %v491 = vrot.slane %v356, 1
      %v492 = vsel %vm395, %v490, %v491
      %v493 = vrot.slane %v359, 1
      %v494 = vrot.slane %v360, 1
      %v495 = vsel %vm395, %v493, %v494
      %v496 = vrot.slane %v363, 1
      %v497 = vrot.slane %v364, 1
      %v498 = vsel %vm395, %v496, %v497
      %v499 = vrot.slane %v367, 1
      %v500 = vrot.slane %v368, 1
      %v501 = vsel %vm395, %v499, %v500
      %v502 = vrot.slane %v371, 1
      %v503 = vrot.slane %v372, 1
      %v504 = vsel %vm395, %v502, %v503
      %v505 = vrot.slane %v375, 1
      %v506 = vrot.slane %v376, 1
      %v507 = vsel %vm395, %v505, %v506
      %508 = vrot.lane.b32.xlu0 %v486, 24
      %v509 = vpop.permute.xlu0 %508
      %510 = vrot.lane.b32.xlu0 %v489, 24
      %v511 = vpop.permute.xlu0 %510
      %512 = vrot.lane.b32.xlu0 %v492, 24
      %v513 = vpop.permute.xlu0 %512
      %514 = vrot.lane.b32.xlu0 %v495, 24
      %v515 = vpop.permute.xlu0 %514
      %516 = vrot.lane.b32.xlu0 %v498, 24
      %v517 = vpop.permute.xlu0 %516
      %518 = vrot.lane.b32.xlu0 %v501, 24
      %v519 = vpop.permute.xlu0 %518
      %520 = vrot.lane.b32.xlu0 %v504, 24
      %v521 = vpop.permute.xlu0 %520
      %522 = vrot.lane.b32.xlu0 %v507, 24
      %v523 = vpop.permute.xlu0 %522
      %533 = vrot.lane.b32.xlu0 %v349, 32
      %v534 = vpop.permute.xlu0 %533
      %535 = vrot.lane.b32.xlu0 %v353, 32
      %v536 = vpop.permute.xlu0 %535
      %537 = vrot.lane.b32.xlu0 %v357, 32
      %v538 = vpop.permute.xlu0 %537
      %539 = vrot.lane.b32.xlu0 %v361, 32
      %v540 = vpop.permute.xlu0 %539
      %541 = vrot.lane.b32.xlu0 %v365, 32
      %v542 = vpop.permute.xlu0 %541
      %543 = vrot.lane.b32.xlu0 %v369, 32
      %v544 = vpop.permute.xlu0 %543
      %545 = vrot.lane.b32.xlu0 %v373, 32
      %v546 = vpop.permute.xlu0 %545
      %547 = vrot.lane.b32.xlu0 %v377, 32
      %v548 = vpop.permute.xlu0 %547
      %v558 = vrot.slane %v377, 1
      %v559 = vrot.slane %v378, 1
      %v560 = vsel %vm395, %v558, %v559
      %561 = vrot.lane.b32.xlu0 %v401, 40
      %v562 = vpop.permute.xlu0 %561
      %563 = vrot.lane.b32.xlu0 %v404, 40
      %v564 = vpop.permute.xlu0 %563
      %565 = vrot.lane.b32.xlu0 %v407, 40
      %v566 = vpop.permute.xlu0 %565
      %567 = vrot.lane.b32.xlu0 %v410, 40
      %v568 = vpop.permute.xlu0 %567
      %569 = vrot.lane.b32.xlu0 %v413, 40
      %v570 = vpop.permute.xlu0 %569
      %571 = vrot.lane.b32.xlu0 %v416, 40
      %v572 = vpop.permute.xlu0 %571
      %573 = vrot.lane.b32.xlu0 %v419, 40
      %v574 = vpop.permute.xlu0 %573
      %575 = vrot.lane.b32.xlu0 %v560, 40
      %v576 = vpop.permute.xlu0 %575
      %vm585 = vcmask 64512
      %v586 = vsel %vm585, %v345, %v421
      %v587 = vsel %vm585, %v349, %v423
      %v588 = vsel %vm585, %v353, %v425
      %v589 = vsel %vm585, %v357, %v427
      %v590 = vsel %vm585, %v361, %v429
      %v591 = vsel %vm585, %v365, %v431
      %v592 = vsel %vm585, %v369, %v433
      %v593 = vsel %vm585, %v373, %v435
      %vm594 = vcmask 130048
      %v595 = vsel %vm594, %v586, %v453
      %v596 = vsel %vm594, %v587, %v455
      %v597 = vsel %vm594, %v588, %v457
      %v598 = vsel %vm594, %v589, %v459
      %v599 = vsel %vm594, %v590, %v461
      %v600 = vsel %vm594, %v591, %v463
      %v601 = vsel %vm594, %v592, %v465
      %v602 = vsel %vm594, %v593, %v467
      %vm603 = vcmask 195584
      %v604 = vsel %vm603, %v595, %v509
      %v605 = vsel %vm603, %v596, %v511
      %v606 = vsel %vm603, %v597, %v513
      %v607 = vsel %vm603, %v598, %v515
      %v608 = vsel %vm603, %v599, %v517
      %v609 = vsel %vm603, %v600, %v519
      %v610 = vsel %vm603, %v601, %v521
      %v611 = vsel %vm603, %v602, %v523
      %vm612 = vcmask 261120
      %v613 = vsel %vm612, %v604, %v534
      %v614 = vsel %vm612, %v605, %v536
      %v615 = vsel %vm612, %v606, %v538
      %v616 = vsel %vm612, %v607, %v540
      %v617 = vsel %vm612, %v608, %v542
      %v618 = vsel %vm612, %v609, %v544
      %v619 = vsel %vm612, %v610, %v546
      %v620 = vsel %vm612, %v611, %v548
      %vm621 = vcmask 326656
      %v622 = vsel %vm621, %v613, %v562
      %v623 = vsel %vm621, %v614, %v564
      %v624 = vsel %vm621, %v615, %v566
      %v625 = vsel %vm621, %v616, %v568
      %v626 = vsel %vm621, %v617, %v570
      %v627 = vsel %vm621, %v618, %v572
      %v628 = vsel %vm621, %v619, %v574
      %v629 = vsel %vm621, %v620, %v576
      %v630 = vld [vmem:[%s2] sm:$0xff]
      %v631 = vld [vmem:[%s2 + $0x8] sm:$0xff]
      %v632 = vld [vmem:[%s2 + $0x10] sm:$0xff]
      %v633 = vld [vmem:[%s2 + $0x18] sm:$0xff]
      %v634 = vld [vmem:[%s2 + $0x20] sm:$0xff]
      %v635 = vld [vmem:[%s2 + $0x28] sm:$0xff]
      %vm636 = vcmask 392192
      %v638 = vsel %vm636, %v622, 0
      %v641 = vsel %vm636, %v623, 0
      %v644 = vsel %vm636, %v624, 0
      %v647 = vsel %vm636, %v625, 0
      %v650 = vsel %vm636, %v626, 0
      %v653 = vsel %vm636, %v627, 0
      %v656 = vsel %vm636, %v628, 0
      %v659 = vsel %vm636, %v629, 0
      %661 = vmatprep.subr.mxu0 0.0
      %662 = vmatpush1.msra.mxu0 %v630
      %663 = vmatprep.subr.mxu0 0.0
      %664 = vmatpush1.msra.mxu0 %v631
      %665 = vmatprep.subr.mxu0 0.0
      %666 = vmatpush1.msra.mxu0 %v632
      %667 = vmatprep.subr.mxu0 0.0
      %668 = vmatpush1.msra.mxu0 %v633
      %669 = vmatprep.subr.mxu0 0.0
      %670 = vmatpush1.msra.mxu0 %v634
      %671 = vmatprep.subr.mxu0 0.0
      %672 = vmatpush1.msra.mxu0 %v635
      %673 = vmatprep.subr.mxu0 0.0
      %674 = vmatpush1.msra.mxu0 0.0
      %675 = vmatprep.subr.mxu0 0.0
      %676 = vmatpush1.msra.mxu0 0.0
      %677 = vmatprep.subr.mxu0 0.0
      %678 = vmatpush1.msra.mxu0 0.0
      %679 = vmatprep.subr.mxu0 0.0
      %680 = vmatpush1.msra.mxu0 0.0
      %681 = vmatprep.subr.mxu0 0.0
      %682 = vmatpush1.msra.mxu0 0.0
      %683 = vmatprep.subr.mxu0 0.0
      %684 = vmatpush1.msra.mxu0 0.0
      %685 = vmatprep.subr.mxu0 0.0
      %686 = vmatpush1.msra.mxu0 0.0
      %687 = vmatprep.subr.mxu0 0.0
      %688 = vmatpush1.msra.mxu0 0.0
      %689 = vmatprep.subr.mxu0 0.0
      %690 = vmatpush1.msra.mxu0 0.0
      %691 = vmatprep.subr.mxu0 0.0
      %692 = vmatpush1.msra.mxu0 0.0
      %693 = vmatprep.subr.mxu0 0.0
      %694 = vmatpush1.msra.mxu0 0.0
      %695 = vmatprep.subr.mxu0 0.0
      %696 = vmatpush1.msra.mxu0 0.0
      %697 = vmatprep.subr.mxu0 0.0
      %698 = vmatpush1.msra.mxu0 0.0
      %699 = vmatprep.subr.mxu0 0.0
      %700 = vmatpush1.msra.mxu0 0.0
      %701 = vmatprep.subr.mxu0 0.0
      %702 = vmatpush1.msra.mxu0 0.0
      %703 = vmatprep.subr.mxu0 0.0
      %704 = vmatpush1.msra.mxu0 0.0
      %705 = vmatprep.subr.mxu0 0.0
      %706 = vmatpush1.msra.mxu0 0.0
      %707 = vmatprep.subr.mxu0 0.0
      %708 = vmatpush1.msra.mxu0 0.0
      %709 = vmatprep.subr.mxu0 0.0
      %710 = vmatpush1.msra.mxu0 0.0
      %711 = vmatprep.subr.mxu0 0.0
      %712 = vmatpush1.msra.mxu0 0.0
      %713 = vmatprep.subr.mxu0 0.0
      %714 = vmatpush1.msra.mxu0 0.0
      %715 = vmatprep.subr.mxu0 0.0
      %716 = vmatpush1.msra.mxu0 0.0
      %717 = vmatprep.subr.mxu0 0.0
      %718 = vmatpush1.msra.mxu0 0.0
      %719 = vmatprep.subr.mxu0 0.0
      %720 = vmatpush1.msra.mxu0 0.0
      %721 = vmatprep.subr.mxu0 0.0
      %722 = vmatpush1.msra.mxu0 0.0
      %723 = vmatprep.subr.mxu0 0.0
      %724 = vmatpush1.msra.mxu0 0.0
      %725 = vmatprep.mubr.f32.mxu0 0.0
      %726 = vmatmul.mubr.f32.gmra.mrb[0].mxu0 %v638
      %v727 = vpop.f32.mrb[0].mxu0
      %v728 = vadd.f32 0.0, %v727
      %v729 = vpop.f32.mrb[0].mxu0
      %730 = vmatprep.mubr.f32.mxu0 0.0
      %731 = vmatmul.mubr.f32.gmra.mrb[0].mxu0 %v641
      %v732 = vpop.f32.mrb[0].mxu0
      %v733 = vadd.f32 0.0, %v732
      %v734 = vpop.f32.mrb[0].mxu0
      %735 = vmatprep.mubr.f32.mxu0 0.0
      %736 = vmatmul.mubr.f32.gmra.mrb[0].mxu0 %v644
      %v737 = vpop.f32.mrb[0].mxu0
      %v738 = vadd.f32 0.0, %v737
      %v739 = vpop.f32.mrb[0].mxu0
      %740 = vmatprep.mubr.f32.mxu0 0.0
      %741 = vmatmul.mubr.f32.gmra.mrb[0].mxu0 %v647
      %v742 = vpop.f32.mrb[0].mxu0
      %v743 = vadd.f32 0.0, %v742
      %v744 = vpop.f32.mrb[0].mxu0
      %745 = vmatprep.mubr.f32.mxu0 0.0
      %746 = vmatmul.mubr.f32.gmra.mrb[0].mxu0 %v650
      %v747 = vpop.f32.mrb[0].mxu0
      %v748 = vadd.f32 0.0, %v747
      %v749 = vpop.f32.mrb[0].mxu0
      %750 = vmatprep.mubr.f32.mxu0 0.0
      %751 = vmatmul.mubr.f32.gmra.mrb[0].mxu0 %v653
      %v752 = vpop.f32.mrb[0].mxu0
      %v753 = vadd.f32 0.0, %v752
      %v754 = vpop.f32.mrb[0].mxu0
      %755 = vmatprep.mubr.f32.mxu0 0.0
      %756 = vmatmul.mubr.f32.gmra.mrb[0].mxu0 %v656
      %v757 = vpop.f32.mrb[0].mxu0
      %v758 = vadd.f32 0.0, %v757
      %v759 = vpop.f32.mrb[0].mxu0
      %760 = vmatprep.mubr.f32.mxu0 0.0
      %761 = vmatmul.mubr.f32.gmra.mrb[0].mxu0 %v659
      %v762 = vpop.f32.mrb[0].mxu0
      %v763 = vadd.f32 0.0, %v762
      %v764 = vpop.f32.mrb[0].mxu0
      %765 = vdwg.mxu0
      %v766 = vld [vmem:[%s3] sm:$0x1]
      %v768 = vlaneseq
      %v769 = vshrl.u32 %v768, 7
      %v770 = vsub.s32 0, %v769
      %v771 = vrot.slane %v766, %v770
      %v773 = vmul.f32 %v728, %v771
      %v774 = vmul.f32 %v733, %v771
      %v775 = vmul.f32 %v738, %v771
      %v776 = vmul.f32 %v743, %v771
      %v777 = vmul.f32 %v748, %v771
      %v778 = vmul.f32 %v753, %v771
      %v779 = vmul.f32 %v758, %v771
      %v780 = vmul.f32 %v763, %v771
      %v781 = vld [vmem:[%s4] sm:$0x1]
      %v783 = vlaneseq
      %v784 = vshrl.u32 %v783, 7
      %v785 = vsub.s32 0, %v784
      %v786 = vrot.slane %v781, %v785
      %v788 = vadd.f32 %v773, %v786
      %v789 = vadd.f32 %v774, %v786
      %v790 = vadd.f32 %v775, %v786
      %v791 = vadd.f32 %v776, %v786
      %v792 = vadd.f32 %v777, %v786
      %v793 = vadd.f32 %v778, %v786
      %v794 = vadd.f32 %v779, %v786
      %v795 = vadd.f32 %v780, %v786
      %v796 = vmax.f32 %v788, 0.0
      %v797 = vmax.f32 %v789, 0.0
      %v798 = vmax.f32 %v790, 0.0
      %v799 = vmax.f32 %v791, 0.0
      %v800 = vmax.f32 %v792, 0.0
      %v801 = vmax.f32 %v793, 0.0
      %v802 = vmax.f32 %v794, 0.0
      %v803 = vmax.f32 %v795, 0.0
      %804 = vst.msk [vmem:[%s343] sm:$0xff] %vm585, %v796
      %805 = vst.msk [vmem:[%s343 + $0x8] sm:$0xff] %vm585, %v797
      %806 = vst.msk [vmem:[%s343 + $0x10] sm:$0xff] %vm585, %v798
      %807 = vst.msk [vmem:[%s343 + $0x18] sm:$0xff] %vm585, %v799
      %808 = vst.msk [vmem:[%s343 + $0x20] sm:$0xff] %vm585, %v800
      %809 = vst.msk [vmem:[%s343 + $0x28] sm:$0xff] %vm585, %v801
      %810 = vst.msk [vmem:[%s343 + $0x30] sm:$0xff] %vm585, %v802
      %811 = vst.msk [vmem:[%s343 + $0x38] sm:$0xff] %vm585, %v803
      %s812 = smul.u32 8, %s21
      %p813 = scmp.lt.s32.totalorder %s20, 1
      %s814 = scalar_select %p813, %s20, 1
      %p815 = scmp.lt.s32.totalorder %s812, 7
      %s816 = scalar_select %p815, %s812, 7
      %s817 = smul.addr %s814, 8
      %s818 = sadd.s32 %s816, %s817
      %s819 = smul.addr %s818, 8
      %s820 = scalar_lea.vmem %s5, %s819
      // Predicated region
      $region41: #{stem_block_forward.4} parent=39 // pred_check
        %p821 = pneg %p171
      $region42: #{stem_block_forward.4} parent=39 // pred_check_branch
        %823 = sbr.rel (%p821) target = $region44
      $region43: #{stem_block_forward.4} parent=39 // pred_region
        %s824 = smul.u32 8, %s21
      $region44: #{stem_block_forward.4} parent=39 // pred_fallthru
        _
    $region40: #{stem_block_forward.4} parent=5 // pred_fallthru
      _
    %p825 = scmp.le.s32.totalorder 2, %s11
    // Predicated region
    $region45: #{stem_block_forward.4} parent=5 // pred_check
      %p826 = pneg %p825
    $region46: #{stem_block_forward.4} parent=5 // pred_check_branch
      %828 = sbr.rel (%p826) target = $region48
    $region47: #{stem_block_forward.4} parent=5 // pred_region
      %s829 = ssub.s32 %s11, 2
      // Predicated region
      $region49: #{stem_block_forward.4} parent=47 // pred_check
        %p830 = pneg %p177
      $region50: #{stem_block_forward.4} parent=47 // pred_check_branch
        %832 = sbr.rel (%p830) target = $region52
      $region51: #{stem_block_forward.4} parent=47 // pred_region
        %s833 = smul.u32 8, %s23
        %p834 = scmp.lt.s32.totalorder %s22, 1
        %s835 = scalar_select %p834, %s22, 1
        %p836 = scmp.lt.s32.totalorder %s833, 7
        %s837 = scalar_select %p836, %s833, 7
        %s838 = smul.addr %s835, 8
        %s839 = sadd.s32 %s837, %s838
        %s840 = smul.addr %s839, 8
        %s841 = scalar_lea.vmem %s5, %s840
      $region52: #{stem_block_forward.4} parent=47 // pred_fallthru
        _
    $region48: #{stem_block_forward.4} parent=5 // pred_fallthru
      _
  $region6: #{stem_block_forward.4} parent=0 // loop_footer
    %s15 = sadd.s32 1, %s11
  $region7: #{stem_block_forward.4} parent=0 // loop_footer_branch
    %10 = sbr.rel target = $region3
  $region8: #{stem_block_forward.4} parent=0 // loop_exit
    _

// kernel: stem_block_forward.6
$region0: #{stem_block_forward.6}
  #allocation0 [shape = 'u32[]', space=smem, size = 0x4, offset = 0x4, fixed_abs, tag = 'smem constant byte address 0x4 - core index']
  #allocation1 [shape = 'u32[144,128]{1,0:T(1,128)}', space=vmem, size = 0x12000, scoped, tag = 'internal scratch']
  %s0 = inlined_call_operand.vmem [shape: f32[2,9,9,4], index: 0, kind: input, shape index: {}, may-alias: {0,1}]
  %s1 = inlined_call_operand.vmem [shape: f32[2,9,9,4], index: 1, kind: input, shape index: {}, may-alias: {0,1}]
  %s2 = inlined_call_operand.vmem [shape: f32[2,9,9,8], index: 2, kind: input, shape index: {}, may-alias: {2,3}]
  %s3 = inlined_call_operand.vmem [shape: f32[2,9,9,8], index: 3, kind: input, shape index: {}, may-alias: {2,3}]
  %s4 = inlined_call_operand.vmem [shape: f32[16,8], index: 4, kind: input, shape index: {}]
  %s5 = inlined_call_operand.vmem [shape: f32[1,8], index: 5, kind: input, shape index: {}]
  %s6 = inlined_call_operand.vmem [shape: f32[1,8], index: 6, kind: input, shape index: {}]
  %s7 = inlined_call_operand.vmem [shape: f32[2,8,8,16], index: 7, kind: output, shape index: {}]
  %s8 = sld [smem:[#allocation0]]
  $region61: #{stem_block_forward.6} parent=0
    _
  %s10 = ssub.s32 1, %s8
  %s11 = scalar_select 0, %s10, %s8
  loop: start=0, step=1, limit=4
  $region2: #{stem_block_forward.6} parent=0 // loop_pre_header
    _
  $region3: #{stem_block_forward.6} parent=0 // loop_header
    %s13 = sphi 0, %s17
    %p14 = scmp.ge.s32.totalorder %s13, 4
    %s20 = sphi 0, %s32
    %s21 = sphi 0, %s28
    %s22 = sphi 0, %s20
    %s23 = sphi 0, %s21
    %s24 = sphi 0, %s22
    %s25 = sphi 0, %s23
    %s37 = sphi 0, %s39
    %s40 = sphi 0, %s37
    %s41 = sphi 0, %s40
    %s57 = sphi 0, %s41
    %s69 = sphi 0, %s71
    %s72 = sphi 0, %s69
    %s73 = sphi 0, %s72
    %s89 = sphi 0, %s73
    %s97 = sphi 0, %s99
    %s100 = sphi 0, %s97
    %s101 = sphi 0, %s100
    %s117 = sphi 0, %s101
    %s129 = sphi 0, %s131
    %s132 = sphi 0, %s129
    %s133 = sphi 0, %s132
    %s149 = sphi 0, %s133
    %s153 = sphi 0, %s153
    %s155 = sphi 0, %s153
    %s156 = sphi 0, %s155
    %s170 = sphi 0, %s156
    %s174 = sphi 0, %s174
    %s176 = sphi 0, %s174
    %s177 = sphi 0, %s176
    %s191 = sphi 0, %s177
    %s195 = sphi 0, %s195
    %s197 = sphi 0, %s195
    %s198 = sphi 0, %s197
    %s212 = sphi 0, %s198
    %s220 = sphi 0, %s222
    %s223 = sphi 0, %s220
    %s224 = sphi 0, %s223
    %s240 = sphi 0, %s224
  $region4: #{stem_block_forward.6} parent=0 // loop_header_branch
    %16 = sbr.rel (%p14) target = $region8
  $region5: #{stem_block_forward.6} parent=0 // loop_body
    %s18 = ssub.s32 %s13, 1
    %s19 = ssub.s32 %s13, 2
    %s26 = sadd.s32 1, %s21
    %p27 = scmp.ge.s32.totalorder %s26, 1
    %s28 = scalar_select %p27, 0, %s26
    %s29 = sadd.s32 1, %s20
    %s30 = scalar_select %p27, %s29, %s20
    %p31 = scmp.ge.s32.totalorder %s30, 2
    %s32 = scalar_select %p31, 0, %s30
    %s33 = ssub.s32 %s20, %s32
    %s34 = ssub.s32 %s21, %s28
    %s35 = sor.u32 %s33, %s34
    %p36 = scmp.eq.s32.totalorder %s35, 0
    %s38 = sadd.s32 %s37, 1
    %s39 = scalar_select %p36, %s37, %s38
    %p42 = pneg %p36
    %p43 = scmp.eq.s32.totalorder %s13, 1
    %p44 = por %p42, %p43
    %p45 = scmp.ne.s32.totalorder %s37, %s40
    %p46 = scmp.eq.s32.totalorder %s13, 0
    %p47 = por %p45, %p46
    %p48 = scmp.ne.s32.totalorder %s37, %s40
    %p49 = scmp.eq.s32.totalorder %s18, 1
    %p50 = por %p48, %p49
    %p51 = scmp.ne.s32.totalorder %s40, %s41
    %p52 = scmp.eq.s32.totalorder %s18, 0
    %p53 = por %p51, %p52
    %p54 = scmp.ne.s32.totalorder %s40, %s41
    %p55 = scmp.eq.s32.totalorder %s19, 1
    %p56 = por %p54, %p55
    %p58 = scmp.ne.s32.totalorder %s41, %s57
    %p59 = scmp.eq.s32.totalorder %s19, 0
    %p60 = por %p58, %p59
    %s61 = sadd.s32 %s21, 1
    %s62 = smul.u32 %s61, 8
    %s63 = sadd.s32 %s28, 1
    %s64 = smul.u32 %s63, 8
    %s65 = ssub.s32 %s20, %s32
    %s66 = ssub.s32 %s62, %s64
    %s67 = sor.u32 %s65, %s66
    %p68 = scmp.eq.s32.totalorder %s67, 0
    %s70 = sadd.s32 %s69, 1
    %s71 = scalar_select %p68, %s69, %s70
    %p74 = pneg %p68
    %p75 = scmp.eq.s32.totalorder %s13, 1
    %p76 = por %p74, %p75
    %p77 = scmp.ne.s32.totalorder %s69, %s72
    %p78 = scmp.eq.s32.totalorder %s13, 0
    %p79 = por %p77, %p78
    %p80 = scmp.ne.s32.totalorder %s69, %s72
    %p81 = scmp.eq.s32.totalorder %s18, 1
    %p82 = por %p80, %p81
    %p83 = scmp.ne.s32.totalorder %s72, %s73
    %p84 = scmp.eq.s32.totalorder %s18, 0
    %p85 = por %p83, %p84
    %p86 = scmp.ne.s32.totalorder %s72, %s73
    %p87 = scmp.eq.s32.totalorder %s19, 1
    %p88 = por %p86, %p87
    %p90 = scmp.ne.s32.totalorder %s73, %s89
    %p91 = scmp.eq.s32.totalorder %s19, 0
    %p92 = por %p90, %p91
    %s93 = ssub.s32 %s20, %s32
    %s94 = ssub.s32 %s21, %s28
    %s95 = sor.u32 %s93, %s94
    %p96 = scmp.eq.s32.totalorder %s95, 0
    %s98 = sadd.s32 %s97, 1
    %s99 = scalar_select %p96, %s97, %s98
    %p102 = pneg %p96
    %p103 = scmp.eq.s32.totalorder %s13, 1
    %p104 = por %p102, %p103
    %p105 = scmp.ne.s32.totalorder %s97, %s100
    %p106 = scmp.eq.s32.totalorder %s13, 0
    %p107 = por %p105, %p106
    %p108 = scmp.ne.s32.totalorder %s97, %s100
    %p109 = scmp.eq.s32.totalorder %s18, 1
    %p110 = por %p108, %p109
    %p111 = scmp.ne.s32.totalorder %s100, %s101
    %p112 = scmp.eq.s32.totalorder %s18, 0
    %p113 = por %p111, %p112
    %p114 = scmp.ne.s32.totalorder %s100, %s101
    %p115 = scmp.eq.s32.totalorder %s19, 1
    %p116 = por %p114, %p115
    %p118 = scmp.ne.s32.totalorder %s101, %s117
    %p119 = scmp.eq.s32.totalorder %s19, 0
    %p120 = por %p118, %p119
    %s121 = sadd.s32 %s21, 1
    %s122 = smul.u32 %s121, 8
    %s123 = sadd.s32 %s28, 1
    %s124 = smul.u32 %s123, 8
    %s125 = ssub.s32 %s20, %s32
    %s126 = ssub.s32 %s122, %s124
    %s127 = sor.u32 %s125, %s126
    %p128 = scmp.eq.s32.totalorder %s127, 0
    %s130 = sadd.s32 %s129, 1
    %s131 = scalar_select %p128, %s129, %s130
    %p134 = pneg %p128
    %p135 = scmp.eq.s32.totalorder %s13, 1
    %p136 = por %p134, %p135
    %p137 = scmp.ne.s32.totalorder %s129, %s132
    %p138 = scmp.eq.s32.totalorder %s13, 0
    %p139 = por %p137, %p138
    %p140 = scmp.ne.s32.totalorder %s129, %s132
    %p141 = scmp.eq.s32.totalorder %s18, 1
    %p142 = por %p140, %p141
    %p143 = scmp.ne.s32.totalorder %s132, %s133
    %p144 = scmp.eq.s32.totalorder %s18, 0
    %p145 = por %p143, %p144
    %p146 = scmp.ne.s32.totalorder %s132, %s133
    %p147 = scmp.eq.s32.totalorder %s19, 1
    %p148 = por %p146, %p147
    %p150 = scmp.ne.s32.totalorder %s133, %s149
    %p151 = scmp.eq.s32.totalorder %s19, 0
    %p152 = por %p150, %p151
    %s154 = sadd.s32 %s153, 1
    %p157 = scmp.eq.s32.totalorder %s13, 1
    %p158 = scmp.ne.s32.totalorder %s153, %s155
    %p159 = scmp.eq.s32.totalorder %s13, 0
    %p160 = por %p158, %p159
    %p161 = scmp.ne.s32.totalorder %s153, %s155
    %p162 = scmp.eq.s32.totalorder %s18, 1
    %p163 = por %p161, %p162
    %p164 = scmp.ne.s32.totalorder %s155, %s156
    %p165 = scmp.eq.s32.totalorder %s18, 0
    %p166 = por %p164, %p165
    %p167 = scmp.ne.s32.totalorder %s155, %s156
    %p168 = scmp.eq.s32.totalorder %s19, 1
    %p169 = por %p167, %p168
    %p171 = scmp.ne.s32.totalorder %s156, %s170
    %p172 = scmp.eq.s32.totalorder %s19, 0
    %p173 = por %p171, %p172
    %s175 = sadd.s32 %s174, 1
    %p178 = scmp.eq.s32.totalorder %s13, 1
    %p179 = scmp.ne.s32.totalorder %s174, %s176
    %p180 = scmp.eq.s32.totalorder %s13, 0
    %p181 = por %p179, %p180
    %p182 = scmp.ne.s32.totalorder %s174, %s176
    %p183 = scmp.eq.s32.totalorder %s18, 1
    %p184 = por %p182, %p183
    %p185 = scmp.ne.s32.totalorder %s176, %s177
    %p186 = scmp.eq.s32.totalorder %s18, 0
    %p187 = por %p185, %p186
    %p188 = scmp.ne.s32.totalorder %s176, %s177
    %p189 = scmp.eq.s32.totalorder %s19, 1
    %p190 = por %p188, %p189
    %p192 = scmp.ne.s32.totalorder %s177, %s191
    %p193 = scmp.eq.s32.totalorder %s19, 0
    %p194 = por %p192, %p193
    %s196 = sadd.s32 %s195, 1
    %p199 = scmp.eq.s32.totalorder %s13, 1
    %p200 = scmp.ne.s32.totalorder %s195, %s197
    %p201 = scmp.eq.s32.totalorder %s13, 0
    %p202 = por %p200, %p201
    %p203 = scmp.ne.s32.totalorder %s195, %s197
    %p204 = scmp.eq.s32.totalorder %s18, 1
    %p205 = por %p203, %p204
    %p206 = scmp.ne.s32.totalorder %s197, %s198
    %p207 = scmp.eq.s32.totalorder %s18, 0
    %p208 = por %p206, %p207
    %p209 = scmp.ne.s32.totalorder %s197, %s198
    %p210 = scmp.eq.s32.totalorder %s19, 1
    %p211 = por %p209, %p210
    %p213 = scmp.ne.s32.totalorder %s198, %s212
    %p214 = scmp.eq.s32.totalorder %s19, 0
    %p215 = por %p213, %p214
    %s216 = ssub.s32 %s20, %s32
    %s217 = ssub.s32 %s21, %s28
    %s218 = sor.u32 %s216, %s217
    %p219 = scmp.eq.s32.totalorder %s218, 0
    %s221 = sadd.s32 %s220, 1
    %s222 = scalar_select %p219, %s220, %s221
    %p225 = pneg %p219
    %p226 = scmp.eq.s32.totalorder %s13, 1
    %p227 = por %p225, %p226
    %p228 = scmp.ne.s32.totalorder %s220, %s223
    %p229 = scmp.eq.s32.totalorder %s13, 0
    %p230 = por %p228, %p229
    %p231 = scmp.ne.s32.totalorder %s220, %s223
    %p232 = scmp.eq.s32.totalorder %s18, 1
    %p233 = por %p231, %p232
    %p234 = scmp.ne.s32.totalorder %s223, %s224
    %p235 = scmp.eq.s32.totalorder %s18, 0
    %p236 = por %p234, %p235
    %p237 = scmp.ne.s32.totalorder %s223, %s224
    %p238 = scmp.eq.s32.totalorder %s19, 1
    %p239 = por %p237, %p238
    %p241 = scmp.ne.s32.totalorder %s224, %s240
    %p242 = scmp.eq.s32.totalorder %s19, 0
    %p243 = por %p241, %p242
    %p244 = scmp.le.s32.totalorder 1, %s13
    %p245 = scmp.lt.s32.totalorder %s13, 3
    %p246 = pnand %p244, %p245
    %p247 = pneg %p246
    // Predicated region
    $region9: #{stem_block_forward.6} parent=5 // pred_check
      _
    $region10: #{stem_block_forward.6} parent=5 // pred_check_branch
      %249 = sbr.rel (%p246) target = $region12
    $region11: #{stem_block_forward.6} parent=5 // pred_region
      %s250 = ssub.s32 %s13, 1
      // Predicated region
      $region13: #{stem_block_forward.6} parent=11 // pred_check
        %p251 = pneg %p166
      $region14: #{stem_block_forward.6} parent=11 // pred_check_branch
        %253 = sbr.rel (%p251) target = $region16
      $region15: #{stem_block_forward.6} parent=11 // pred_region
        _
      $region16: #{stem_block_forward.6} parent=11 // pred_fallthru
        _
      // Predicated region
      $region17: #{stem_block_forward.6} parent=11 // pred_check
        %p254 = pneg %p187
      $region18: #{stem_block_forward.6} parent=11 // pred_check_branch
        %256 = sbr.rel (%p254) target = $region20
      $region19: #{stem_block_forward.6} parent=11 // pred_region
        _
      $region20: #{stem_block_forward.6} parent=11 // pred_fallthru
        _
      // Predicated region
      $region21: #{stem_block_forward.6} parent=11 // pred_check
        %p257 = pneg %p208
      $region22: #{stem_block_forward.6} parent=11 // pred_check_branch
        %259 = sbr.rel (%p257) target = $region24
      $region23: #{stem_block_forward.6} parent=11 // pred_region
        _
      $region24: #{stem_block_forward.6} parent=11 // pred_fallthru
        _
    $region12: #{stem_block_forward.6} parent=5 // pred_fallthru
      _
    %p260 = scmp.lt.s32.totalorder %s13, 2
    // Predicated region
    $region25: #{stem_block_forward.6} parent=5 // pred_check
      %p261 = pneg %p260
    $region26: #{stem_block_forward.6} parent=5 // pred_check_branch
      %263 = sbr.rel (%p261) target = $region28
    $region27: #{stem_block_forward.6} parent=5 // pred_region
      // Predicated region
      $region29: #{stem_block_forward.6} parent=27 // pred_check
        %p264 = pneg %p47
      $region30: #{stem_block_forward.6} parent=27 // pred_check_branch
        %266 = sbr.rel (%p264) target = $region32
      $region31: #{stem_block_forward.6} parent=27 // pred_region
        %s267 = smul.u32 8, %s21
        %s268 = ssub.s32 9, %s267
        %p269 = scmp.lt.s32.totalorder %s268, 8
        %s270 = scalar_select %p269, %s268, 8
        %s271 = smul.u32 128, %s270
        %s272 = smul.u32 %s271, 2
        %p273 = scmp.lt.s32.totalorder %s20, 1
        %s274 = scalar_select %p273, %s20, 1
        %p275 = scmp.lt.s32.totalorder %s267, 8
        %s276 = scalar_select %p275, %s267, 8
        %s277 = smul.addr %s276, 2
        %s278 = smul.addr %s274, 18
        %s279 = sadd.s32 %s277, %s278
        %s280 = smul.addr %s279, 8
        %s281 = scalar_lea.vmem %s0, %s280
        %s282 = smul.u32 8, %s21
        %s283 = ssub.s32 9, %s282
        %p284 = scmp.lt.s32.totalorder %s283, 8
        %s285 = scalar_select %p284, %s283, 8
        %s286 = smul.u32 128, %s285
        %s287 = smul.u32 %s286, 2
      $region32: #{stem_block_forward.6} parent=27 // pred_fallthru
        _
      // Predicated region
      $region33: #{stem_block_forward.6} parent=27 // pred_check
        %p288 = pneg %p79
      $region34: #{stem_block_forward.6} parent=27 // pred_check_branch
        %290 = sbr.rel (%p288) target = $region36
      $region35: #{stem_block_forward.6} parent=27 // pred_region
        %s291 = sadd.s32 %s21, 1
        %s292 = smul.u32 %s291, 8
        %p293 = scmp.lt.s32.totalorder %s20, 1
        %s294 = scalar_select %p293, %s20, 1
        %p295 = scmp.lt.s32.totalorder %s292, 8
        %s296 = scalar_select %p295, %s292, 8
        %s297 = smul.addr %s296, 2
        %s298 = smul.addr %s294, 18
        %s299 = sadd.s32 %s297, %s298
        %s300 = smul.addr %s299, 8
        %s301 = scalar_lea.vmem %s1, %s300
        %s302 = sadd.s32 %s21, 1
        %s303 = smul.u32 %s302, 8
      $region36: #{stem_block_forward.6} parent=27 // pred_fallthru
        _
      // Predicated region
      $region37: #{stem_block_forward.6} parent=27 // pred_check
        %p304 = pneg %p107
      $region38: #{stem_block_forward.6} parent=27 // pred_check_branch
        %306 = sbr.rel (%p304) target = $region40
      $region39: #{stem_block_forward.6} parent=27 // pred_region
        %s307 = smul.u32 8, %s21
        %s308 = ssub.s32 9, %s307
        %p309 = scmp.lt.s32.totalorder %s308, 8
        %s310 = scalar_select %p309, %s308, 8
        %s311 = smul.u32 128, %s310
        %s312 = smul.u32 %s311, 2
        %p313 = scmp.lt.s32.totalorder %s20, 1
        %s314 = scalar_select %p313, %s20, 1
        %p315 = scmp.lt.s32.totalorder %s307, 8
        %s316 = scalar_select %p315, %s307, 8
        %s317 = smul.addr %s316, 2
        %s318 = smul.addr %s314, 18
        %s319 = sadd.s32 %s317, %s318
        %s320 = smul.addr %s319, 8
        %s321 = scalar_lea.vmem %s2, %s320
        %s322 = smul.u32 8, %s21
        %s323 = ssub.s32 9, %s322
        %p324 = scmp.lt.s32.totalorder %s323, 8
        %s325 = scalar_select %p324, %s323, 8
        %s326 = smul.u32 128, %s325
        %s327 = smul.u32 %s326, 2
      $region40: #{stem_block_forward.6} parent=27 // pred_fallthru
        _
      // Predicated region
      $region41: #{stem_block_forward.6} parent=27 // pred_check
        %p328 = pneg %p139
      $region42: #{stem_block_forward.6} parent=27 // pred_check_branch
        %330 = sbr.rel (%p328) target = $region44
      $region43: #{stem_block_forward.6} parent=27 // pred_region
        %s331 = sadd.s32 %s21, 1
        %s332 = smul.u32 %s331, 8
        %p333 = scmp.lt.s32.totalorder %s20, 1
        %s334 = scalar_select %p333, %s20, 1
        %p335 = scmp.lt.s32.totalorder %s332, 8
        %s336 = scalar_select %p335, %s332, 8
        %s337 = smul.addr %s336, 2
        %s338 = smul.addr %s334, 18
        %s339 = sadd.s32 %s337, %s338
        %s340 = smul.addr %s339, 8
        %s341 = scalar_lea.vmem %s3, %s340
        %s342 = sadd.s32 %s21, 1
        %s343 = smul.u32 %s342, 8
      $region44: #{stem_block_forward.6} parent=27 // pred_fallthru
        _
    $region28: #{stem_block_forward.6} parent=5 // pred_fallthru
      _
    %p344 = scmp.le.s32.totalorder 1, %s13
    %p345 = scmp.lt.s32.totalorder %s13, 3
    %p346 = pnand %p344, %p345
    %p347 = pneg %p346
    // Predicated region
    $region45: #{stem_block_forward.6} parent=5 // pred_check
      _
    $region46: #{stem_block_forward.6} parent=5 // pred_check_branch
      %349 = sbr.rel (%p346) target = $region48
    $region47: #{stem_block_forward.6} parent=5 // pred_region
      %s350 = ssub.s32 %s13, 1
      %s351 = smul.u32 8, %s23
      %s352 = ssub.s32 9, %s351
      %p353 = scmp.lt.s32.totalorder %s352, 8
      %s354 = scalar_select %p353, %s352, 8
      %s355 = smul.u32 128, %s354
      %s356 = smul.u32 %s355, 2
      %p357 = scmp.lt.s32.totalorder %s22, 1
      %s358 = scalar_select %p357, %s22, 1
      %p359 = scmp.lt.s32.totalorder %s351, 8
      %s360 = scalar_select %p359, %s351, 8
      %s361 = smul.addr %s360, 2
      %s362 = smul.addr %s358, 18
      %s363 = sadd.s32 %s361, %s362
      %s364 = smul.addr %s363, 8
      %s365 = scalar_lea.vmem %s0, %s364
      %p366 = pneg %p53
      %p367 = pneg %p50
      %s368 = sadd.s32 %s23, 1
      %s369 = smul.u32 %s368, 8
      %p370 = scmp.lt.s32.totalorder %s22, 1
      %s371 = scalar_select %p370, %s22, 1
      %p372 = scmp.lt.s32.totalorder %s369, 8
      %s373 = scalar_select %p372, %s369, 8
      %s374 = smul.addr %s373, 2
      %s375 = smul.addr %s371, 18
      %s376 = sadd.s32 %s374, %s375
      %s377 = smul.addr %s376, 8
      %s378 = scalar_lea.vmem %s1, %s377
      %p379 = pneg %p85
      %p380 = pneg %p82
      %s381 = smul.u32 8, %s23
      %s382 = ssub.s32 9, %s381
      %p383 = scmp.lt.s32.totalorder %s382, 8
      %s384 = scalar_select %p383, %s382, 8
      %s385 = smul.u32 128, %s384
      %s386 = smul.u32 %s385, 2
      %p387 = scmp.lt.s32.totalorder %s22, 1
      %s388 = scalar_select %p387, %s22, 1
      %p389 = scmp.lt.s32.totalorder %s381, 8
      %s390 = scalar_select %p389, %s381, 8
      %s391 = smul.addr %s390, 2
      %s392 = smul.addr %s388, 18
      %s393 = sadd.s32 %s391, %s392
      %s394 = smul.addr %s393, 8
      %s395 = scalar_lea.vmem %s2, %s394
      %p396 = pneg %p113
      %p397 = pneg %p110
      %s398 = sadd.s32 %s23, 1
      %s399 = smul.u32 %s398, 8
      %p400 = scmp.lt.s32.totalorder %s22, 1
      %s401 = scalar_select %p400, %s22, 1
      %p402 = scmp.lt.s32.totalorder %s399, 8
      %s403 = scalar_select %p402, %s399, 8
      %s404 = smul.addr %s403, 2
      %s405 = smul.addr %s401, 18
      %s406 = sadd.s32 %s404, %s405
      %s407 = smul.addr %s406, 8
      %s408 = scalar_lea.vmem %s3, %s407
      %p409 = pneg %p145
      %p410 = pneg %p142
      %p411 = pneg %p166
      %p412 = pneg %p163
      %p413 = pneg %p187
      %p414 = pneg %p184
      %p415 = pneg %p208
      %p416 = pneg %p205
      %p417 = pneg %p236
      %p418 = pneg %p233
      %s419 = smul.u32 8, %s23
      %p420 = scmp.lt.s32.totalorder %s22, 1
      %s421 = scalar_select %p420, %s22, 1
      %p422 = scmp.lt.s32.totalorder %s419, 7
      %s423 = scalar_select %p422, %s419, 7
      %s424 = smul.addr %s421, 8
      %s425 = sadd.s32 %s423, %s424
      %s426 = smul.addr %s425, 8
      %s427 = scalar_lea.vmem %s7, %s426
      %s428 = smul.u32 8, %s23
      %s429 = ssub.s32 9, %s428
      %p430 = scmp.lt.s32.totalorder %s429, 8
      %s431 = scalar_select %p430, %s429, 8
      %s432 = smul.u32 128, %s431
      %s433 = smul.u32 %s432, 2
      %p434 = scmp.lt.s32.totalorder %s22, 1
      %s435 = scalar_select %p434, %s22, 1
      %p436 = scmp.lt.s32.totalorder %s428, 8
      %s437 = scalar_select %p436, %s428, 8
      %s438 = smul.addr %s437, 2
      %s439 = smul.addr %s435, 18
      %s440 = sadd.s32 %s438, %s439
      %s441 = smul.addr %s440, 8
      %s442 = scalar_lea.vmem %s0, %s441
      %s443 = smul.u32 8, %s23
      %s444 = ssub.s32 9, %s443
      %p445 = scmp.lt.s32.totalorder %s444, 8
      %s446 = scalar_select %p445, %s444, 8
      %s447 = smul.u32 128, %s446
      %s448 = smul.u32 %s447, 2
      %s449 = sadd.s32 %s23, 1
      %s450 = smul.u32 %s449, 8
      %p451 = scmp.lt.s32.totalorder %s22, 1
      %s452 = scalar_select %p451, %s22, 1
      %p453 = scmp.lt.s32.totalorder %s450, 8
      %s454 = scalar_select %p453, %s450, 8
      %s455 = smul.addr %s454, 2
      %s456 = smul.addr %s452, 18
      %s457 = sadd.s32 %s455, %s456
      %s458 = smul.addr %s457, 8
      %s459 = scalar_lea.vmem %s1, %s458
      %s460 = sadd.s32 %s23, 1
      %s461 = smul.u32 %s460, 8
      %s462 = smul.u32 8, %s23
      %s463 = ssub.s32 9, %s462
      %p464 = scmp.lt.s32.totalorder %s463, 8
      %s465 = scalar_select %p464, %s463, 8
      %s466 = smul.u32 128, %s465
      %s467 = smul.u32 %s466, 2
      %p468 = scmp.lt.s32.totalorder %s22, 1
      %s469 = scalar_select %p468, %s22, 1
      %p470 = scmp.lt.s32.totalorder %s462, 8
      %s471 = scalar_select %p470, %s462, 8
      %s472 = smul.addr %s471, 2
      %s473 = smul.addr %s469, 18
      %s474 = sadd.s32 %s472, %s473
      %s475 = smul.addr %s474, 8
      %s476 = scalar_lea.vmem %s2, %s475
      %s477 = smul.u32 8, %s23
      %s478 = ssub.s32 9, %s477
      %p479 = scmp.lt.s32.totalorder %s478, 8
      %s480 = scalar_select %p479, %s478, 8
      %s481 = smul.u32 128, %s480
      %s482 = smul.u32 %s481, 2
      %s483 = sadd.s32 %s23, 1
      %s484 = smul.u32 %s483, 8
      %p485 = scmp.lt.s32.totalorder %s22, 1
      %s486 = scalar_select %p485, %s22, 1
      %p487 = scmp.lt.s32.totalorder %s484, 8
      %s488 = scalar_select %p487, %s484, 8
      %s489 = smul.addr %s488, 2
      %s490 = smul.addr %s486, 18
      %s491 = sadd.s32 %s489, %s490
      %s492 = smul.addr %s491, 8
      %s493 = scalar_lea.vmem %s3, %s492
      %s494 = sadd.s32 %s23, 1
      %s495 = smul.u32 %s494, 8
      %s496 = smul.u32 8, %s23
      %p497 = scmp.lt.s32.totalorder %s22, 1
      %s498 = scalar_select %p497, %s22, 1
      %p499 = scmp.lt.s32.totalorder %s496, 7
      %s500 = scalar_select %p499, %s496, 7
      %s501 = smul.addr %s498, 8
      %s502 = sadd.s32 %s500, %s501
      %s503 = smul.addr %s502, 8
      %s504 = scalar_lea.vmem %s7, %s503
      %s505 = smul.u32 8, %s23
      %v506 = vld [vmem:[%s442] sm:$0xff]
      %v507 = vld [vmem:[%s442 + $0x8] sm:$0x1]
      %v508 = vld [vmem:[%s442 + $0x10] sm:$0xff]
      %v509 = vld [vmem:[%s442 + $0x18] sm:$0x1]
      %v510 = vld [vmem:[%s442 + $0x20] sm:$0xff]
      %v511 = vld [vmem:[%s442 + $0x28] sm:$0x1]
      %v512 = vld [vmem:[%s442 + $0x30] sm:$0xff]
      %v513 = vld [vmem:[%s442 + $0x38] sm:$0x1]
      %v514 = vld [vmem:[%s442 + $0x40] sm:$0xff]
      %v515 = vld [vmem:[%s442 + $0x48] sm:$0x1]
      %v516 = vld [vmem:[%s442 + $0x50] sm:$0xff]
      %v517 = vld [vmem:[%s442 + $0x58] sm:$0x1]
      %v518 = vld [vmem:[%s442 + $0x60] sm:$0xff]
      %v519 = vld [vmem:[%s442 + $0x68] sm:$0x1]
      %v520 = vld [vmem:[%s442 + $0x70] sm:$0xff]
      %v521 = vld [vmem:[%s442 + $0x78] sm:$0x1]
      %v522 = vld [vmem:[%s459] sm:$0xff]
      %v523 = vld [vmem:[%s459 + $0x8] sm:$0x1]
      %vm540 = vcmask 1046528
      %v541 = vrot.slane %v506, 1
      %v542 = vrot.slane %v507, 1
      %v543 = vsel %vm540, %v541, %v542
      %v544 = vrot.slane %v508, 1
      %v545 = vrot.slane %v509, 1
      %v546 = vsel %vm540, %v544, %v545
      %v547 = vrot.slane %v510, 1
      %v548 = vrot.slane %v511, 1
      %v549 = vsel %vm540, %v547, %v548
      %v550 = vrot.slane %v512, 1
      %v551 = vrot.slane %v513, 1
      %v552 = vsel %vm540, %v550, %v551
      %v553 = vrot.slane %v514, 1
      %v554 = vrot.slane %v515, 1
      %v555 = vsel %vm540, %v553, %v554
      %v556 = vrot.slane %v516, 1
      %v557 = vrot.slane %v517, 1
      %v558 = vsel %vm540, %v556, %v557
      %v559 = vrot.slane %v518, 1
      %v560 = vrot.slane %v519, 1
      %v561 = vsel %vm540, %v559, %v560
      %v562 = vrot.slane %v520, 1
      %v563 = vrot.slane %v521, 1
      %v564 = vsel %vm540, %v562, %v563
      %565 = vrot.lane.b32.xlu0 %v543, 4
      %v566 = vpop.permute.xlu0 %565
      %567 = vrot.lane.b32.xlu0 %v546, 4
      %v568 = vpop.permute.xlu0 %567
      %569 = vrot.lane.b32.xlu0 %v549, 4
      %v570 = vpop.permute.xlu0 %569
      %571 = vrot.lane.b32.xlu0 %v552, 4
      %v572 = vpop.permute.xlu0 %571
      %573 = vrot.lane.b32.xlu0 %v555, 4
      %v574 = vpop.permute.xlu0 %573
      %575 = vrot.lane.b32.xlu0 %v558, 4
      %v576 = vpop.permute.xlu0 %575
      %577 = vrot.lane.b32.xlu0 %v561, 4
      %v578 = vpop.permute.xlu0 %577
      %579 = vrot.lane.b32.xlu0 %v564, 4
      %v580 = vpop.permute.xlu0 %579
      %590 = vrot.lane.b32.xlu0 %v508, 8
      %v591 = vpop.permute.xlu0 %590
      %592 = vrot.lane.b32.xlu0 %v510, 8
      %v593 = vpop.permute.xlu0 %592
      %594 = vrot.lane.b32.xlu0 %v512, 8
      %v595 = vpop.permute.xlu0 %594
      %596 = vrot.lane.b32.xlu0 %v514, 8
      %v597 = vpop.permute.xlu0 %596
      %598 = vrot.lane.b32.xlu0 %v516, 8
      %v599 = vpop.permute.xlu0 %598
      %600 = vrot.lane.b32.xlu0 %v518, 8
      %v601 = vpop.permute.xlu0 %600
      %602 = vrot.lane.b32.xlu0 %v520, 8
      %v603 = vpop.permute.xlu0 %602
      %604 = vrot.lane.b32.xlu0 %v522, 8
      %v605 = vpop.permute.xlu0 %604
      %v615 = vrot.slane %v522, 1
      %v616 = vrot.slane %v523, 1
      %v617 = vsel %vm540, %v615, %v616
      %618 = vrot.lane.b32.xlu0 %v546, 12
      %v619 = vpop.permute.xlu0 %618
      %620 = vrot.lane.b32.xlu0 %v549, 12
      %v621 = vpop.permute.xlu0 %620
      %622 = vrot.lane.b32.xlu0 %v552, 12
      %v623 = vpop.permute.xlu0 %622
      %624 = vrot.lane.b32.xlu0 %v555, 12
      %v625 = vpop.permute.xlu0 %624
      %626 = vrot.lane.b32.xlu0 %v558, 12
      %v627 = vpop.permute.xlu0 %626
      %628 = vrot.lane.b32.xlu0 %v561, 12
      %v629 = vpop.permute.xlu0 %628
      %630 = vrot.lane.b32.xlu0 %v564, 12
      %v631 = vpop.permute.xlu0 %630
      %632 = vrot.lane.b32.xlu0 %v617, 12
      %v633 = vpop.permute.xlu0 %632
      %vm642 = vcmask 31744
      %v643 = vsel %vm642, %v506, %v566
      %v644 = vsel %vm642, %v508, %v568
      %v645 = vsel %vm642, %v510, %v570
      %v646 = vsel %vm642, %v512, %v572
      %v647 = vsel %vm642, %v514, %v574
      %v648 = vsel %vm642, %v516, %v576
      %v649 = vsel %vm642, %v518, %v578
      %v650 = vsel %vm642, %v520, %v580
      %vm651 = vcmask 64512
      %v652 = vsel %vm651, %v643, %v591
      %v653 = vsel %vm651, %v644, %v593
      %v654 = vsel %vm651, %v645, %v595
      %v655 = vsel %vm651, %v646, %v597
      %v656 = vsel %vm651, %v647, %v599
      %v657 = vsel %vm651, %v648, %v601
      %v658 = vsel %vm651, %v649, %v603
      %v659 = vsel %vm651, %v650, %v605
      %vm660 = vcmask 97280
      %v661 = vsel %vm660, %v652, %v619
      %v662 = vsel %vm660, %v653, %v621
      %v663 = vsel %vm660, %v654, %v623
      %v664 = vsel %vm660, %v655, %v625
      %v665 = vsel %vm660, %v656, %v627
      %v666 = vsel %vm660, %v657, %v629
      %v667 = vsel %vm660, %v658, %v631
      %v668 = vsel %vm660, %v659, %v633
      %v669 = vld [vmem:[%s4] sm:$0xff]
      %v670 = vld [vmem:[%s4 + $0x8] sm:$0xff]
      %vm671 = vcmask 130048
      %v673 = vsel %vm671, %v661, 0
      %v676 = vsel %vm671, %v662, 0
      %v679 = vsel %vm671, %v663, 0
      %v682 = vsel %vm671, %v664, 0
      %v685 = vsel %vm671, %v665, 0
      %v688 = vsel %vm671, %v666, 0
      %v691 = vsel %vm671, %v667, 0
      %v694 = vsel %vm671, %v668, 0
      %696 = vmatprep.subr.mxu0 0.0
      %697 = vmatpush1.msra.mxu0 %v669
      %698 = vmatprep.subr.mxu0 0.0
      %699 = vmatpush1.msra.mxu0 %v670
      %700 = vmatprep.subr.mxu0 0.0
      %701 = vmatpush1.msra.mxu0 0.0
      %702 = vmatprep.subr.mxu0 0.0
      %703 = vmatpush1.msra.mxu0 0.0
      %704 = vmatprep.subr.mxu0 0.0
      %705 = vmatpush1.msra.mxu0 0.0
      %706 = vmatprep.subr.mxu0 0.0
      %707 = vmatpush1.msra.mxu0 0.0
      %708 = vmatprep.subr.mxu0 0.0
      %709 = vmatpush1.msra.mxu0 0.0
      %710 = vmatprep.subr.mxu0 0.0
      %711 = vmatpush1.msra.mxu0 0.0
      %712 = vmatprep.subr.mxu0 0.0
      %713 = vmatpush1.msra.mxu0 0.0
      %714 = vmatprep.subr.mxu0 0.0
      %715 = vmatpush1.msra.mxu0 0.0
      %716 = vmatprep.subr.mxu0 0.0
      %717 = vmatpush1.msra.mxu0 0.0
      %718 = vmatprep.subr.mxu0 0.0
      %719 = vmatpush1.msra.mxu0 0.0
      %720 = vmatprep.subr.mxu0 0.0
      %721 = vmatpush1.msra.mxu0 0.0
      %722 = vmatprep.subr.mxu0 0.0
      %723 = vmatpush1.msra.mxu0 0.0
      %724 = vmatprep.subr.mxu0 0.0
      %725 = vmatpush1.msra.mxu0 0.0
      %726 = vmatprep.subr.mxu0 0.0
      %727 = vmatpush1.msra.mxu0 0.0
      %728 = vmatprep.subr.mxu0 0.0
      %729 = vmatpush1.msra.mxu0 0.0
      %730 = vmatprep.subr.mxu0 0.0
      %731 = vmatpush1.msra.mxu0 0.0
      %732 = vmatprep.subr.mxu0 0.0
      %733 = vmatpush1.msra.mxu0 0.0
      %734 = vmatprep.subr.mxu0 0.0
      %735 = vmatpush1.msra.mxu0 0.0
      %736 = vmatprep.subr.mxu0 0.0
      %737 = vmatpush1.msra.mxu0 0.0
      %738 = vmatprep.subr.mxu0 0.0
      %739 = vmatpush1.msra.mxu0 0.0
      %740 = vmatprep.subr.mxu0 0.0
      %741 = vmatpush1.msra.mxu0 0.0
      %742 = vmatprep.subr.mxu0 0.0
      %743 = vmatpush1.msra.mxu0 0.0
      %744 = vmatprep.subr.mxu0 0.0
      %745 = vmatpush1.msra.mxu0 0.0
      %746 = vmatprep.subr.mxu0 0.0
      %747 = vmatpush1.msra.mxu0 0.0
      %748 = vmatprep.subr.mxu0 0.0
      %749 = vmatpush1.msra.mxu0 0.0
      %750 = vmatprep.subr.mxu0 0.0
      %751 = vmatpush1.msra.mxu0 0.0
      %752 = vmatprep.subr.mxu0 0.0
      %753 = vmatpush1.msra.mxu0 0.0
      %754 = vmatprep.subr.mxu0 0.0
      %755 = vmatpush1.msra.mxu0 0.0
      %756 = vmatprep.subr.mxu0 0.0
      %757 = vmatpush1.msra.mxu0 0.0
      %758 = vmatprep.subr.mxu0 0.0
      %759 = vmatpush1.msra.mxu0 0.0
      %760 = vmatprep.mubr.f32.mxu0 0.0
      %761 = vmatmul.mubr.f32.gmra.mrb[0].mxu0 %v673
      %v762 = vpop.f32.mrb[0].mxu0
      %v763 = vadd.f32 0.0, %v762
      %v764 = vpop.f32.mrb[0].mxu0
      %765 = vmatprep.mubr.f32.mxu0 0.0
      %766 = vmatmul.mubr.f32.gmra.mrb[0].mxu0 %v676
      %v767 = vpop.f32.mrb[0].mxu0
      %v768 = vadd.f32 0.0, %v767
      %v769 = vpop.f32.mrb[0].mxu0
      %770 = vmatprep.mubr.f32.mxu0 0.0
      %771 = vmatmul.mubr.f32.gmra.mrb[0].mxu0 %v679
      %v772 = vpop.f32.mrb[0].mxu0
      %v773 = vadd.f32 0.0, %v772
      %v774 = vpop.f32.mrb[0].mxu0
      %775 = vmatprep.mubr.f32.mxu0 0.0
      %776 = vmatmul.mubr.f32.gmra.mrb[0].mxu0 %v682
      %v777 = vpop.f32.mrb[0].mxu0
      %v778 = vadd.f32 0.0, %v777
      %v779 = vpop.f32.mrb[0].mxu0
      %780 = vmatprep.mubr.f32.mxu0 0.0
      %781 = vmatmul.mubr.f32.gmra.mrb[0].mxu0 %v685
      %v782 = vpop.f32.mrb[0].mxu0
      %v783 = vadd.f32 0.0, %v782
      %v784 = vpop.f32.mrb[0].mxu0
      %785 = vmatprep.mubr.f32.mxu0 0.0
      %786 = vmatmul.mubr.f32.gmra.mrb[0].mxu0 %v688
      %v787 = vpop.f32.mrb[0].mxu0
      %v788 = vadd.f32 0.0, %v787
      %v789 = vpop.f32.mrb[0].mxu0
      %790 = vmatprep.mubr.f32.mxu0 0.0
      %791 = vmatmul.mubr.f32.gmra.mrb[0].mxu0 %v691
      %v792 = vpop.f32.mrb[0].mxu0
      %v793 = vadd.f32 0.0, %v792
      %v794 = vpop.f32.mrb[0].mxu0
      %795 = vmatprep.mubr.f32.mxu0 0.0
      %796 = vmatmul.mubr.f32.gmra.mrb[0].mxu0 %v694
      %v797 = vpop.f32.mrb[0].mxu0
      %v798 = vadd.f32 0.0, %v797
      %v799 = vpop.f32.mrb[0].mxu0
      %800 = vdwg.mxu0
      %v801 = vld [vmem:[%s5] sm:$0x1]
      %v803 = vlaneseq
      %v804 = vshrl.u32 %v803, 7
      %v805 = vsub.s32 0, %v804
      %v806 = vrot.slane %v801, %v805
      %v808 = vmul.f32 %v763, %v806
      %v809 = vmul.f32 %v768, %v806
      %v810 = vmul.f32 %v773, %v806
      %v811 = vmul.f32 %v778, %v806
      %v812 = vmul.f32 %v783, %v806
      %v813 = vmul.f32 %v788, %v806
      %v814 = vmul.f32 %v793, %v806
      %v815 = vmul.f32 %v798, %v806
      %v816 = vld [vmem:[%s6] sm:$0x1]
      %v818 = vlaneseq
      %v819 = vshrl.u32 %v818, 7
      %v820 = vsub.s32 0, %v819
      %v821 = vrot.slane %v816, %v820
      %v823 = vadd.f32 %v808, %v821
      %v824 = vadd.f32 %v809, %v821
      %v825 = vadd.f32 %v810, %v821
      %v826 = vadd.f32 %v811, %v821
      %v827 = vadd.f32 %v812, %v821
      %v828 = vadd.f32 %v813, %v821
      %v829 = vadd.f32 %v814, %v821
      %v830 = vadd.f32 %v815, %v821
      %v831 = vmax.f32 %v823, 0.0
      %v832 = vmax.f32 %v824, 0.0
      %v833 = vmax.f32 %v825, 0.0
      %v834 = vmax.f32 %v826, 0.0
      %v835 = vmax.f32 %v827, 0.0
      %v836 = vmax.f32 %v828, 0.0
      %v837 = vmax.f32 %v829, 0.0
      %v838 = vmax.f32 %v830, 0.0
      %v839 = vld [vmem:[%s476] sm:$0xff]
      %v840 = vld [vmem:[%s476 + $0x8] sm:$0x1]
      %v841 = vld [vmem:[%s476 + $0x10] sm:$0xff]
      %v842 = vld [vmem:[%s476 + $0x18] sm:$0x1]
      %v843 = vld [vmem:[%s476 + $0x20] sm:$0xff]
      %v844 = vld [vmem:[%s476 + $0x28] sm:$0x1]
      %v845 = vld [vmem:[%s476 + $0x30] sm:$0xff]
      %v846 = vld [vmem:[%s476 + $0x38] sm:$0x1]
      %v847 = vld [vmem:[%s476 + $0x40] sm:$0xff]
      %v848 = vld [vmem:[%s476 + $0x48] sm:$0x1]
      %v849 = vld [vmem:[%s476 + $0x50] sm:$0xff]
      %v850 = vld [vmem:[%s476 + $0x58] sm:$0x1]
      %v851 = vld [vmem:[%s476 + $0x60] sm:$0xff]
      %v852 = vld [vmem:[%s476 + $0x68] sm:$0x1]
      %v853 = vld [vmem:[%s476 + $0x70] sm:$0xff]
      %v854 = vld [vmem:[%s476 + $0x78] sm:$0x1]
      %v855 = vld [vmem:[%s493] sm:$0xff]
      %v856 = vld [vmem:[%s493 + $0x8] sm:$0x1]
      %v873 = vrot.slane %v839, 1
      %v874 = vrot.slane %v840, 1
      %v875 = vsel %vm540, %v873, %v874
      %v876 = vrot.slane %v841, 1
      %v877 = vrot.slane %v842, 1
      %v878 = vsel %vm540, %v876, %v877
      %v879 = vrot.slane %v843, 1
      %v880 = vrot.slane %v844, 1
      %v881 = vsel %vm540, %v879, %v880
      %v882 = vrot.slane %v845, 1
      %v883 = vrot.slane %v846, 1
      %v884 = vsel %vm540, %v882, %v883
      %v885 = vrot.slane %v847, 1
      %v886 = vrot.slane %v848, 1
      %v887 = vsel %vm540, %v885, %v886
      %v888 = vrot.slane %v849, 1
      %v889 = vrot.slane %v850, 1
      %v890 = vsel %vm540, %v888, %v889
      %v891 = vrot.slane %v851, 1
      %v892 = vrot.slane %v852, 1
      %v893 = vsel %vm540, %v891, %v892
      %v894 = vrot.slane %v853, 1
      %v895 = vrot.slane %v854, 1
      %v896 = vsel %vm540, %v894, %v895
      %v905 = vmax.f32 %v839, %v875
      %v906 = vmax.f32 %v841, %v878
      %v907 = vmax.f32 %v843, %v881
      %v908 = vmax.f32 %v845, %v884
      %v909 = vmax.f32 %v847, %v887
      %v910 = vmax.f32 %v849, %v890
      %v911 = vmax.f32 %v851, %v893
      %v912 = vmax.f32 %v853, %v896
      %v915 = vrot.slane %v855, 1
      %v916 = vrot.slane %v856, 1
      %v917 = vsel %vm540, %v915, %v916
      %v919 = vmax.f32 %v855, %v917
      %v920 = vmax.f32 %v905, %v906
      %v921 = vmax.f32 %v906, %v907
      %v922 = vmax.f32 %v907, %v908
      %v923 = vmax.f32 %v908, %v909
      %v924 = vmax.f32 %v909, %v910
      %v925 = vmax.f32 %v910, %v911
      %v926 = vmax.f32 %v911, %v912
      %v927 = vmax.f32 %v912, %v919
      %928 = vst.msk [vmem:[%s504] sm:$0xff] %vm651, %v920
      %929 = vst.msk [vmem:[%s504 + $0x8] sm:$0xff] %vm651, %v921
      %930 = vst.msk [vmem:[%s504 + $0x10] sm:$0xff] %vm651, %v922
      %931 = vst.msk [vmem:[%s504 + $0x18] sm:$0xff] %vm651, %v923
      %932 = vst.msk [vmem:[%s504 + $0x20] sm:$0xff] %vm651, %v924
      %933 = vst.msk [vmem:[%s504 + $0x28] sm:$0xff] %vm651, %v925
      %934 = vst.msk [vmem:[%s504 + $0x30] sm:$0xff] %vm651, %v926
      %935 = vst.msk [vmem:[%s504 + $0x38] sm:$0xff] %vm651, %v927
      %944 = vrot.lane.b32.xlu0 %v831, 8
      %v945 = vpop.permute.xlu0 %944
      %946 = vrot.lane.b32.xlu0 %v832, 8
      %v947 = vpop.permute.xlu0 %946
      %948 = vrot.lane.b32.xlu0 %v833, 8
      %v949 = vpop.permute.xlu0 %948
      %950 = vrot.lane.b32.xlu0 %v834, 8
      %v951 = vpop.permute.xlu0 %950
      %952 = vrot.lane.b32.xlu0 %v835, 8
      %v953 = vpop.permute.xlu0 %952
      %954 = vrot.lane.b32.xlu0 %v836, 8
      %v955 = vpop.permute.xlu0 %954
      %956 = vrot.lane.b32.xlu0 %v837, 8
      %v957 = vpop.permute.xlu0 %956
      %958 = vrot.lane.b32.xlu0 %v838, 8
      %v959 = vpop.permute.xlu0 %958
      %vm968 = vcmask 130112
      %969 = vst.msk [vmem:[%s504] sm:$0xff] %vm968, %v945
      %970 = vst.msk [vmem:[%s504 + $0x8] sm:$0xff] %vm968, %v947
      %971 = vst.msk [vmem:[%s504 + $0x10] sm:$0xff] %vm968, %v949
      %972 = vst.msk [vmem:[%s504 + $0x18] sm:$0xff] %vm968, %v951
      %973 = vst.msk [vmem:[%s504 + $0x20] sm:$0xff] %vm968, %v953
      %974 = vst.msk [vmem:[%s504 + $0x28] sm:$0xff] %vm968, %v955
      %975 = vst.msk [vmem:[%s504 + $0x30] sm:$0xff] %vm968, %v957
      %976 = vst.msk [vmem:[%s504 + $0x38] sm:$0xff] %vm968, %v959
      %s977 = smul.u32 8, %s23
      %p978 = scmp.lt.s32.totalorder %s22, 1
      %s979 = scalar_select %p978, %s22, 1
      %p980 = scmp.lt.s32.totalorder %s977, 7
      %s981 = scalar_select %p980, %s977, 7
      %s982 = smul.addr %s979, 8
      %s983 = sadd.s32 %s981, %s982
      %s984 = smul.addr %s983, 8
      %s985 = scalar_lea.vmem %s7, %s984
      // Predicated region
      $region49: #{stem_block_forward.6} parent=47 // pred_check
        %p986 = pneg %p233
      $region50: #{stem_block_forward.6} parent=47 // pred_check_branch
        %988 = sbr.rel (%p986) target = $region52
      $region51: #{stem_block_forward.6} parent=47 // pred_region
        %s989 = smul.u32 8, %s23
      $region52: #{stem_block_forward.6} parent=47 // pred_fallthru
        _
    $region48: #{stem_block_forward.6} parent=5 // pred_fallthru
      _
    %p990 = scmp.le.s32.totalorder 2, %s13
    // Predicated region
    $region53: #{stem_block_forward.6} parent=5 // pred_check
      %p991 = pneg %p990
    $region54: #{stem_block_forward.6} parent=5 // pred_check_branch
      %993 = sbr.rel (%p991) target = $region56
    $region55: #{stem_block_forward.6} parent=5 // pred_region
      %s994 = ssub.s32 %s13, 2
      // Predicated region
      $region57: #{stem_block_forward.6} parent=55 // pred_check
        %p995 = pneg %p239
      $region58: #{stem_block_forward.6} parent=55 // pred_check_branch
        %997 = sbr.rel (%p995) target = $region60
      $region59: #{stem_block_forward.6} parent=55 // pred_region
        %s998 = smul.u32 8, %s25
        %p999 = scmp.lt.s32.totalorder %s24, 1
        %s1000 = scalar_select %p999, %s24, 1
        %p1001 = scmp.lt.s32.totalorder %s998, 7
        %s1002 = scalar_select %p1001, %s998, 7
        %s1003 = smul.addr %s1000, 8
        %s1004 = sadd.s32 %s1002, %s1003
        %s1005 = smul.addr %s1004, 8
        %s1006 = scalar_lea.vmem %s7, %s1005
      $region60: #{stem_block_forward.6} parent=55 // pred_fallthru
        _
    $region56: #{stem_block_forward.6} parent=5 // pred_fallthru
      _
  $region6: #{stem_block_forward.6} parent=0 // loop_footer
    %s17 = sadd.s32 1, %s13
  $region7: #{stem_block_forward.6} parent=0 // loop_footer_branch
    %12 = sbr.rel target = $region3
  $region8: #{stem_block_forward.6} parent=0 // loop_exit
    _

// kernel: stem_block_forward.7
$region0: #{stem_block_forward.7}
  #allocation0 [shape = 'u32[]', space=smem, size = 0x4, offset = 0x4, fixed_abs, tag = 'smem constant byte address 0x4 - core index']
  #allocation1 [shape = 'u32[144,128]{1,0:T(1,128)}', space=vmem, size = 0x12000, scoped, tag = 'internal scratch']
  %s0 = inlined_call_operand.vmem [shape: f32[2,5,2,9,32], index: 0, kind: input, shape index: {}, may-alias: {0,1}]
  %s1 = inlined_call_operand.vmem [shape: f32[2,5,2,9,32], index: 1, kind: input, shape index: {}, may-alias: {0,1}]
  %s2 = inlined_call_operand.vmem [shape: f32[192,8], index: 2, kind: input, shape index: {}]
  %s3 = inlined_call_operand.vmem [shape: f32[1,8], index: 3, kind: input, shape index: {}]
  %s4 = inlined_call_operand.vmem [shape: f32[1,8], index: 4, kind: input, shape index: {}]
  %s5 = inlined_call_operand.vmem [shape: f32[8,16], index: 5, kind: input, shape index: {}]
  %s6 = inlined_call_operand.vmem [shape: f32[1,16], index: 6, kind: input, shape index: {}]
  %s7 = inlined_call_operand.vmem [shape: f32[1,16], index: 7, kind: input, shape index: {}]
  %s8 = inlined_call_operand.hbm [shape: f32[2,4,4,16], index: 8, kind: output, shape index: {}]
  %s9 = sld [smem:[#allocation0]]
  $region65: #{stem_block_forward.7} parent=0
    _
  %s11 = ssub.s32 1, %s9
  %s12 = scalar_select 0, %s11, %s9
  $region1: #{stem_block_forward.7} parent=0
    #allocation2 [shape = 'u8[16384]{0}', space=vmem, size = 0x4000, scoped, tag = 'output window, operand 0']
    #allocation3 [shape = 's32[2]{0}', space=sflag, size = 0x8, scoped, tag = 'scoped memory for stem_block_forward.7']
    %13 = vsyncpa [#allocation3], 0
    %s14 = scalar_lea.sflag [#allocation3], 1
    %15 = vsyncpa %s14, 0
    loop: start=0, step=1, limit=4
    $region2: #{stem_block_forward.7} parent=1 // loop_pre_header
      _
    $region3: #{stem_block_forward.7} parent=1 // loop_header
      %s17 = sphi 0, %s21
      %p18 = scmp.ge.s32.totalorder %s17, 4
      %s24 = sphi 0, %s36
      %s25 = sphi 0, %s32
      %s26 = sphi 0, %s24
      %s27 = sphi 0, %s25
      %s28 = sphi 0, %s26
      %s29 = sphi 0, %s27
      %s41 = sphi 0, %s43
      %s44 = sphi 0, %s41
      %s45 = sphi 0, %s44
      %s61 = sphi 0, %s45
      %s73 = sphi 0, %s75
      %s76 = sphi 0, %s73
      %s77 = sphi 0, %s76
      %s93 = sphi 0, %s77
      %s97 = sphi 0, %s97
      %s99 = sphi 0, %s97
      %s100 = sphi 0, %s99
      %s114 = sphi 0, %s100
      %s118 = sphi 0, %s118
      %s120 = sphi 0, %s118
      %s121 = sphi 0, %s120
      %s135 = sphi 0, %s121
      %s139 = sphi 0, %s139
      %s141 = sphi 0, %s139
      %s142 = sphi 0, %s141
      %s156 = sphi 0, %s142
      %s160 = sphi 0, %s160
      %s162 = sphi 0, %s160
      %s163 = sphi 0, %s162
      %s177 = sphi 0, %s163
      %s181 = sphi 0, %s181
      %s183 = sphi 0, %s181
      %s184 = sphi 0, %s183
      %s198 = sphi 0, %s184
      %s202 = sphi 0, %s202
      %s204 = sphi 0, %s202
      %s205 = sphi 0, %s204
      %s219 = sphi 0, %s205
      %s227 = sphi 0, %s229
      %s230 = sphi 0, %s227
      %s231 = sphi 0, %s230
      %s247 = sphi 0, %s231
    $region4: #{stem_block_forward.7} parent=1 // loop_header_branch
      %20 = sbr.rel (%p18) target = $region8
    $region5: #{stem_block_forward.7} parent=1 // loop_body
      %s22 = ssub.s32 %s17, 1
      %s23 = ssub.s32 %s17, 2
      %s30 = sadd.s32 1, %s25
      %p31 = scmp.ge.s32.totalorder %s30, 1
      %s32 = scalar_select %p31, 0, %s30
      %s33 = sadd.s32 1, %s24
      %s34 = scalar_select %p31, %s33, %s24
      %p35 = scmp.ge.s32.totalorder %s34, 2
      %s36 = scalar_select %p35, 0, %s34
      %s37 = ssub.s32 %s24, %s36
      %s38 = ssub.s32 %s25, %s32
      %s39 = sor.u32 %s37, %s38
      %p40 = scmp.eq.s32.totalorder %s39, 0
      %s42 = sadd.s32 %s41, 1
      %s43 = scalar_select %p40, %s41, %s42
      %p46 = pneg %p40
      %p47 = scmp.eq.s32.totalorder %s17, 1
      %p48 = por %p46, %p47
      %p49 = scmp.ne.s32.totalorder %s41, %s44
      %p50 = scmp.eq.s32.totalorder %s17, 0
      %p51 = por %p49, %p50
      %p52 = scmp.ne.s32.totalorder %s41, %s44
      %p53 = scmp.eq.s32.totalorder %s22, 1
      %p54 = por %p52, %p53
      %p55 = scmp.ne.s32.totalorder %s44, %s45
      %p56 = scmp.eq.s32.totalorder %s22, 0
      %p57 = por %p55, %p56
      %p58 = scmp.ne.s32.totalorder %s44, %s45
      %p59 = scmp.eq.s32.totalorder %s23, 1
      %p60 = por %p58, %p59
      %p62 = scmp.ne.s32.totalorder %s45, %s61
      %p63 = scmp.eq.s32.totalorder %s23, 0
      %p64 = por %p62, %p63
      %s65 = sadd.s32 %s25, 1
      %s66 = smul.u32 %s65, 4
      %s67 = sadd.s32 %s32, 1
      %s68 = smul.u32 %s67, 4
      %s69 = ssub.s32 %s24, %s36
      %s70 = ssub.s32 %s66, %s68
      %s71 = sor.u32 %s69, %s70
      %p72 = scmp.eq.s32.totalorder %s71, 0
      %s74 = sadd.s32 %s73, 1
      %s75 = scalar_select %p72, %s73, %s74
      %p78 = pneg %p72
      %p79 = scmp.eq.s32.totalorder %s17, 1
      %p80 = por %p78, %p79
      %p81 = scmp.ne.s32.totalorder %s73, %s76
      %p82 = scmp.eq.s32.totalorder %s17, 0
      %p83 = por %p81, %p82
      %p84 = scmp.ne.s32.totalorder %s73, %s76
      %p85 = scmp.eq.s32.totalorder %s22, 1
      %p86 = por %p84, %p85
      %p87 = scmp.ne.s32.totalorder %s76, %s77
      %p88 = scmp.eq.s32.totalorder %s22, 0
      %p89 = por %p87, %p88
      %p90 = scmp.ne.s32.totalorder %s76, %s77
      %p91 = scmp.eq.s32.totalorder %s23, 1
      %p92 = por %p90, %p91
      %p94 = scmp.ne.s32.totalorder %s77, %s93
      %p95 = scmp.eq.s32.totalorder %s23, 0
      %p96 = por %p94, %p95
      %s98 = sadd.s32 %s97, 1
      %p101 = scmp.eq.s32.totalorder %s17, 1
      %p102 = scmp.ne.s32.totalorder %s97, %s99
      %p103 = scmp.eq.s32.totalorder %s17, 0
      %p104 = por %p102, %p103
      %p105 = scmp.ne.s32.totalorder %s97, %s99
      %p106 = scmp.eq.s32.totalorder %s22, 1
      %p107 = por %p105, %p106
      %p108 = scmp.ne.s32.totalorder %s99, %s100
      %p109 = scmp.eq.s32.totalorder %s22, 0
      %p110 = por %p108, %p109
      %p111 = scmp.ne.s32.totalorder %s99, %s100
      %p112 = scmp.eq.s32.totalorder %s23, 1
      %p113 = por %p111, %p112
      %p115 = scmp.ne.s32.totalorder %s100, %s114
      %p116 = scmp.eq.s32.totalorder %s23, 0
      %p117 = por %p115, %p116
      %s119 = sadd.s32 %s118, 1
      %p122 = scmp.eq.s32.totalorder %s17, 1
      %p123 = scmp.ne.s32.totalorder %s118, %s120
      %p124 = scmp.eq.s32.totalorder %s17, 0
      %p125 = por %p123, %p124
      %p126 = scmp.ne.s32.totalorder %s118, %s120
      %p127 = scmp.eq.s32.totalorder %s22, 1
      %p128 = por %p126, %p127
      %p129 = scmp.ne.s32.totalorder %s120, %s121
      %p130 = scmp.eq.s32.totalorder %s22, 0
      %p131 = por %p129, %p130
      %p132 = scmp.ne.s32.totalorder %s120, %s121
      %p133 = scmp.eq.s32.totalorder %s23, 1
      %p134 = por %p132, %p133
      %p136 = scmp.ne.s32.totalorder %s121, %s135
      %p137 = scmp.eq.s32.totalorder %s23, 0
      %p138 = por %p136, %p137
      %s140 = sadd.s32 %s139, 1
      %p143 = scmp.eq.s32.totalorder %s17, 1
      %p144 = scmp.ne.s32.totalorder %s139, %s141
      %p145 = scmp.eq.s32.totalorder %s17, 0
      %p146 = por %p144, %p145
      %p147 = scmp.ne.s32.totalorder %s139, %s141
      %p148 = scmp.eq.s32.totalorder %s22, 1
      %p149 = por %p147, %p148
      %p150 = scmp.ne.s32.totalorder %s141, %s142
      %p151 = scmp.eq.s32.totalorder %s22, 0
      %p152 = por %p150, %p151
      %p153 = scmp.ne.s32.totalorder %s141, %s142
      %p154 = scmp.eq.s32.totalorder %s23, 1
      %p155 = por %p153, %p154
      %p157 = scmp.ne.s32.totalorder %s142, %s156
      %p158 = scmp.eq.s32.totalorder %s23, 0
      %p159 = por %p157, %p158
      %s161 = sadd.s32 %s160, 1
      %p164 = scmp.eq.s32.totalorder %s17, 1
      %p165 = scmp.ne.s32.totalorder %s160, %s162
      %p166 = scmp.eq.s32.totalorder %s17, 0
      %p167 = por %p165, %p166
      %p168 = scmp.ne.s32.totalorder %s160, %s162
      %p169 = scmp.eq.s32.totalorder %s22, 1
      %p170 = por %p168, %p169
      %p171 = scmp.ne.s32.totalorder %s162, %s163
      %p172 = scmp.eq.s32.totalorder %s22, 0
      %p173 = por %p171, %p172
      %p174 = scmp.ne.s32.totalorder %s162, %s163
      %p175 = scmp.eq.s32.totalorder %s23, 1
      %p176 = por %p174, %p175
      %p178 = scmp.ne.s32.totalorder %s163, %s177
      %p179 = scmp.eq.s32.totalorder %s23, 0
      %p180 = por %p178, %p179
      %s182 = sadd.s32 %s181, 1
      %p185 = scmp.eq.s32.totalorder %s17, 1
      %p186 = scmp.ne.s32.totalorder %s181, %s183
      %p187 = scmp.eq.s32.totalorder %s17, 0
      %p188 = por %p186, %p187
      %p189 = scmp.ne.s32.totalorder %s181, %s183
      %p190 = scmp.eq.s32.totalorder %s22, 1
      %p191 = por %p189, %p190
      %p192 = scmp.ne.s32.totalorder %s183, %s184
      %p193 = scmp.eq.s32.totalorder %s22, 0
      %p194 = por %p192, %p193
      %p195 = scmp.ne.s32.totalorder %s183, %s184
      %p196 = scmp.eq.s32.totalorder %s23, 1
      %p197 = por %p195, %p196
      %p199 = scmp.ne.s32.totalorder %s184, %s198
      %p200 = scmp.eq.s32.totalorder %s23, 0
      %p201 = por %p199, %p200
      %s203 = sadd.s32 %s202, 1
      %p206 = scmp.eq.s32.totalorder %s17, 1
      %p207 = scmp.ne.s32.totalorder %s202, %s204
      %p208 = scmp.eq.s32.totalorder %s17, 0
      %p209 = por %p207, %p208
      %p210 = scmp.ne.s32.totalorder %s202, %s204
      %p211 = scmp.eq.s32.totalorder %s22, 1
      %p212 = por %p210, %p211
      %p213 = scmp.ne.s32.totalorder %s204, %s205
      %p214 = scmp.eq.s32.totalorder %s22, 0
      %p215 = por %p213, %p214
      %p216 = scmp.ne.s32.totalorder %s204, %s205
      %p217 = scmp.eq.s32.totalorder %s23, 1
      %p218 = por %p216, %p217
      %p220 = scmp.ne.s32.totalorder %s205, %s219
      %p221 = scmp.eq.s32.totalorder %s23, 0
      %p222 = por %p220, %p221
      %s223 = ssub.s32 %s24, %s36
      %s224 = ssub.s32 %s25, %s32
      %s225 = sor.u32 %s223, %s224
      %p226 = scmp.eq.s32.totalorder %s225, 0
      %s228 = sadd.s32 %s227, 1
      %s229 = scalar_select %p226, %s227, %s228
      %p232 = pneg %p226
      %p233 = scmp.eq.s32.totalorder %s17, 1
      %p234 = por %p232, %p233
      %p235 = scmp.ne.s32.totalorder %s227, %s230
      %p236 = scmp.eq.s32.totalorder %s17, 0
      %p237 = por %p235, %p236
      %p238 = scmp.ne.s32.totalorder %s227, %s230
      %p239 = scmp.eq.s32.totalorder %s22, 1
      %p240 = por %p238, %p239
      %p241 = scmp.ne.s32.totalorder %s230, %s231
      %p242 = scmp.eq.s32.totalorder %s22, 0
      %p243 = por %p241, %p242
      %p244 = scmp.ne.s32.totalorder %s230, %s231
      %p245 = scmp.eq.s32.totalorder %s23, 1
      %p246 = por %p244, %p245
      %p248 = scmp.ne.s32.totalorder %s231, %s247
      %p249 = scmp.eq.s32.totalorder %s23, 0
      %p250 = por %p248, %p249
      %p251 = scmp.le.s32.totalorder 1, %s17
      %p252 = scmp.lt.s32.totalorder %s17, 3
      %p253 = pnand %p251, %p252
      %p254 = pneg %p253
      // Predicated region
      $region9: #{stem_block_forward.7} parent=5 // pred_check
        _
      $region10: #{stem_block_forward.7} parent=5 // pred_check_branch
        %256 = sbr.rel (%p253) target = $region12
      $region11: #{stem_block_forward.7} parent=5 // pred_region
        %s257 = ssub.s32 %s17, 1
        // Predicated region
        $region13: #{stem_block_forward.7} parent=11 // pred_check
          %p258 = pneg %p110
        $region14: #{stem_block_forward.7} parent=11 // pred_check_branch
          %260 = sbr.rel (%p258) target = $region16
        $region15: #{stem_block_forward.7} parent=11 // pred_region
          _
        $region16: #{stem_block_forward.7} parent=11 // pred_fallthru
          _
        // Predicated region
        $region17: #{stem_block_forward.7} parent=11 // pred_check
          %p261 = pneg %p131
        $region18: #{stem_block_forward.7} parent=11 // pred_check_branch
          %263 = sbr.rel (%p261) target = $region20
        $region19: #{stem_block_forward.7} parent=11 // pred_region
          _
        $region20: #{stem_block_forward.7} parent=11 // pred_fallthru
          _
        // Predicated region
        $region21: #{stem_block_forward.7} parent=11 // pred_check
          %p264 = pneg %p152
        $region22: #{stem_block_forward.7} parent=11 // pred_check_branch
          %266 = sbr.rel (%p264) target = $region24
        $region23: #{stem_block_forward.7} parent=11 // pred_region
          _
        $region24: #{stem_block_forward.7} parent=11 // pred_fallthru
          _
        // Predicated region
        $region25: #{stem_block_forward.7} parent=11 // pred_check
          %p267 = pneg %p173
        $region26: #{stem_block_forward.7} parent=11 // pred_check_branch
          %269 = sbr.rel (%p267) target = $region28
        $region27: #{stem_block_forward.7} parent=11 // pred_region
          _
        $region28: #{stem_block_forward.7} parent=11 // pred_fallthru
          _
        // Predicated region
        $region29: #{stem_block_forward.7} parent=11 // pred_check
          %p270 = pneg %p194
        $region30: #{stem_block_forward.7} parent=11 // pred_check_branch
          %272 = sbr.rel (%p270) target = $region32
        $region31: #{stem_block_forward.7} parent=11 // pred_region
          _
        $region32: #{stem_block_forward.7} parent=11 // pred_fallthru
          _
        // Predicated region
        $region33: #{stem_block_forward.7} parent=11 // pred_check
          %p273 = pneg %p215
        $region34: #{stem_block_forward.7} parent=11 // pred_check_branch
          %275 = sbr.rel (%p273) target = $region36
        $region35: #{stem_block_forward.7} parent=11 // pred_region
          _
        $region36: #{stem_block_forward.7} parent=11 // pred_fallthru
          _
      $region12: #{stem_block_forward.7} parent=5 // pred_fallthru
        _
      %p276 = scmp.lt.s32.totalorder %s17, 2
      // Predicated region
      $region37: #{stem_block_forward.7} parent=5 // pred_check
        %p277 = pneg %p276
      $region38: #{stem_block_forward.7} parent=5 // pred_check_branch
        %279 = sbr.rel (%p277) target = $region40
      $region39: #{stem_block_forward.7} parent=5 // pred_region
        // Predicated region
        $region41: #{stem_block_forward.7} parent=39 // pred_check
          %p280 = pneg %p51
        $region42: #{stem_block_forward.7} parent=39 // pred_check_branch
          %282 = sbr.rel (%p280) target = $region44
        $region43: #{stem_block_forward.7} parent=39 // pred_region
          %s283 = smul.u32 4, %s25
          %s284 = ssub.s32 5, %s283
          %p285 = scmp.lt.s32.totalorder %s284, 4
          %s286 = scalar_select %p285, %s284, 4
          %s287 = smul.u32 128, %s286
          %s288 = smul.u32 %s287, 2
          %s289 = smul.u32 %s288, 2
          %p290 = scmp.lt.s32.totalorder %s24, 1
          %s291 = scalar_select %p290, %s24, 1
          %p292 = scmp.lt.s32.totalorder %s283, 4
          %s293 = scalar_select %p292, %s283, 4
          %s294 = smul.addr %s293, 4
          %s295 = smul.addr %s291, 20
          %s296 = sadd.s32 %s294, %s295
          %s297 = smul.addr %s296, 8
          %s298 = scalar_lea.vmem %s0, %s297
          %s299 = smul.u32 4, %s25
          %s300 = ssub.s32 5, %s299
          %p301 = scmp.lt.s32.totalorder %s300, 4
          %s302 = scalar_select %p301, %s300, 4
          %s303 = smul.u32 128, %s302
          %s304 = smul.u32 %s303, 2
          %s305 = smul.u32 %s304, 2
        $region44: #{stem_block_forward.7} parent=39 // pred_fallthru
          _
        // Predicated region
        $region45: #{stem_block_forward.7} parent=39 // pred_check
          %p306 = pneg %p83
        $region46: #{stem_block_forward.7} parent=39 // pred_check_branch
          %308 = sbr.rel (%p306) target = $region48
        $region47: #{stem_block_forward.7} parent=39 // pred_region
          %s309 = sadd.s32 %s25, 1
          %s310 = smul.u32 %s309, 4
          %p311 = scmp.lt.s32.totalorder %s24, 1
          %s312 = scalar_select %p311, %s24, 1
          %p313 = scmp.lt.s32.totalorder %s310, 4
          %s314 = scalar_select %p313, %s310, 4
          %s315 = smul.addr %s314, 4
          %s316 = smul.addr %s312, 20
          %s317 = sadd.s32 %s315, %s316
          %s318 = smul.addr %s317, 8
          %s319 = scalar_lea.vmem %s1, %s318
          %s320 = sadd.s32 %s25, 1
          %s321 = smul.u32 %s320, 4
        $region48: #{stem_block_forward.7} parent=39 // pred_fallthru
          _
      $region40: #{stem_block_forward.7} parent=5 // pred_fallthru
        _
      %p322 = scmp.le.s32.totalorder 1, %s17
      %p323 = scmp.lt.s32.totalorder %s17, 3
      %p324 = pnand %p322, %p323
      %p325 = pneg %p324
      // Predicated region
      $region49: #{stem_block_forward.7} parent=5 // pred_check
        _
      $region50: #{stem_block_forward.7} parent=5 // pred_check_branch
        %327 = sbr.rel (%p324) target = $region52
      $region51: #{stem_block_forward.7} parent=5 // pred_region
        %s328 = ssub.s32 %s17, 1
        %s329 = smul.u32 4, %s27
        %s330 = ssub.s32 5, %s329
        %p331 = scmp.lt.s32.totalorder %s330, 4
        %s332 = scalar_select %p331, %s330, 4
        %s333 = smul.u32 128, %s332
        %s334 = smul.u32 %s333, 2
        %s335 = smul.u32 %s334, 2
        %p336 = scmp.lt.s32.totalorder %s26, 1
        %s337 = scalar_select %p336, %s26, 1
        %p338 = scmp.lt.s32.totalorder %s329, 4
        %s339 = scalar_select %p338, %s329, 4
        %s340 = smul.addr %s339, 4
        %s341 = smul.addr %s337, 20
        %s342 = sadd.s32 %s340, %s341
        %s343 = smul.addr %s342, 8
        %s344 = scalar_lea.vmem %s0, %s343
        %p345 = pneg %p57
        %p346 = pneg %p54
        %s347 = sadd.s32 %s27, 1
        %s348 = smul.u32 %s347, 4
        %p349 = scmp.lt.s32.totalorder %s26, 1
        %s350 = scalar_select %p349, %s26, 1
        %p351 = scmp.lt.s32.totalorder %s348, 4
        %s352 = scalar_select %p351, %s348, 4
        %s353 = smul.addr %s352, 4
        %s354 = smul.addr %s350, 20
        %s355 = sadd.s32 %s353, %s354
        %s356 = smul.addr %s355, 8
        %s357 = scalar_lea.vmem %s1, %s356
        %p358 = pneg %p89
        %p359 = pneg %p86
        %p360 = pneg %p110
        %p361 = pneg %p107
        %p362 = pneg %p131
        %p363 = pneg %p128
        %p364 = pneg %p152
        %p365 = pneg %p149
        %p366 = pneg %p173
        %p367 = pneg %p170
        %p368 = pneg %p194
        %p369 = pneg %p191
        %p370 = pneg %p215
        %p371 = pneg %p212
        %p372 = pneg %p243
        %p373 = pneg %p240
        %s374 = sand.u32 %s230, 1
        %s375 = scalar_lea.sflag [#allocation3], %s374
        %s376 = sand.u32 %s230, 1
        %s377 = smul.addr %s376, 16
        %s378 = scalar_lea.vmem [#allocation2], %s377
        %s379 = smul.u32 4, %s27
        %s380 = ssub.s32 5, %s379
        %p381 = scmp.lt.s32.totalorder %s380, 4
        %s382 = scalar_select %p381, %s380, 4
        %s383 = smul.u32 128, %s382
        %s384 = smul.u32 %s383, 2
        %s385 = smul.u32 %s384, 2
        %p386 = scmp.lt.s32.totalorder %s26, 1
        %s387 = scalar_select %p386, %s26, 1
        %p388 = scmp.lt.s32.totalorder %s379, 4
        %s389 = scalar_select %p388, %s379, 4
        %s390 = smul.addr %s389, 4
        %s391 = smul.addr %s387, 20
        %s392 = sadd.s32 %s390, %s391
        %s393 = smul.addr %s392, 8
        %s394 = scalar_lea.vmem %s0, %s393
        %s395 = smul.u32 4, %s27
        %s396 = ssub.s32 5, %s395
        %p397 = scmp.lt.s32.totalorder %s396, 4
        %s398 = scalar_select %p397, %s396, 4
        %s399 = smul.u32 128, %s398
        %s400 = smul.u32 %s399, 2
        %s401 = smul.u32 %s400, 2
        %s402 = sadd.s32 %s27, 1
        %s403 = smul.u32 %s402, 4
        %p404 = scmp.lt.s32.totalorder %s26, 1
        %s405 = scalar_select %p404, %s26, 1
        %p406 = scmp.lt.s32.totalorder %s403, 4
        %s407 = scalar_select %p406, %s403, 4
        %s408 = smul.addr %s407, 4
        %s409 = smul.addr %s405, 20
        %s410 = sadd.s32 %s408, %s409
        %s411 = smul.addr %s410, 8
        %s412 = scalar_lea.vmem %s1, %s411
        %s413 = sadd.s32 %s27, 1
        %s414 = smul.u32 %s413, 4
        %s415 = smul.u32 4, %s27
        %v416 = vld [vmem:[%s394] sm:$0xff]
        %v417 = vld [vmem:[%s394 + $0x8] sm:$0x1]
        %v418 = vld [vmem:[%s394 + $0x10] sm:$0xff]
        %v419 = vld [vmem:[%s394 + $0x18] sm:$0x1]
        %v420 = vld [vmem:[%s394 + $0x20] sm:$0xff]
        %v421 = vld [vmem:[%s394 + $0x28] sm:$0x1]
        %v422 = vld [vmem:[%s394 + $0x30] sm:$0xff]
        %v423 = vld [vmem:[%s394 + $0x38] sm:$0x1]
        %v424 = vld [vmem:[%s394 + $0x40] sm:$0xff]
        %v425 = vld [vmem:[%s394 + $0x48] sm:$0x1]
        %v426 = vld [vmem:[%s394 + $0x50] sm:$0xff]
        %v427 = vld [vmem:[%s394 + $0x58] sm:$0x1]
        %v428 = vld [vmem:[%s394 + $0x60] sm:$0xff]
        %v429 = vld [vmem:[%s394 + $0x68] sm:$0x1]
        %v430 = vld [vmem:[%s394 + $0x70] sm:$0xff]
        %v431 = vld [vmem:[%s394 + $0x78] sm:$0x1]
        %v432 = vld [vmem:[%s412] sm:$0xff]
        %v433 = vld [vmem:[%s412 + $0x8] sm:$0x1]
        %vm442 = vcmask 1046528
        %v443 = vrot.slane %v416, 1
        %v444 = vrot.slane %v417, 1
        %v445 = vsel %vm442, %v443, %v444
        %v446 = vrot.slane %v420, 1
        %v447 = vrot.slane %v421, 1
        %v448 = vsel %vm442, %v446, %v447
        %v449 = vrot.slane %v424, 1
        %v450 = vrot.slane %v425, 1
        %v451 = vsel %vm442, %v449, %v450
        %v452 = vrot.slane %v428, 1
        %v453 = vrot.slane %v429, 1
        %v454 = vsel %vm442, %v452, %v453
        %455 = vrot.lane.b32.xlu0 %v445, 32
        %v456 = vpop.permute.xlu0 %455
        %457 = vrot.lane.b32.xlu0 %v448, 32
        %v458 = vpop.permute.xlu0 %457
        %459 = vrot.lane.b32.xlu0 %v451, 32
        %v460 = vpop.permute.xlu0 %459
        %461 = vrot.lane.b32.xlu0 %v454, 32
        %v462 = vpop.permute.xlu0 %461
        %471 = vrot.lane.b32.xlu0 %v418, 64
        %v472 = vpop.permute.xlu0 %471
        %473 = vrot.lane.b32.xlu0 %v422, 64
        %v474 = vpop.permute.xlu0 %473
        %475 = vrot.lane.b32.xlu0 %v426, 64
        %v476 = vpop.permute.xlu0 %475
        %477 = vrot.lane.b32.xlu0 %v430, 64
        %v478 = vpop.permute.xlu0 %477
        %v487 = vrot.slane %v418, 1
        %v488 = vrot.slane %v419, 1
        %v489 = vsel %vm442, %v487, %v488
        %v490 = vrot.slane %v422, 1
        %v491 = vrot.slane %v423, 1
        %v492 = vsel %vm442, %v490, %v491
        %v493 = vrot.slane %v426, 1
        %v494 = vrot.slane %v427, 1
        %v495 = vsel %vm442, %v493, %v494
        %v496 = vrot.slane %v430, 1
        %v497 = vrot.slane %v431, 1
        %v498 = vsel %vm442, %v496, %v497
        %499 = vrot.lane.b32.xlu0 %v489, 96
        %v500 = vpop.permute.xlu0 %499
        %501 = vrot.lane.b32.xlu0 %v492, 96
        %v502 = vpop.permute.xlu0 %501
        %503 = vrot.lane.b32.xlu0 %v495, 96
        %v504 = vpop.permute.xlu0 %503
        %505 = vrot.lane.b32.xlu0 %v498, 96
        %v506 = vpop.permute.xlu0 %505
        %v513 = vrot.slane %v432, 1
        %v514 = vrot.slane %v433, 1
        %v515 = vsel %vm442, %v513, %v514
        %516 = vrot.lane.b32.xlu0 %v515, 32
        %v517 = vpop.permute.xlu0 %516
        %vm519 = vcmask 261120
        %v520 = vsel %vm519, %v416, %v456
        %v521 = vsel %vm519, %v420, %v458
        %v522 = vsel %vm519, %v424, %v460
        %v523 = vsel %vm519, %v428, %v462
        %vm524 = vcmask 523264
        %v525 = vsel %vm524, %v520, %v472
        %v526 = vsel %vm524, %v521, %v474
        %v527 = vsel %vm524, %v522, %v476
        %v528 = vsel %vm524, %v523, %v478
        %vm529 = vcmask 785408
        %v530 = vsel %vm529, %v525, %v500
        %v531 = vsel %vm529, %v526, %v502
        %v532 = vsel %vm529, %v527, %v504
        %v533 = vsel %vm529, %v528, %v506
        %v534 = vsel %vm519, %v432, %v517
        %v535 = vld [vmem:[%s2] sm:$0xff]
        %v536 = vld [vmem:[%s2 + $0x8] sm:$0xff]
        %v537 = vld [vmem:[%s2 + $0x10] sm:$0xff]
        %v538 = vld [vmem:[%s2 + $0x18] sm:$0xff]
        %v539 = vld [vmem:[%s2 + $0x20] sm:$0xff]
        %v540 = vld [vmem:[%s2 + $0x28] sm:$0xff]
        %v541 = vld [vmem:[%s2 + $0x30] sm:$0xff]
        %v542 = vld [vmem:[%s2 + $0x38] sm:$0xff]
        %v543 = vld [vmem:[%s2 + $0x40] sm:$0xff]
        %v544 = vld [vmem:[%s2 + $0x48] sm:$0xff]
        %v545 = vld [vmem:[%s2 + $0x50] sm:$0xff]
        %v546 = vld [vmem:[%s2 + $0x58] sm:$0xff]
        %v547 = vld [vmem:[%s2 + $0x60] sm:$0xff]
        %v548 = vld [vmem:[%s2 + $0x68] sm:$0xff]
        %v549 = vld [vmem:[%s2 + $0x70] sm:$0xff]
        %v550 = vld [vmem:[%s2 + $0x78] sm:$0xff]
        %v551 = vld [vmem:[%s2 + $0x80] sm:$0xff]
        %v552 = vld [vmem:[%s2 + $0x88] sm:$0xff]
        %v553 = vld [vmem:[%s2 + $0x90] sm:$0xff]
        %v554 = vld [vmem:[%s2 + $0x98] sm:$0xff]
        %v555 = vld [vmem:[%s2 + $0xa0] sm:$0xff]
        %v556 = vld [vmem:[%s2 + $0xa8] sm:$0xff]
        %v557 = vld [vmem:[%s2 + $0xb0] sm:$0xff]
        %v558 = vld [vmem:[%s2 + $0xb8] sm:$0xff]
        %v560 = vsel %vm524, %v521, 0
        %v563 = vsel %vm524, %v522, 0
        %v566 = vsel %vm524, %v523, 0
        %v569 = vsel %vm524, %v534, 0
        %571 = vmatprep.subr.mxu0 0.0
        %572 = vmatpush1.msra.mxu0 %v535
        %573 = vmatprep.subr.mxu0 0.0
        %574 = vmatpush1.msra.mxu0 %v536
        %575 = vmatprep.subr.mxu0 0.0
        %576 = vmatpush1.msra.mxu0 %v537
        %577 = vmatprep.subr.mxu0 0.0
        %578 = vmatpush1.msra.mxu0 %v538
        %579 = vmatprep.subr.mxu0 0.0
        %580 = vmatpush1.msra.mxu0 %v539
        %581 = vmatprep.subr.mxu0 0.0
        %582 = vmatpush1.msra.mxu0 %v540
        %583 = vmatprep.subr.mxu0 0.0
        %584 = vmatpush1.msra.mxu0 %v541
        %585 = vmatprep.subr.mxu0 0.0
        %586 = vmatpush1.msra.mxu0 %v542
        %587 = vmatprep.subr.mxu0 0.0
        %588 = vmatpush1.msra.mxu0 %v543
        %589 = vmatprep.subr.mxu0 0.0
        %590 = vmatpush1.msra.mxu0 %v544
        %591 = vmatprep.subr.mxu0 0.0
        %592 = vmatpush1.msra.mxu0 %v545
        %593 = vmatprep.subr.mxu0 0.0
        %594 = vmatpush1.msra.mxu0 %v546
        %595 = vmatprep.subr.mxu0 0.0
        %596 = vmatpush1.msra.mxu0 %v547
        %597 = vmatprep.subr.mxu0 0.0
        %598 = vmatpush1.msra.mxu0 %v548
        %599 = vmatprep.subr.mxu0 0.0
        %600 = vmatpush1.msra.mxu0 %v549
        %601 = vmatprep.subr.mxu0 0.0
        %602 = vmatpush1.msra.mxu0 %v550
        %603 = vmatprep.subr.mxu0 0.0
        %604 = vmatpush1.msra.mxu0 %v551
        %605 = vmatprep.subr.mxu0 0.0
        %606 = vmatpush1.msra.mxu0 %v552
        %607 = vmatprep.subr.mxu0 0.0
        %608 = vmatpush1.msra.mxu0 %v553
        %609 = vmatprep.subr.mxu0 0.0
        %610 = vmatpush1.msra.mxu0 %v554
        %611 = vmatprep.subr.mxu0 0.0
        %612 = vmatpush1.msra.mxu0 %v555
        %613 = vmatprep.subr.mxu0 0.0
        %614 = vmatpush1.msra.mxu0 %v556
        %615 = vmatprep.subr.mxu0 0.0
        %616 = vmatpush1.msra.mxu0 %v557
        %617 = vmatprep.subr.mxu0 0.0
        %618 = vmatpush1.msra.mxu0 %v558
        %619 = vmatprep.subr.mxu0 0.0
        %620 = vmatpush1.msra.mxu0 0.0
        %621 = vmatprep.subr.mxu0 0.0
        %622 = vmatpush1.msra.mxu0 0.0
        %623 = vmatprep.subr.mxu0 0.0
        %624 = vmatpush1.msra.mxu0 0.0
        %625 = vmatprep.subr.mxu0 0.0
        %626 = vmatpush1.msra.mxu0 0.0
        %627 = vmatprep.subr.mxu0 0.0
        %628 = vmatpush1.msra.mxu0 0.0
        %629 = vmatprep.subr.mxu0 0.0
        %630 = vmatpush1.msra.mxu0 0.0
        %631 = vmatprep.subr.mxu0 0.0
        %632 = vmatpush1.msra.mxu0 0.0
        %633 = vmatprep.subr.mxu0 0.0
        %634 = vmatpush1.msra.mxu0 0.0
        %635 = vmatprep.mubr.f32.mxu0 %v560
        %636 = vmatmul.mubr.f32.gmra.mrb[0].mxu0 %v530
        %v637 = vpop.f32.mrb[0].mxu0
        %v638 = vadd.f32 0.0, %v637
        %v639 = vpop.f32.mrb[0].mxu0
        %640 = vmatprep.mubr.f32.mxu0 %v563
        %641 = vmatmul.mubr.f32.gmra.mrb[0].mxu0 %v531
        %v642 = vpop.f32.mrb[0].mxu0
        %v643 = vadd.f32 0.0, %v642
        %v644 = vpop.f32.mrb[0].mxu0
        %645 = vmatprep.mubr.f32.mxu0 %v566
        %646 = vmatmul.mubr.f32.gmra.mrb[0].mxu0 %v532
        %v647 = vpop.f32.mrb[0].mxu0
        %v648 = vadd.f32 0.0, %v647
        %v649 = vpop.f32.mrb[0].mxu0
        %650 = vmatprep.mubr.f32.mxu0 %v569
        %651 = vmatmul.mubr.f32.gmra.mrb[0].mxu0 %v533
        %v652 = vpop.f32.mrb[0].mxu0
        %v653 = vadd.f32 0.0, %v652
        %v654 = vpop.f32.mrb[0].mxu0
        %655 = vdwg.mxu0
        %v656 = vld [vmem:[%s3] sm:$0x1]
        %v658 = vlaneseq
        %v659 = vshrl.u32 %v658, 7
        %v660 = vsub.s32 0, %v659
        %v661 = vrot.slane %v656, %v660
        %v663 = vmul.f32 %v638, %v661
        %v664 = vmul.f32 %v643, %v661
        %v665 = vmul.f32 %v648, %v661
        %v666 = vmul.f32 %v653, %v661
        %v667 = vld [vmem:[%s4] sm:$0x1]
        %v669 = vlaneseq
        %v670 = vshrl.u32 %v669, 7
        %v671 = vsub.s32 0, %v670
        %v672 = vrot.slane %v667, %v671
        %v674 = vadd.f32 %v663, %v672
        %v675 = vadd.f32 %v664, %v672
        %v676 = vadd.f32 %v665, %v672
        %v677 = vadd.f32 %v666, %v672
        %v678 = vmax.f32 %v674, 0.0
        %v679 = vmax.f32 %v675, 0.0
        %v680 = vmax.f32 %v676, 0.0
        %v681 = vmax.f32 %v677, 0.0
        %v682 = vld [vmem:[%s5] sm:$0xff]
        %vm683 = vcmask 64512
        %v685 = vsel %vm683, %v678, 0
        %v688 = vsel %vm683, %v679, 0
        %v691 = vsel %vm683, %v680, 0
        %v694 = vsel %vm683, %v681, 0
        %696 = vmatprep.subr.mxu0 0.0
        %697 = vmatpush1.msra.mxu0 %v682
        %698 = vmatprep.subr.mxu0 0.0
        %699 = vmatpush1.msra.mxu0 0.0
        %700 = vmatprep.subr.mxu0 0.0
        %701 = vmatpush1.msra.mxu0 0.0
        %702 = vmatprep.subr.mxu0 0.0
        %703 = vmatpush1.msra.mxu0 0.0
        %704 = vmatprep.subr.mxu0 0.0
        %705 = vmatpush1.msra.mxu0 0.0
        %706 = vmatprep.subr.mxu0 0.0
        %707 = vmatpush1.msra.mxu0 0.0
        %708 = vmatprep.subr.mxu0 0.0
        %709 = vmatpush1.msra.mxu0 0.0
        %710 = vmatprep.subr.mxu0 0.0
        %711 = vmatpush1.msra.mxu0 0.0
        %712 = vmatprep.subr.mxu0 0.0
        %713 = vmatpush1.msra.mxu0 0.0
        %714 = vmatprep.subr.mxu0 0.0
        %715 = vmatpush1.msra.mxu0 0.0
        %716 = vmatprep.subr.mxu0 0.0
        %717 = vmatpush1.msra.mxu0 0.0
        %718 = vmatprep.subr.mxu0 0.0
        %719 = vmatpush1.msra.mxu0 0.0
        %720 = vmatprep.subr.mxu0 0.0
        %721 = vmatpush1.msra.mxu0 0.0
        %722 = vmatprep.subr.mxu0 0.0
        %723 = vmatpush1.msra.mxu0 0.0
        %724 = vmatprep.subr.mxu0 0.0
        %725 = vmatpush1.msra.mxu0 0.0
        %726 = vmatprep.subr.mxu0 0.0
        %727 = vmatpush1.msra.mxu0 0.0
        %728 = vmatprep.subr.mxu0 0.0
        %729 = vmatpush1.msra.mxu0 0.0
        %730 = vmatprep.subr.mxu0 0.0
        %731 = vmatpush1.msra.mxu0 0.0
        %732 = vmatprep.subr.mxu0 0.0
        %733 = vmatpush1.msra.mxu0 0.0
        %734 = vmatprep.subr.mxu0 0.0
        %735 = vmatpush1.msra.mxu0 0.0
        %736 = vmatprep.subr.mxu0 0.0
        %737 = vmatpush1.msra.mxu0 0.0
        %738 = vmatprep.subr.mxu0 0.0
        %739 = vmatpush1.msra.mxu0 0.0
        %740 = vmatprep.subr.mxu0 0.0
        %741 = vmatpush1.msra.mxu0 0.0
        %742 = vmatprep.subr.mxu0 0.0
        %743 = vmatpush1.msra.mxu0 0.0
        %744 = vmatprep.subr.mxu0 0.0
        %745 = vmatpush1.msra.mxu0 0.0
        %746 = vmatprep.subr.mxu0 0.0
        %747 = vmatpush1.msra.mxu0 0.0
        %748 = vmatprep.subr.mxu0 0.0
        %749 = vmatpush1.msra.mxu0 0.0
        %750 = vmatprep.subr.mxu0 0.0
        %751 = vmatpush1.msra.mxu0 0.0
        %752 = vmatprep.subr.mxu0 0.0
        %753 = vmatpush1.msra.mxu0 0.0
        %754 = vmatprep.subr.mxu0 0.0
        %755 = vmatpush1.msra.mxu0 0.0
        %756 = vmatprep.subr.mxu0 0.0
        %757 = vmatpush1.msra.mxu0 0.0
        %758 = vmatprep.subr.mxu0 0.0
        %759 = vmatpush1.msra.mxu0 0.0
        %760 = vmatprep.mubr.f32.mxu0 0.0
        %761 = vmatmul.mubr.f32.gmra.mrb[0].mxu0 %v685
        %v762 = vpop.f32.mrb[0].mxu0
        %v763 = vadd.f32 0.0, %v762
        %v764 = vpop.f32.mrb[0].mxu0
        %765 = vmatprep.mubr.f32.mxu0 0.0
        %766 = vmatmul.mubr.f32.gmra.mrb[0].mxu0 %v688
        %v767 = vpop.f32.mrb[0].mxu0
        %v768 = vadd.f32 0.0, %v767
        %v769 = vpop.f32.mrb[0].mxu0
        %770 = vmatprep.mubr.f32.mxu0 0.0
        %771 = vmatmul.mubr.f32.gmra.mrb[0].mxu0 %v691
        %v772 = vpop.f32.mrb[0].mxu0
        %v773 = vadd.f32 0.0, %v772
        %v774 = vpop.f32.mrb[0].mxu0
        %775 = vmatprep.mubr.f32.mxu0 0.0
        %776 = vmatmul.mubr.f32.gmra.mrb[0].mxu0 %v694
        %v777 = vpop.f32.mrb[0].mxu0
        %v778 = vadd.f32 0.0, %v777
        %v779 = vpop.f32.mrb[0].mxu0
        %780 = vdwg.mxu0
        %v781 = vld [vmem:[%s6] sm:$0x1]
        %v783 = vlaneseq
        %v784 = vshrl.u32 %v783, 7
        %v785 = vsub.s32 0, %v784
        %v786 = vrot.slane %v781, %v785
        %v788 = vmul.f32 %v763, %v786
        %v789 = vmul.f32 %v768, %v786
        %v790 = vmul.f32 %v773, %v786
        %v791 = vmul.f32 %v778, %v786
        %v792 = vld [vmem:[%s7] sm:$0x1]
        %v794 = vlaneseq
        %v795 = vshrl.u32 %v794, 7
        %v796 = vsub.s32 0, %v795
        %v797 = vrot.slane %v792, %v796
        %v799 = vadd.f32 %v788, %v797
        %v800 = vadd.f32 %v789, %v797
        %v801 = vadd.f32 %v790, %v797
        %v802 = vadd.f32 %v791, %v797
        %v803 = vmax.f32 %v799, 0.0
        %v804 = vmax.f32 %v800, 0.0
        %v805 = vmax.f32 %v801, 0.0
        %v806 = vmax.f32 %v802, 0.0
        %vm807 = vcmask 125952
        %808 = vst.msk [vmem:[%s378] sm:$0xf] %vm807, %v803
        %809 = vst.msk [vmem:[%s378 + $0x4] sm:$0xf] %vm807, %v804
        %810 = vst.msk [vmem:[%s378 + $0x8] sm:$0xf] %vm807, %v805
        %811 = vst.msk [vmem:[%s378 + $0xc] sm:$0xf] %vm807, %v806
        %s812 = sand.u32 %s230, 1
        %s813 = scalar_lea.sflag [#allocation3], %s812
        %s814 = sand.u32 %s230, 1
        %s815 = smul.addr %s814, 16
        %s816 = scalar_lea.vmem [#allocation2], %s815
        // Predicated region
        $region53: #{stem_block_forward.7} parent=51 // pred_check
          %p817 = pneg %p240
        $region54: #{stem_block_forward.7} parent=51 // pred_check_branch
          %819 = sbr.rel (%p817) target = $region56
        $region55: #{stem_block_forward.7} parent=51 // pred_region
          %s820 = smul.u32 4, %s27
          %s822 = ssub.s32 256, 256
          %823 = vsyncadd %s813, %s822
          %s824 = smul.addr %s26, 4
          %s825 = sadd.s32 %s820, %s824
          %s826 = smul.addr %s825, 64
          %s827 = scalar_lea.hbm %s8, %s826
          %s828 = sshll.u32 %s816, 4
          %s829 = int_to_ptr.vmem [resolvable:$true] %s828
          %834 = dma.vmem_to_hbm [thread:$0]  %s829, 256, %s827, %s813, 64, 64, 4
        $region56: #{stem_block_forward.7} parent=51 // pred_fallthru
          _
      $region52: #{stem_block_forward.7} parent=5 // pred_fallthru
        _
      %p835 = scmp.le.s32.totalorder 2, %s17
      // Predicated region
      $region57: #{stem_block_forward.7} parent=5 // pred_check
        %p836 = pneg %p835
      $region58: #{stem_block_forward.7} parent=5 // pred_check_branch
        %838 = sbr.rel (%p836) target = $region60
      $region59: #{stem_block_forward.7} parent=5 // pred_region
        %s839 = ssub.s32 %s17, 2
        // Predicated region
        $region61: #{stem_block_forward.7} parent=59 // pred_check
          %p840 = pneg %p246
        $region62: #{stem_block_forward.7} parent=59 // pred_check_branch
          %842 = sbr.rel (%p840) target = $region64
        $region63: #{stem_block_forward.7} parent=59 // pred_region
          %s843 = sand.u32 %s231, 1
          %s844 = scalar_lea.sflag [#allocation3], %s843
          %s845 = sand.u32 %s231, 1
          %s846 = smul.addr %s845, 16
          %s847 = scalar_lea.vmem [#allocation2], %s846
          %848 = dma.done %s844, 256
        $region64: #{stem_block_forward.7} parent=59 // pred_fallthru
          _
      $region60: #{stem_block_forward.7} parent=5 // pred_fallthru
        _
    $region6: #{stem_block_forward.7} parent=1 // loop_footer
      %s21 = sadd.s32 1, %s17
    $region7: #{stem_block_forward.7} parent=1 // loop_footer_branch
      %16 = sbr.rel target = $region3
    $region8: #{stem_block_forward.7} parent=1 // loop_exit
      _
    %849 = vsyncpa [#allocation3], 1
    %s850 = scalar_lea.sflag [#allocation3], 1
    %851 = vsyncpa %s850, 1

</llo_original>
